<compile_context>
chip_gen: v7x
topology: tpu7x:2x2x1
jax: 0.10.0
libtpu: 0.0.40
codegen_flags: <defaults>
</compile_context>

<pallas_src>
import functools

import jax
import jax.numpy as jnp
from jax.experimental import pallas as pl
from jax.experimental.pallas import tpu as pltpu

LANES = 128
# conv1 output is 20x20; patch-matrix rows are ordered
#   row = (ph*2 + pw)*100 + i*10 + j   with output pixel (oh, ow) = (2i+ph, 2j+pw)
# conv2 works on 96-row "frames" (9 rows x 10 cols + slack), conv3 on a 70-row
# frame (7 rows x 10 cols); frame columns 7..9 are junk and get zero FC weights.
_A1_ROWS = 400          # conv1 output pixels (phase-ordered)
_A1_PAD = 408           # + 8 zero rows so every conv2 tap slice stays in bounds
_F2_ROWS = 96           # conv2 frame rows (>= 9*10 + max conv3 tap offset)
_F3_ROWS = 70           # conv3 frame rows (7*10)
_FC_K = _F3_ROWS * LANES


# ----------------------------------------------------------------------------
# Pallas kernel 1: fused conv1 -> conv2 -> conv3 (one image per grid step)
# ----------------------------------------------------------------------------
def _backbone_kernel(p1_ref, w1_ref, b1_ref, w2_ref, b2_ref, w3_ref, b3_ref,
                     o_ref):
    f32, bf16 = jnp.float32, jnp.bfloat16

    # ---- conv1: single matmul over phase-ordered im2col patches -------------
    a1 = jnp.dot(p1_ref[0], w1_ref[...], preferred_element_type=f32)  # (400,128)
    a1 = jnp.maximum(a1 + b1_ref[...], 0.0).astype(bf16)
    a1 = jnp.concatenate(
        [a1, jnp.zeros((_A1_PAD - _A1_ROWS, LANES), bf16)], axis=0)   # (408,128)

    # ---- conv2 (k=4, s=2): 16 taps, each one contiguous slice + matmul ------
    acc2 = jnp.zeros((_F2_ROWS, LANES), f32)
    for kh in range(4):
        for kw in range(4):
            base = ((kh % 2) * 2 + (kw % 2)) * 100 + (kh // 2) * 10 + (kw // 2)
            acc2 = acc2 + jnp.dot(a1[base:base + _F2_ROWS, :],
                                  w2_ref[kh * 4 + kw],
                                  preferred_element_type=f32)
    y2 = jnp.maximum(acc2 + b2_ref[...], 0.0).astype(bf16)            # (96,128)

    # ---- conv3 (k=3, s=1): 9 taps --------------------------------------------
    acc3 = jnp.zeros((_F3_ROWS, LANES), f32)
    for kh in range(3):
        for kw in range(3):
            off = kh * 10 + kw
            acc3 = acc3 + jnp.dot(y2[off:off + _F3_ROWS, :],
                                  w3_ref[kh * 3 + kw],
                                  preferred_element_type=f32)
    y3 = jnp.maximum(acc3 + b3_ref[...], 0.0)                          # (70,128)
    o_ref[0] = y3.astype(o_ref.dtype)


# ----------------------------------------------------------------------------
# Pallas kernel 2: FC GEMM over the whole batch (bias + optional ReLU)
# ----------------------------------------------------------------------------
def _fc_kernel(x_ref, w_ref, b_ref, o_ref, *, apply_relu):
    acc = jnp.dot(x_ref[...], w_ref[...], preferred_element_type=jnp.float32)
    acc = acc + b_ref[...]
    if apply_relu:
        acc = jnp.maximum(acc, 0.0)
    o_ref[...] = acc.astype(o_ref.dtype)


# ----------------------------------------------------------------------------
# XLA glue: conv1 im2col with phase-ordered rows (cheap, runs on the raw input)
# ----------------------------------------------------------------------------
def _conv1_patches(x_nhwc):
    n, h, w, c = x_nhwc.shape
    k, s, oh, ow = 8, 4, 20, 20
    cols = []
    for kh in range(k):
        for kw in range(k):
            cols.append(x_nhwc[:, kh:kh + s * oh:s, kw:kw + s * ow:s, :])
    p = jnp.concatenate(cols, axis=-1)                    # (N,20,20,64*C)
    p = p.reshape(n, oh // 2, 2, ow // 2, 2, k * k * c)
    p = jnp.transpose(p, (0, 2, 4, 1, 3, 5))              # (N,2,2,10,10,64C)
    return p.reshape(n, _A1_ROWS, k * k * c).astype(jnp.bfloat16)


# ----------------------------------------------------------------------------
# One-time weight packing: permute to kernel layout, pad channels to 128 lanes,
# cast MXU operands to bf16, fold torch's NCHW-flatten into the FC weight.
# ----------------------------------------------------------------------------
def pack_params(params):
    f32, bf16 = jnp.float32, jnp.bfloat16
    cin = params["w1"].shape[1]
    feat = params["wfc"].shape[0]
    fpad = max(LANES, ((feat + LANES - 1) // LANES) * LANES)

    # conv1: (32, Cin, 8, 8) -> rows ordered (kh, kw, cin), cols padded to 128
    w1 = jnp.transpose(params["w1"], (2, 3, 1, 0)).reshape(64 * cin, 32)
    w1 = jnp.pad(w1, ((0, 0), (0, LANES - 32))).astype(bf16)
    b1 = jnp.pad(params["b1"], (0, LANES - 32)).reshape(1, LANES).astype(f32)

    # conv2: (64, 32, 4, 4) -> (16, 128, 128) [tap, cin_pad, cout_pad]
    w2 = jnp.transpose(params["w2"], (2, 3, 1, 0))            # (4,4,32,64)
    w2 = jnp.pad(w2, ((0, 0), (0, 0), (0, LANES - 32), (0, LANES - 64)))
    w2 = w2.reshape(16, LANES, LANES).astype(bf16)
    b2 = jnp.pad(params["b2"], (0, LANES - 64)).reshape(1, LANES).astype(f32)

    # conv3: (32, 64, 3, 3) -> (9, 128, 128)
    w3 = jnp.transpose(params["w3"], (2, 3, 1, 0))            # (3,3,64,32)
    w3 = jnp.pad(w3, ((0, 0), (0, 0), (0, LANES - 64), (0, LANES - 32)))
    w3 = w3.reshape(9, LANES, LANES).astype(bf16)
    b3 = jnp.pad(params["b3"], (0, LANES - 32)).reshape(1, LANES).astype(f32)

    # fc: torch flat index is c*49 + h*7 + w; backbone emits a (70,128) frame
    # with row = h*10 + w (cols 7..9 junk) and channel on lanes.
    wfc = params["wfc"].reshape(feat, 32, 7, 7)               # (f, c, h, w)
    wfc = jnp.transpose(wfc, (2, 3, 1, 0))                    # (h, w, c, f)
    wfc = jnp.pad(wfc, ((0, 0), (0, 3), (0, LANES - 32), (0, fpad - feat)))
    wfc = wfc.reshape(_FC_K, fpad).astype(bf16)               # (8960, fpad)
    bfc = jnp.pad(params["bfc"], (0, fpad - feat)).reshape(1, fpad).astype(f32)

    return dict(w1=w1, b1=b1, w2=w2, b2=b2, w3=w3, b3=b3, wfc=wfc, bfc=bfc,
                feature_size=feat, fpad=fpad)


# ----------------------------------------------------------------------------
# pallas_call wrappers
# ----------------------------------------------------------------------------
def _backbone_call(p1, kp):
    n, rows, k1 = p1.shape
    flops = 2 * n * (rows * k1 * LANES + 16 * _F2_ROWS * LANES * LANES
                     + 9 * _F3_ROWS * LANES * LANES)
    bytes_acc = (p1.size * 2
                 + (kp["w1"].size + kp["w2"].size + kp["w3"].size) * 2
                 + n * _F3_ROWS * LANES * 2)
    return pl.pallas_call(
        _backbone_kernel,
        out_shape=jax.ShapeDtypeStruct((n, _F3_ROWS, LANES), jnp.bfloat16),
        grid=(n,),
        in_specs=[
            pl.BlockSpec((1, rows, k1), lambda b: (b, 0, 0)),
            pl.BlockSpec((k1, LANES), lambda b: (0, 0)),        # weights stay
            pl.BlockSpec((1, LANES), lambda b: (0, 0)),         # resident in
            pl.BlockSpec((16, LANES, LANES), lambda b: (0, 0, 0)),  # VMEM
            pl.BlockSpec((1, LANES), lambda b: (0, 0)),
            pl.BlockSpec((9, LANES, LANES), lambda b: (0, 0, 0)),
            pl.BlockSpec((1, LANES), lambda b: (0, 0)),
        ],
        out_specs=pl.BlockSpec((1, _F3_ROWS, LANES), lambda b: (b, 0, 0)),
        compiler_params=pltpu.CompilerParams(
            dimension_semantics=("parallel",)),
        cost_estimate=pl.CostEstimate(flops=int(flops), transcendentals=0,
                                      bytes_accessed=int(bytes_acc)),
    )(p1, kp["w1"], kp["b1"], kp["w2"], kp["b2"], kp["w3"], kp["b3"])


def _fc_call(flat, kp, apply_relu):
    m, k = flat.shape
    fpad = kp["fpad"]
    tm = 256 if m > 256 else max(8, ((m + 7) // 8) * 8)
    mpad = ((m + tm - 1) // tm) * tm
    if mpad != m:
        flat = jnp.pad(flat, ((0, mpad - m), (0, 0)))
    out = pl.pallas_call(
        functools.partial(_fc_kernel, apply_relu=apply_relu),
        out_shape=jax.ShapeDtypeStruct((mpad, fpad), jnp.float32),
        grid=(mpad // tm,),
        in_specs=[
            pl.BlockSpec((tm, k), lambda i: (i, 0)),
            pl.BlockSpec((k, fpad), lambda i: (0, 0)),
            pl.BlockSpec((1, fpad), lambda i: (0, 0)),
        ],
        out_specs=pl.BlockSpec((tm, fpad), lambda i: (i, 0)),
        compiler_params=pltpu.CompilerParams(
            dimension_semantics=("parallel",)),
        cost_estimate=pl.CostEstimate(
            flops=2 * mpad * k * fpad, transcendentals=0,
            bytes_accessed=int(mpad * k * 2 + k * fpad * 2 + mpad * fpad * 4)),
    )(flat, kp["wfc"], kp["bfc"])
    return out[:m]


# ----------------------------------------------------------------------------
# NatureCNN forward
# ----------------------------------------------------------------------------
def nature_cnn_forward(x_nchw, packed, end_with_relu=False):
    n, _, h, w = x_nchw.shape
    assert (h, w) == (84, 84), "NatureCNN downsample branch expects 84x84 inputs"
    x = jnp.transpose(x_nchw, (0, 2, 3, 1))            # NHWC
    p1 = _conv1_patches(x)                             # (N, 400, 64*C) bf16
    feat = _backbone_call(p1, packed)                  # (N, 70, 128) bf16
    flat = feat.reshape(n, _FC_K)                      # contiguous => free
    out = _fc_call(flat, packed, end_with_relu)        # (N, fpad) f32
    return out[:, :packed["feature_size"]]


# ----------------------------------------------------------------------------
# Deterministic synthetic parameters (shapes from NatureCNN.__init__)
# TODO(synk): torch uses orthogonal init with relu gain; synthetic scaled-normal
#             init is used here since weights are not loaded from a checkpoint.
# ----------------------------------------------------------------------------
def init_params(key, input_channels, feature_size):
    ks = jax.random.split(key, 4)

    def w(k, shape, fan_in):
        return jax.random.normal(k, shape, jnp.float32) * (2.0 / fan_in) ** 0.5

    return {
        "w1": w(ks[0], (32, input_channels, 8, 8), input_channels * 8 * 8),
        "b1": jnp.zeros((32,), jnp.float32),
        "w2": w(ks[1], (64, 32, 4, 4), 32 * 4 * 4),
        "b2": jnp.zeros((64,), jnp.float32),
        "w3": w(ks[2], (32, 64, 3, 3), 64 * 3 * 3),
        "b3": jnp.zeros((32,), jnp.float32),
        "wfc": w(ks[3], (feature_size, 32 * 7 * 7), 32 * 7 * 7),
        "bfc": jnp.zeros((feature_size,), jnp.float32),
    }


# ----------------------------------------------------------------------------
# Pure-JAX f32 reference (NCHW, same semantics as torch)
# ----------------------------------------------------------------------------
def reference_forward(x_nchw, params):
    def conv(x, w, b, s):
        y = jax.lax.conv_general_dilated(
            x, w, (s, s), "VALID", dimension_numbers=("NCHW", "OIHW", "NCHW"))
        return jax.nn.relu(y + b[None, :, None, None])

    x = conv(x_nchw, params["w1"], params["b1"], 4)
    x = conv(x, params["w2"], params["b2"], 2)
    f5 = conv(x, params["w3"], params["b3"], 1)
    flat = f5.reshape(f5.shape[0], -1)
    return flat @ params["wfc"].T + params["bfc"]


if __name__ == "__main__":
    # Atari NatureCNN geometry: 84x84 input is required by Linear(32*7*7, F).
    batch, input_channels, feature_size = 2, 4, 64
    key = jax.random.PRNGKey(0)
    kx, kp = jax.random.split(key)
    x = jax.random.normal(kx, (batch, input_channels, 84, 84), jnp.float32)
    params = init_params(kp, input_channels, feature_size)
    packed = pack_params(params)

    out = nature_cnn_forward(x, packed, end_with_relu=False)
    out = jax.block_until_ready(out)
    assert out.shape == (batch, feature_size), out.shape

    ref = jax.block_until_ready(reference_forward(x, params))
    # bf16 MXU inputs with f32 accumulation -> loosened tolerance.
    err = float(jnp.max(jnp.abs(out - ref)))
    assert jnp.allclose(out, ref, atol=5e-2, rtol=5e-2), err

    print("KERNEL_OK")
</pallas_src>

<mosaic_0001>
module attributes {stable_mosaic.version = 11 : i64} {
  func.func @_backbone_kernel(%arg0: i32, %arg1: memref<1x400x256xbf16, #tpu.memory_space<vmem>>, %arg2: memref<256x128xbf16, #tpu.memory_space<vmem>>, %arg3: memref<1x128xf32, #tpu.memory_space<vmem>>, %arg4: memref<16x128x128xbf16, #tpu.memory_space<vmem>>, %arg5: memref<1x128xf32, #tpu.memory_space<vmem>>, %arg6: memref<9x128x128xbf16, #tpu.memory_space<vmem>>, %arg7: memref<1x128xf32, #tpu.memory_space<vmem>>, %arg8: memref<1x70x128xbf16, #tpu.memory_space<vmem>>) attributes {dimension_semantics = [#tpu.dimension_semantics<parallel>], iteration_bounds = array<i64: 2>, scalar_prefetch = 0 : i64, scratch_operands = 0 : i64, tpu.core_type = #tpu.core_type<tc>, window_params = [{transform_indices = @transform_0, window_bounds = array<i64: 1, 400, 256>}, {pipeline_mode = #tpu.pipeline_mode<synchronous>, transform_indices = @transform_1, window_bounds = array<i64: 256, 128>}, {pipeline_mode = #tpu.pipeline_mode<synchronous>, transform_indices = @transform_2, window_bounds = array<i64: 1, 128>}, {pipeline_mode = #tpu.pipeline_mode<synchronous>, transform_indices = @transform_3, window_bounds = array<i64: 16, 128, 128>}, {pipeline_mode = #tpu.pipeline_mode<synchronous>, transform_indices = @transform_4, window_bounds = array<i64: 1, 128>}, {pipeline_mode = #tpu.pipeline_mode<synchronous>, transform_indices = @transform_5, window_bounds = array<i64: 9, 128, 128>}, {pipeline_mode = #tpu.pipeline_mode<synchronous>, transform_indices = @transform_6, window_bounds = array<i64: 1, 128>}, {transform_indices = @transform_7, window_bounds = array<i64: 1, 70, 128>}]} {
    %c0 = arith.constant 0 : index
    %c0_0 = arith.constant 0 : index
    %c0_1 = arith.constant 0 : index
    %0 = vector.load %arg1[%c0, %c0_0, %c0_1] : memref<1x400x256xbf16, #tpu.memory_space<vmem>>, vector<1x400x256xbf16>
    %1 = vector.shape_cast %0 : vector<1x400x256xbf16> to vector<400x256xbf16>
    %c0_2 = arith.constant 0 : index
    %c0_3 = arith.constant 0 : index
    %2 = vector.load %arg2[%c0_2, %c0_3] : memref<256x128xbf16, #tpu.memory_space<vmem>>, vector<256x128xbf16>
    %cst = arith.constant dense<0.000000e+00> : vector<400x128xf32>
    %3 = tpu.matmul %1, %2, %cst {dimension_numbers = #tpu.dot_dimension_numbers<[1], [0], [0], [1], [0, 0, 1, 1], [], []>} : vector<400x256xbf16>, vector<256x128xbf16>, vector<400x128xf32> -> vector<400x128xf32>
    %c0_4 = arith.constant 0 : index
    %c0_5 = arith.constant 0 : index
    %4 = vector.load %arg3[%c0_4, %c0_5] : memref<1x128xf32, #tpu.memory_space<vmem>>, vector<1x128xf32>
    %5 = vector.broadcast %4 : vector<1x128xf32> to vector<400x128xf32>
    %6 = arith.addf %3, %5 : vector<400x128xf32>
    %cst_6 = arith.constant 0.000000e+00 : f32
    %7 = vector.broadcast %cst_6 : f32 to vector<400x128xf32>
    %8 = arith.maximumf %6, %7 : vector<400x128xf32>
    %9 = arith.truncf %8 : vector<400x128xf32> to vector<400x128xbf16>
    %cst_7 = arith.constant 0.000000e+00 : bf16
    %10 = vector.broadcast %cst_7 : bf16 to vector<8x128xbf16>
    %11 = tpu.concatenate %9, %10 in 0 : vector<400x128xbf16>, vector<8x128xbf16> -> vector<408x128xbf16>
    %cst_8 = arith.constant 0.000000e+00 : f32
    %12 = vector.broadcast %cst_8 : f32 to vector<96x128xf32>
    %13 = vector.extract_strided_slice %11 {offsets = [0, 0], sizes = [96, 128], strides = [1, 1]} : vector<408x128xbf16> to vector<96x128xbf16>
    %c0_9 = arith.constant 0 : index
    %c0_10 = arith.constant 0 : index
    %c0_11 = arith.constant 0 : index
    %14 = vector.load %arg4[%c0_9, %c0_10, %c0_11] : memref<16x128x128xbf16, #tpu.memory_space<vmem>>, vector<1x128x128xbf16>
    %15 = vector.shape_cast %14 : vector<1x128x128xbf16> to vector<128x128xbf16>
    %cst_12 = arith.constant dense<0.000000e+00> : vector<96x128xf32>
    %16 = tpu.matmul %13, %15, %cst_12 {dimension_numbers = #tpu.dot_dimension_numbers<[1], [0], [0], [1], [0, 0, 1, 1], [], []>} : vector<96x128xbf16>, vector<128x128xbf16>, vector<96x128xf32> -> vector<96x128xf32>
    %17 = arith.addf %12, %16 : vector<96x128xf32>
    %18 = vector.extract_strided_slice %11 {offsets = [100, 0], sizes = [96, 128], strides = [1, 1]} : vector<408x128xbf16> to vector<96x128xbf16>
    %c1 = arith.constant 1 : index
    %c0_13 = arith.constant 0 : index
    %c0_14 = arith.constant 0 : index
    %19 = vector.load %arg4[%c1, %c0_13, %c0_14] : memref<16x128x128xbf16, #tpu.memory_space<vmem>>, vector<1x128x128xbf16>
    %20 = vector.shape_cast %19 : vector<1x128x128xbf16> to vector<128x128xbf16>
    %cst_15 = arith.constant dense<0.000000e+00> : vector<96x128xf32>
    %21 = tpu.matmul %18, %20, %cst_15 {dimension_numbers = #tpu.dot_dimension_numbers<[1], [0], [0], [1], [0, 0, 1, 1], [], []>} : vector<96x128xbf16>, vector<128x128xbf16>, vector<96x128xf32> -> vector<96x128xf32>
    %22 = arith.addf %17, %21 : vector<96x128xf32>
    %23 = vector.extract_strided_slice %11 {offsets = [1, 0], sizes = [96, 128], strides = [1, 1]} : vector<408x128xbf16> to vector<96x128xbf16>
    %c2 = arith.constant 2 : index
    %c0_16 = arith.constant 0 : index
    %c0_17 = arith.constant 0 : index
    %24 = vector.load %arg4[%c2, %c0_16, %c0_17] : memref<16x128x128xbf16, #tpu.memory_space<vmem>>, vector<1x128x128xbf16>
    %25 = vector.shape_cast %24 : vector<1x128x128xbf16> to vector<128x128xbf16>
    %cst_18 = arith.constant dense<0.000000e+00> : vector<96x128xf32>
    %26 = tpu.matmul %23, %25, %cst_18 {dimension_numbers = #tpu.dot_dimension_numbers<[1], [0], [0], [1], [0, 0, 1, 1], [], []>} : vector<96x128xbf16>, vector<128x128xbf16>, vector<96x128xf32> -> vector<96x128xf32>
    %27 = arith.addf %22, %26 : vector<96x128xf32>
    %28 = vector.extract_strided_slice %11 {offsets = [101, 0], sizes = [96, 128], strides = [1, 1]} : vector<408x128xbf16> to vector<96x128xbf16>
    %c3 = arith.constant 3 : index
    %c0_19 = arith.constant 0 : index
    %c0_20 = arith.constant 0 : index
    %29 = vector.load %arg4[%c3, %c0_19, %c0_20] : memref<16x128x128xbf16, #tpu.memory_space<vmem>>, vector<1x128x128xbf16>
    %30 = vector.shape_cast %29 : vector<1x128x128xbf16> to vector<128x128xbf16>
    %cst_21 = arith.constant dense<0.000000e+00> : vector<96x128xf32>
    %31 = tpu.matmul %28, %30, %cst_21 {dimension_numbers = #tpu.dot_dimension_numbers<[1], [0], [0], [1], [0, 0, 1, 1], [], []>} : vector<96x128xbf16>, vector<128x128xbf16>, vector<96x128xf32> -> vector<96x128xf32>
    %32 = arith.addf %27, %31 : vector<96x128xf32>
    %33 = vector.extract_strided_slice %11 {offsets = [200, 0], sizes = [96, 128], strides = [1, 1]} : vector<408x128xbf16> to vector<96x128xbf16>
    %c4 = arith.constant 4 : index
    %c0_22 = arith.constant 0 : index
    %c0_23 = arith.constant 0 : index
    %34 = vector.load %arg4[%c4, %c0_22, %c0_23] : memref<16x128x128xbf16, #tpu.memory_space<vmem>>, vector<1x128x128xbf16>
    %35 = vector.shape_cast %34 : vector<1x128x128xbf16> to vector<128x128xbf16>
    %cst_24 = arith.constant dense<0.000000e+00> : vector<96x128xf32>
    %36 = tpu.matmul %33, %35, %cst_24 {dimension_numbers = #tpu.dot_dimension_numbers<[1], [0], [0], [1], [0, 0, 1, 1], [], []>} : vector<96x128xbf16>, vector<128x128xbf16>, vector<96x128xf32> -> vector<96x128xf32>
    %37 = arith.addf %32, %36 : vector<96x128xf32>
    %38 = vector.extract_strided_slice %11 {offsets = [300, 0], sizes = [96, 128], strides = [1, 1]} : vector<408x128xbf16> to vector<96x128xbf16>
    %c5 = arith.constant 5 : index
    %c0_25 = arith.constant 0 : index
    %c0_26 = arith.constant 0 : index
    %39 = vector.load %arg4[%c5, %c0_25, %c0_26] : memref<16x128x128xbf16, #tpu.memory_space<vmem>>, vector<1x128x128xbf16>
    %40 = vector.shape_cast %39 : vector<1x128x128xbf16> to vector<128x128xbf16>
    %cst_27 = arith.constant dense<0.000000e+00> : vector<96x128xf32>
    %41 = tpu.matmul %38, %40, %cst_27 {dimension_numbers = #tpu.dot_dimension_numbers<[1], [0], [0], [1], [0, 0, 1, 1], [], []>} : vector<96x128xbf16>, vector<128x128xbf16>, vector<96x128xf32> -> vector<96x128xf32>
    %42 = arith.addf %37, %41 : vector<96x128xf32>
    %43 = vector.extract_strided_slice %11 {offsets = [201, 0], sizes = [96, 128], strides = [1, 1]} : vector<408x128xbf16> to vector<96x128xbf16>
    %c6 = arith.constant 6 : index
    %c0_28 = arith.constant 0 : index
    %c0_29 = arith.constant 0 : index
    %44 = vector.load %arg4[%c6, %c0_28, %c0_29] : memref<16x128x128xbf16, #tpu.memory_space<vmem>>, vector<1x128x128xbf16>
    %45 = vector.shape_cast %44 : vector<1x128x128xbf16> to vector<128x128xbf16>
    %cst_30 = arith.constant dense<0.000000e+00> : vector<96x128xf32>
    %46 = tpu.matmul %43, %45, %cst_30 {dimension_numbers = #tpu.dot_dimension_numbers<[1], [0], [0], [1], [0, 0, 1, 1], [], []>} : vector<96x128xbf16>, vector<128x128xbf16>, vector<96x128xf32> -> vector<96x128xf32>
    %47 = arith.addf %42, %46 : vector<96x128xf32>
    %48 = vector.extract_strided_slice %11 {offsets = [301, 0], sizes = [96, 128], strides = [1, 1]} : vector<408x128xbf16> to vector<96x128xbf16>
    %c7 = arith.constant 7 : index
    %c0_31 = arith.constant 0 : index
    %c0_32 = arith.constant 0 : index
    %49 = vector.load %arg4[%c7, %c0_31, %c0_32] : memref<16x128x128xbf16, #tpu.memory_space<vmem>>, vector<1x128x128xbf16>
    %50 = vector.shape_cast %49 : vector<1x128x128xbf16> to vector<128x128xbf16>
    %cst_33 = arith.constant dense<0.000000e+00> : vector<96x128xf32>
    %51 = tpu.matmul %48, %50, %cst_33 {dimension_numbers = #tpu.dot_dimension_numbers<[1], [0], [0], [1], [0, 0, 1, 1], [], []>} : vector<96x128xbf16>, vector<128x128xbf16>, vector<96x128xf32> -> vector<96x128xf32>
    %52 = arith.addf %47, %51 : vector<96x128xf32>
    %53 = vector.extract_strided_slice %11 {offsets = [10, 0], sizes = [96, 128], strides = [1, 1]} : vector<408x128xbf16> to vector<96x128xbf16>
    %c8 = arith.constant 8 : index
    %c0_34 = arith.constant 0 : index
    %c0_35 = arith.constant 0 : index
    %54 = vector.load %arg4[%c8, %c0_34, %c0_35] : memref<16x128x128xbf16, #tpu.memory_space<vmem>>, vector<1x128x128xbf16>
    %55 = vector.shape_cast %54 : vector<1x128x128xbf16> to vector<128x128xbf16>
    %cst_36 = arith.constant dense<0.000000e+00> : vector<96x128xf32>
    %56 = tpu.matmul %53, %55, %cst_36 {dimension_numbers = #tpu.dot_dimension_numbers<[1], [0], [0], [1], [0, 0, 1, 1], [], []>} : vector<96x128xbf16>, vector<128x128xbf16>, vector<96x128xf32> -> vector<96x128xf32>
    %57 = arith.addf %52, %56 : vector<96x128xf32>
    %58 = vector.extract_strided_slice %11 {offsets = [110, 0], sizes = [96, 128], strides = [1, 1]} : vector<408x128xbf16> to vector<96x128xbf16>
    %c9 = arith.constant 9 : index
    %c0_37 = arith.constant 0 : index
    %c0_38 = arith.constant 0 : index
    %59 = vector.load %arg4[%c9, %c0_37, %c0_38] : memref<16x128x128xbf16, #tpu.memory_space<vmem>>, vector<1x128x128xbf16>
    %60 = vector.shape_cast %59 : vector<1x128x128xbf16> to vector<128x128xbf16>
    %cst_39 = arith.constant dense<0.000000e+00> : vector<96x128xf32>
    %61 = tpu.matmul %58, %60, %cst_39 {dimension_numbers = #tpu.dot_dimension_numbers<[1], [0], [0], [1], [0, 0, 1, 1], [], []>} : vector<96x128xbf16>, vector<128x128xbf16>, vector<96x128xf32> -> vector<96x128xf32>
    %62 = arith.addf %57, %61 : vector<96x128xf32>
    %63 = vector.extract_strided_slice %11 {offsets = [11, 0], sizes = [96, 128], strides = [1, 1]} : vector<408x128xbf16> to vector<96x128xbf16>
    %c10 = arith.constant 10 : index
    %c0_40 = arith.constant 0 : index
    %c0_41 = arith.constant 0 : index
    %64 = vector.load %arg4[%c10, %c0_40, %c0_41] : memref<16x128x128xbf16, #tpu.memory_space<vmem>>, vector<1x128x128xbf16>
    %65 = vector.shape_cast %64 : vector<1x128x128xbf16> to vector<128x128xbf16>
    %cst_42 = arith.constant dense<0.000000e+00> : vector<96x128xf32>
    %66 = tpu.matmul %63, %65, %cst_42 {dimension_numbers = #tpu.dot_dimension_numbers<[1], [0], [0], [1], [0, 0, 1, 1], [], []>} : vector<96x128xbf16>, vector<128x128xbf16>, vector<96x128xf32> -> vector<96x128xf32>
    %67 = arith.addf %62, %66 : vector<96x128xf32>
    %68 = vector.extract_strided_slice %11 {offsets = [111, 0], sizes = [96, 128], strides = [1, 1]} : vector<408x128xbf16> to vector<96x128xbf16>
    %c11 = arith.constant 11 : index
    %c0_43 = arith.constant 0 : index
    %c0_44 = arith.constant 0 : index
    %69 = vector.load %arg4[%c11, %c0_43, %c0_44] : memref<16x128x128xbf16, #tpu.memory_space<vmem>>, vector<1x128x128xbf16>
    %70 = vector.shape_cast %69 : vector<1x128x128xbf16> to vector<128x128xbf16>
    %cst_45 = arith.constant dense<0.000000e+00> : vector<96x128xf32>
    %71 = tpu.matmul %68, %70, %cst_45 {dimension_numbers = #tpu.dot_dimension_numbers<[1], [0], [0], [1], [0, 0, 1, 1], [], []>} : vector<96x128xbf16>, vector<128x128xbf16>, vector<96x128xf32> -> vector<96x128xf32>
    %72 = arith.addf %67, %71 : vector<96x128xf32>
    %73 = vector.extract_strided_slice %11 {offsets = [210, 0], sizes = [96, 128], strides = [1, 1]} : vector<408x128xbf16> to vector<96x128xbf16>
    %c12 = arith.constant 12 : index
    %c0_46 = arith.constant 0 : index
    %c0_47 = arith.constant 0 : index
    %74 = vector.load %arg4[%c12, %c0_46, %c0_47] : memref<16x128x128xbf16, #tpu.memory_space<vmem>>, vector<1x128x128xbf16>
    %75 = vector.shape_cast %74 : vector<1x128x128xbf16> to vector<128x128xbf16>
    %cst_48 = arith.constant dense<0.000000e+00> : vector<96x128xf32>
    %76 = tpu.matmul %73, %75, %cst_48 {dimension_numbers = #tpu.dot_dimension_numbers<[1], [0], [0], [1], [0, 0, 1, 1], [], []>} : vector<96x128xbf16>, vector<128x128xbf16>, vector<96x128xf32> -> vector<96x128xf32>
    %77 = arith.addf %72, %76 : vector<96x128xf32>
    %78 = vector.extract_strided_slice %11 {offsets = [310, 0], sizes = [96, 128], strides = [1, 1]} : vector<408x128xbf16> to vector<96x128xbf16>
    %c13 = arith.constant 13 : index
    %c0_49 = arith.constant 0 : index
    %c0_50 = arith.constant 0 : index
    %79 = vector.load %arg4[%c13, %c0_49, %c0_50] : memref<16x128x128xbf16, #tpu.memory_space<vmem>>, vector<1x128x128xbf16>
    %80 = vector.shape_cast %79 : vector<1x128x128xbf16> to vector<128x128xbf16>
    %cst_51 = arith.constant dense<0.000000e+00> : vector<96x128xf32>
    %81 = tpu.matmul %78, %80, %cst_51 {dimension_numbers = #tpu.dot_dimension_numbers<[1], [0], [0], [1], [0, 0, 1, 1], [], []>} : vector<96x128xbf16>, vector<128x128xbf16>, vector<96x128xf32> -> vector<96x128xf32>
    %82 = arith.addf %77, %81 : vector<96x128xf32>
    %83 = vector.extract_strided_slice %11 {offsets = [211, 0], sizes = [96, 128], strides = [1, 1]} : vector<408x128xbf16> to vector<96x128xbf16>
    %c14 = arith.constant 14 : index
    %c0_52 = arith.constant 0 : index
    %c0_53 = arith.constant 0 : index
    %84 = vector.load %arg4[%c14, %c0_52, %c0_53] : memref<16x128x128xbf16, #tpu.memory_space<vmem>>, vector<1x128x128xbf16>
    %85 = vector.shape_cast %84 : vector<1x128x128xbf16> to vector<128x128xbf16>
    %cst_54 = arith.constant dense<0.000000e+00> : vector<96x128xf32>
    %86 = tpu.matmul %83, %85, %cst_54 {dimension_numbers = #tpu.dot_dimension_numbers<[1], [0], [0], [1], [0, 0, 1, 1], [], []>} : vector<96x128xbf16>, vector<128x128xbf16>, vector<96x128xf32> -> vector<96x128xf32>
    %87 = arith.addf %82, %86 : vector<96x128xf32>
    %88 = vector.extract_strided_slice %11 {offsets = [311, 0], sizes = [96, 128], strides = [1, 1]} : vector<408x128xbf16> to vector<96x128xbf16>
    %c15 = arith.constant 15 : index
    %c0_55 = arith.constant 0 : index
    %c0_56 = arith.constant 0 : index
    %89 = vector.load %arg4[%c15, %c0_55, %c0_56] : memref<16x128x128xbf16, #tpu.memory_space<vmem>>, vector<1x128x128xbf16>
    %90 = vector.shape_cast %89 : vector<1x128x128xbf16> to vector<128x128xbf16>
    %cst_57 = arith.constant dense<0.000000e+00> : vector<96x128xf32>
    %91 = tpu.matmul %88, %90, %cst_57 {dimension_numbers = #tpu.dot_dimension_numbers<[1], [0], [0], [1], [0, 0, 1, 1], [], []>} : vector<96x128xbf16>, vector<128x128xbf16>, vector<96x128xf32> -> vector<96x128xf32>
    %92 = arith.addf %87, %91 : vector<96x128xf32>
    %c0_58 = arith.constant 0 : index
    %c0_59 = arith.constant 0 : index
    %93 = vector.load %arg5[%c0_58, %c0_59] : memref<1x128xf32, #tpu.memory_space<vmem>>, vector<1x128xf32>
    %94 = vector.broadcast %93 : vector<1x128xf32> to vector<96x128xf32>
    %95 = arith.addf %92, %94 : vector<96x128xf32>
    %cst_60 = arith.constant 0.000000e+00 : f32
    %96 = vector.broadcast %cst_60 : f32 to vector<96x128xf32>
    %97 = arith.maximumf %95, %96 : vector<96x128xf32>
    %98 = arith.truncf %97 : vector<96x128xf32> to vector<96x128xbf16>
    %cst_61 = arith.constant 0.000000e+00 : f32
    %99 = vector.broadcast %cst_61 : f32 to vector<70x128xf32>
    %100 = vector.extract_strided_slice %98 {offsets = [0, 0], sizes = [70, 128], strides = [1, 1]} : vector<96x128xbf16> to vector<70x128xbf16>
    %c0_62 = arith.constant 0 : index
    %c0_63 = arith.constant 0 : index
    %c0_64 = arith.constant 0 : index
    %101 = vector.load %arg6[%c0_62, %c0_63, %c0_64] : memref<9x128x128xbf16, #tpu.memory_space<vmem>>, vector<1x128x128xbf16>
    %102 = vector.shape_cast %101 : vector<1x128x128xbf16> to vector<128x128xbf16>
    %cst_65 = arith.constant dense<0.000000e+00> : vector<70x128xf32>
    %103 = tpu.matmul %100, %102, %cst_65 {dimension_numbers = #tpu.dot_dimension_numbers<[1], [0], [0], [1], [0, 0, 1, 1], [], []>} : vector<70x128xbf16>, vector<128x128xbf16>, vector<70x128xf32> -> vector<70x128xf32>
    %104 = arith.addf %99, %103 : vector<70x128xf32>
    %105 = vector.extract_strided_slice %98 {offsets = [1, 0], sizes = [70, 128], strides = [1, 1]} : vector<96x128xbf16> to vector<70x128xbf16>
    %c1_66 = arith.constant 1 : index
    %c0_67 = arith.constant 0 : index
    %c0_68 = arith.constant 0 : index
    %106 = vector.load %arg6[%c1_66, %c0_67, %c0_68] : memref<9x128x128xbf16, #tpu.memory_space<vmem>>, vector<1x128x128xbf16>
    %107 = vector.shape_cast %106 : vector<1x128x128xbf16> to vector<128x128xbf16>
    %cst_69 = arith.constant dense<0.000000e+00> : vector<70x128xf32>
    %108 = tpu.matmul %105, %107, %cst_69 {dimension_numbers = #tpu.dot_dimension_numbers<[1], [0], [0], [1], [0, 0, 1, 1], [], []>} : vector<70x128xbf16>, vector<128x128xbf16>, vector<70x128xf32> -> vector<70x128xf32>
    %109 = arith.addf %104, %108 : vector<70x128xf32>
    %110 = vector.extract_strided_slice %98 {offsets = [2, 0], sizes = [70, 128], strides = [1, 1]} : vector<96x128xbf16> to vector<70x128xbf16>
    %c2_70 = arith.constant 2 : index
    %c0_71 = arith.constant 0 : index
    %c0_72 = arith.constant 0 : index
    %111 = vector.load %arg6[%c2_70, %c0_71, %c0_72] : memref<9x128x128xbf16, #tpu.memory_space<vmem>>, vector<1x128x128xbf16>
    %112 = vector.shape_cast %111 : vector<1x128x128xbf16> to vector<128x128xbf16>
    %cst_73 = arith.constant dense<0.000000e+00> : vector<70x128xf32>
    %113 = tpu.matmul %110, %112, %cst_73 {dimension_numbers = #tpu.dot_dimension_numbers<[1], [0], [0], [1], [0, 0, 1, 1], [], []>} : vector<70x128xbf16>, vector<128x128xbf16>, vector<70x128xf32> -> vector<70x128xf32>
    %114 = arith.addf %109, %113 : vector<70x128xf32>
    %115 = vector.extract_strided_slice %98 {offsets = [10, 0], sizes = [70, 128], strides = [1, 1]} : vector<96x128xbf16> to vector<70x128xbf16>
    %c3_74 = arith.constant 3 : index
    %c0_75 = arith.constant 0 : index
    %c0_76 = arith.constant 0 : index
    %116 = vector.load %arg6[%c3_74, %c0_75, %c0_76] : memref<9x128x128xbf16, #tpu.memory_space<vmem>>, vector<1x128x128xbf16>
    %117 = vector.shape_cast %116 : vector<1x128x128xbf16> to vector<128x128xbf16>
    %cst_77 = arith.constant dense<0.000000e+00> : vector<70x128xf32>
    %118 = tpu.matmul %115, %117, %cst_77 {dimension_numbers = #tpu.dot_dimension_numbers<[1], [0], [0], [1], [0, 0, 1, 1], [], []>} : vector<70x128xbf16>, vector<128x128xbf16>, vector<70x128xf32> -> vector<70x128xf32>
    %119 = arith.addf %114, %118 : vector<70x128xf32>
    %120 = vector.extract_strided_slice %98 {offsets = [11, 0], sizes = [70, 128], strides = [1, 1]} : vector<96x128xbf16> to vector<70x128xbf16>
    %c4_78 = arith.constant 4 : index
    %c0_79 = arith.constant 0 : index
    %c0_80 = arith.constant 0 : index
    %121 = vector.load %arg6[%c4_78, %c0_79, %c0_80] : memref<9x128x128xbf16, #tpu.memory_space<vmem>>, vector<1x128x128xbf16>
    %122 = vector.shape_cast %121 : vector<1x128x128xbf16> to vector<128x128xbf16>
    %cst_81 = arith.constant dense<0.000000e+00> : vector<70x128xf32>
    %123 = tpu.matmul %120, %122, %cst_81 {dimension_numbers = #tpu.dot_dimension_numbers<[1], [0], [0], [1], [0, 0, 1, 1], [], []>} : vector<70x128xbf16>, vector<128x128xbf16>, vector<70x128xf32> -> vector<70x128xf32>
    %124 = arith.addf %119, %123 : vector<70x128xf32>
    %125 = vector.extract_strided_slice %98 {offsets = [12, 0], sizes = [70, 128], strides = [1, 1]} : vector<96x128xbf16> to vector<70x128xbf16>
    %c5_82 = arith.constant 5 : index
    %c0_83 = arith.constant 0 : index
    %c0_84 = arith.constant 0 : index
    %126 = vector.load %arg6[%c5_82, %c0_83, %c0_84] : memref<9x128x128xbf16, #tpu.memory_space<vmem>>, vector<1x128x128xbf16>
    %127 = vector.shape_cast %126 : vector<1x128x128xbf16> to vector<128x128xbf16>
    %cst_85 = arith.constant dense<0.000000e+00> : vector<70x128xf32>
    %128 = tpu.matmul %125, %127, %cst_85 {dimension_numbers = #tpu.dot_dimension_numbers<[1], [0], [0], [1], [0, 0, 1, 1], [], []>} : vector<70x128xbf16>, vector<128x128xbf16>, vector<70x128xf32> -> vector<70x128xf32>
    %129 = arith.addf %124, %128 : vector<70x128xf32>
    %130 = vector.extract_strided_slice %98 {offsets = [20, 0], sizes = [70, 128], strides = [1, 1]} : vector<96x128xbf16> to vector<70x128xbf16>
    %c6_86 = arith.constant 6 : index
    %c0_87 = arith.constant 0 : index
    %c0_88 = arith.constant 0 : index
    %131 = vector.load %arg6[%c6_86, %c0_87, %c0_88] : memref<9x128x128xbf16, #tpu.memory_space<vmem>>, vector<1x128x128xbf16>
    %132 = vector.shape_cast %131 : vector<1x128x128xbf16> to vector<128x128xbf16>
    %cst_89 = arith.constant dense<0.000000e+00> : vector<70x128xf32>
    %133 = tpu.matmul %130, %132, %cst_89 {dimension_numbers = #tpu.dot_dimension_numbers<[1], [0], [0], [1], [0, 0, 1, 1], [], []>} : vector<70x128xbf16>, vector<128x128xbf16>, vector<70x128xf32> -> vector<70x128xf32>
    %134 = arith.addf %129, %133 : vector<70x128xf32>
    %135 = vector.extract_strided_slice %98 {offsets = [21, 0], sizes = [70, 128], strides = [1, 1]} : vector<96x128xbf16> to vector<70x128xbf16>
    %c7_90 = arith.constant 7 : index
    %c0_91 = arith.constant 0 : index
    %c0_92 = arith.constant 0 : index
    %136 = vector.load %arg6[%c7_90, %c0_91, %c0_92] : memref<9x128x128xbf16, #tpu.memory_space<vmem>>, vector<1x128x128xbf16>
    %137 = vector.shape_cast %136 : vector<1x128x128xbf16> to vector<128x128xbf16>
    %cst_93 = arith.constant dense<0.000000e+00> : vector<70x128xf32>
    %138 = tpu.matmul %135, %137, %cst_93 {dimension_numbers = #tpu.dot_dimension_numbers<[1], [0], [0], [1], [0, 0, 1, 1], [], []>} : vector<70x128xbf16>, vector<128x128xbf16>, vector<70x128xf32> -> vector<70x128xf32>
    %139 = arith.addf %134, %138 : vector<70x128xf32>
    %140 = vector.extract_strided_slice %98 {offsets = [22, 0], sizes = [70, 128], strides = [1, 1]} : vector<96x128xbf16> to vector<70x128xbf16>
    %c8_94 = arith.constant 8 : index
    %c0_95 = arith.constant 0 : index
    %c0_96 = arith.constant 0 : index
    %141 = vector.load %arg6[%c8_94, %c0_95, %c0_96] : memref<9x128x128xbf16, #tpu.memory_space<vmem>>, vector<1x128x128xbf16>
    %142 = vector.shape_cast %141 : vector<1x128x128xbf16> to vector<128x128xbf16>
    %cst_97 = arith.constant dense<0.000000e+00> : vector<70x128xf32>
    %143 = tpu.matmul %140, %142, %cst_97 {dimension_numbers = #tpu.dot_dimension_numbers<[1], [0], [0], [1], [0, 0, 1, 1], [], []>} : vector<70x128xbf16>, vector<128x128xbf16>, vector<70x128xf32> -> vector<70x128xf32>
    %144 = arith.addf %139, %143 : vector<70x128xf32>
    %c0_98 = arith.constant 0 : index
    %c0_99 = arith.constant 0 : index
    %145 = vector.load %arg7[%c0_98, %c0_99] : memref<1x128xf32, #tpu.memory_space<vmem>>, vector<1x128xf32>
    %146 = vector.broadcast %145 : vector<1x128xf32> to vector<70x128xf32>
    %147 = arith.addf %144, %146 : vector<70x128xf32>
    %cst_100 = arith.constant 0.000000e+00 : f32
    %148 = vector.broadcast %cst_100 : f32 to vector<70x128xf32>
    %149 = arith.maximumf %147, %148 : vector<70x128xf32>
    %150 = arith.truncf %149 : vector<70x128xf32> to vector<70x128xbf16>
    %c0_101 = arith.constant 0 : index
    %c0_102 = arith.constant 0 : index
    %c0_103 = arith.constant 0 : index
    %151 = vector.load %arg8[%c0_101, %c0_102, %c0_103] : memref<1x70x128xbf16, #tpu.memory_space<vmem>>, vector<1x70x128xbf16>
    %152 = vector.shape_cast %151 : vector<1x70x128xbf16> to vector<70x128xbf16>
    %153 = vector.shape_cast %150 : vector<70x128xbf16> to vector<1x70x128xbf16>
    tpu.vector_store %arg8[%c0_101, %c0_102, %c0_103], %153 {strides = array<i32>} : memref<1x70x128xbf16, #tpu.memory_space<vmem>>, vector<1x70x128xbf16>,
    return
  }
  func.func @transform_0(%arg0: i32) -> (i32, i32, i32) {
    %c0_i32 = arith.constant 0 : i32
    %c0_i32_0 = arith.constant 0 : i32
    %c0_i32_1 = arith.constant 0 : i32
    return %arg0, %c0_i32, %c0_i32_0 : i32, i32, i32
  }
  func.func @transform_1(%arg0: i32) -> (i32, i32) {
    %c0_i32 = arith.constant 0 : i32
    %c0_i32_0 = arith.constant 0 : i32
    %c0_i32_1 = arith.constant 0 : i32
    return %c0_i32, %c0_i32_0 : i32, i32
  }
  func.func @transform_2(%arg0: i32) -> (i32, i32) {
    %c0_i32 = arith.constant 0 : i32
    %c0_i32_0 = arith.constant 0 : i32
    %c0_i32_1 = arith.constant 0 : i32
    return %c0_i32, %c0_i32_0 : i32, i32
  }
  func.func @transform_3(%arg0: i32) -> (i32, i32, i32) {
    %c0_i32 = arith.constant 0 : i32
    %c0_i32_0 = arith.constant 0 : i32
    %c0_i32_1 = arith.constant 0 : i32
    %c0_i32_2 = arith.constant 0 : i32
    return %c0_i32, %c0_i32_0, %c0_i32_1 : i32, i32, i32
  }
  func.func @transform_4(%arg0: i32) -> (i32, i32) {
    %c0_i32 = arith.constant 0 : i32
    %c0_i32_0 = arith.constant 0 : i32
    %c0_i32_1 = arith.constant 0 : i32
    return %c0_i32, %c0_i32_0 : i32, i32
  }
  func.func @transform_5(%arg0: i32) -> (i32, i32, i32) {
    %c0_i32 = arith.constant 0 : i32
    %c0_i32_0 = arith.constant 0 : i32
    %c0_i32_1 = arith.constant 0 : i32
    %c0_i32_2 = arith.constant 0 : i32
    return %c0_i32, %c0_i32_0, %c0_i32_1 : i32, i32, i32
  }
  func.func @transform_6(%arg0: i32) -> (i32, i32) {
    %c0_i32 = arith.constant 0 : i32
    %c0_i32_0 = arith.constant 0 : i32
    %c0_i32_1 = arith.constant 0 : i32
    return %c0_i32, %c0_i32_0 : i32, i32
  }
  func.func @transform_7(%arg0: i32) -> (i32, i32, i32) {
    %c0_i32 = arith.constant 0 : i32
    %c0_i32_0 = arith.constant 0 : i32
    %c0_i32_1 = arith.constant 0 : i32
    return %arg0, %c0_i32, %c0_i32_0 : i32, i32, i32
  }
}

</mosaic_0001>

<llo_original>
// kernel: tpu_custom_call.1
$region0: #{tpu_custom_call.1}
  #allocation0 [shape = 'u32[]', space=smem, size = 0x4, offset = 0x4, fixed_abs, tag = 'smem constant byte address 0x4 - core index']
  #allocation1 [shape = 'u32[144,128]{1,0:T(1,128)}', space=vmem, size = 0x12000, scoped, tag = 'internal scratch']
  %s0 = inlined_call_operand.hbm [shape: bf16[2,400,256], index: 0, kind: input, shape index: {}]
  %s1 = inlined_call_operand.hbm [shape: bf16[256,128], index: 1, kind: input, shape index: {}]
  %s2 = inlined_call_operand.vmem [shape: f32[1,128], index: 2, kind: input, shape index: {}]
  %s3 = inlined_call_operand.hbm [shape: bf16[16,128,128], index: 3, kind: input, shape index: {}]
  %s4 = inlined_call_operand.vmem [shape: f32[1,128], index: 4, kind: input, shape index: {}]
  %s5 = inlined_call_operand.hbm [shape: bf16[9,128,128], index: 5, kind: input, shape index: {}]
  %s6 = inlined_call_operand.vmem [shape: f32[1,128], index: 6, kind: input, shape index: {}]
  %s7 = inlined_call_operand.vmem [shape: bf16[2,70,128], index: 7, kind: output, shape index: {}]
  %s8 = sld [smem:[#allocation0]]
  $region77: #{tpu_custom_call.1} parent=0
    _
  %s10 = ssub.s32 1, %s8
  %s11 = scalar_select 0, %s10, %s8
  $region1: #{tpu_custom_call.1} parent=0
    #allocation2 [shape = 'u8[409600]{0}', space=vmem, size = 0x64000, scoped, tag = 'input window, operand 0']
    #allocation3 [shape = 's32[2]{0}', space=sflag, size = 0x8, scoped, tag = 'scoped memory for tpu_custom_call.1']
    #allocation4 [shape = 'u8[65536]{0}', space=vmem, size = 0x10000, scoped, tag = 'input window, operand 1, single buffered']
    #allocation5 [shape = 's32[1]{0}', space=sflag, size = 0x4, scoped, tag = 'scoped memory for tpu_custom_call.1']
    #allocation6 [shape = 'u8[524288]{0}', space=vmem, size = 0x80000, scoped, tag = 'input window, operand 3, single buffered']
    #allocation7 [shape = 'u8[294912]{0}', space=vmem, size = 0x48000, scoped, tag = 'input window, operand 5, single buffered']
    #allocation8 [shape = 's32[1]{0}', space=sflag, size = 0x4, scoped, tag = 'scoped memory for tpu_custom_call.1']
    %12 = vsyncpa [#allocation3], 0
    %s13 = scalar_lea.sflag [#allocation3], 1
    %14 = vsyncpa %s13, 0
    %15 = vsyncpa [#allocation5], 0
    %16 = vsyncpa [#allocation8], 0
    loop: start=0, step=1, limit=4
    $region2: #{tpu_custom_call.1} parent=1 // loop_pre_header
      _
    $region3: #{tpu_custom_call.1} parent=1 // loop_header
      %s18 = sphi 0, %s22
      %p19 = scmp.ge.s32.totalorder %s18, 4
      %s28 = sphi 0, %s30
      %s31 = sphi 0, %s28
      %s32 = sphi 0, %s31
      %s48 = sphi 0, %s32
      %s52 = sphi 0, %s52
      %s54 = sphi 0, %s52
      %s55 = sphi 0, %s54
      %s69 = sphi 0, %s55
      %s73 = sphi 0, %s73
      %s75 = sphi 0, %s73
      %s76 = sphi 0, %s75
      %s90 = sphi 0, %s76
      %s94 = sphi 0, %s94
      %s96 = sphi 0, %s94
      %s97 = sphi 0, %s96
      %s111 = sphi 0, %s97
      %s115 = sphi 0, %s115
      %s117 = sphi 0, %s115
      %s118 = sphi 0, %s117
      %s132 = sphi 0, %s118
      %s136 = sphi 0, %s136
      %s138 = sphi 0, %s136
      %s139 = sphi 0, %s138
      %s153 = sphi 0, %s139
      %s157 = sphi 0, %s157
      %s159 = sphi 0, %s157
      %s160 = sphi 0, %s159
      %s174 = sphi 0, %s160
      %s180 = sphi 0, %s182
      %s183 = sphi 0, %s180
      %s184 = sphi 0, %s183
      %s200 = sphi 0, %s184
    $region4: #{tpu_custom_call.1} parent=1 // loop_header_branch
      %21 = sbr.rel (%p19) target = $region8
    $region5: #{tpu_custom_call.1} parent=1 // loop_body
      %s23 = ssub.s32 %s18, 1
      %s24 = ssub.s32 %s18, 2
      %s25 = sadd.s32 %s18, 1
      %s26 = ssub.s32 %s18, %s25
      %p27 = scmp.eq.s32.totalorder %s26, 0
      %s29 = sadd.s32 %s28, 1
      %s30 = scalar_select %p27, %s28, %s29
      %p33 = pneg %p27
      %p34 = scmp.eq.s32.totalorder %s18, 1
      %p35 = por %p33, %p34
      %p36 = scmp.ne.s32.totalorder %s28, %s31
      %p37 = scmp.eq.s32.totalorder %s18, 0
      %p38 = por %p36, %p37
      %p39 = scmp.ne.s32.totalorder %s28, %s31
      %p40 = scmp.eq.s32.totalorder %s23, 1
      %p41 = por %p39, %p40
      %p42 = scmp.ne.s32.totalorder %s31, %s32
      %p43 = scmp.eq.s32.totalorder %s23, 0
      %p44 = por %p42, %p43
      %p45 = scmp.ne.s32.totalorder %s31, %s32
      %p46 = scmp.eq.s32.totalorder %s24, 1
      %p47 = por %p45, %p46
      %p49 = scmp.ne.s32.totalorder %s32, %s48
      %p50 = scmp.eq.s32.totalorder %s24, 0
      %p51 = por %p49, %p50
      %s53 = sadd.s32 %s52, 1
      %p56 = scmp.eq.s32.totalorder %s18, 1
      %p57 = scmp.ne.s32.totalorder %s52, %s54
      %p58 = scmp.eq.s32.totalorder %s18, 0
      %p59 = por %p57, %p58
      %p60 = scmp.ne.s32.totalorder %s52, %s54
      %p61 = scmp.eq.s32.totalorder %s23, 1
      %p62 = por %p60, %p61
      %p63 = scmp.ne.s32.totalorder %s54, %s55
      %p64 = scmp.eq.s32.totalorder %s23, 0
      %p65 = por %p63, %p64
      %p66 = scmp.ne.s32.totalorder %s54, %s55
      %p67 = scmp.eq.s32.totalorder %s24, 1
      %p68 = por %p66, %p67
      %p70 = scmp.ne.s32.totalorder %s55, %s69
      %p71 = scmp.eq.s32.totalorder %s24, 0
      %p72 = por %p70, %p71
      %s74 = sadd.s32 %s73, 1
      %p77 = scmp.eq.s32.totalorder %s18, 1
      %p78 = scmp.ne.s32.totalorder %s73, %s75
      %p79 = scmp.eq.s32.totalorder %s18, 0
      %p80 = por %p78, %p79
      %p81 = scmp.ne.s32.totalorder %s73, %s75
      %p82 = scmp.eq.s32.totalorder %s23, 1
      %p83 = por %p81, %p82
      %p84 = scmp.ne.s32.totalorder %s75, %s76
      %p85 = scmp.eq.s32.totalorder %s23, 0
      %p86 = por %p84, %p85
      %p87 = scmp.ne.s32.totalorder %s75, %s76
      %p88 = scmp.eq.s32.totalorder %s24, 1
      %p89 = por %p87, %p88
      %p91 = scmp.ne.s32.totalorder %s76, %s90
      %p92 = scmp.eq.s32.totalorder %s24, 0
      %p93 = por %p91, %p92
      %s95 = sadd.s32 %s94, 1
      %p98 = scmp.eq.s32.totalorder %s18, 1
      %p99 = scmp.ne.s32.totalorder %s94, %s96
      %p100 = scmp.eq.s32.totalorder %s18, 0
      %p101 = por %p99, %p100
      %p102 = scmp.ne.s32.totalorder %s94, %s96
      %p103 = scmp.eq.s32.totalorder %s23, 1
      %p104 = por %p102, %p103
      %p105 = scmp.ne.s32.totalorder %s96, %s97
      %p106 = scmp.eq.s32.totalorder %s23, 0
      %p107 = por %p105, %p106
      %p108 = scmp.ne.s32.totalorder %s96, %s97
      %p109 = scmp.eq.s32.totalorder %s24, 1
      %p110 = por %p108, %p109
      %p112 = scmp.ne.s32.totalorder %s97, %s111
      %p113 = scmp.eq.s32.totalorder %s24, 0
      %p114 = por %p112, %p113
      %s116 = sadd.s32 %s115, 1
      %p119 = scmp.eq.s32.totalorder %s18, 1
      %p120 = scmp.ne.s32.totalorder %s115, %s117
      %p121 = scmp.eq.s32.totalorder %s18, 0
      %p122 = por %p120, %p121
      %p123 = scmp.ne.s32.totalorder %s115, %s117
      %p124 = scmp.eq.s32.totalorder %s23, 1
      %p125 = por %p123, %p124
      %p126 = scmp.ne.s32.totalorder %s117, %s118
      %p127 = scmp.eq.s32.totalorder %s23, 0
      %p128 = por %p126, %p127
      %p129 = scmp.ne.s32.totalorder %s117, %s118
      %p130 = scmp.eq.s32.totalorder %s24, 1
      %p131 = por %p129, %p130
      %p133 = scmp.ne.s32.totalorder %s118, %s132
      %p134 = scmp.eq.s32.totalorder %s24, 0
      %p135 = por %p133, %p134
      %s137 = sadd.s32 %s136, 1
      %p140 = scmp.eq.s32.totalorder %s18, 1
      %p141 = scmp.ne.s32.totalorder %s136, %s138
      %p142 = scmp.eq.s32.totalorder %s18, 0
      %p143 = por %p141, %p142
      %p144 = scmp.ne.s32.totalorder %s136, %s138
      %p145 = scmp.eq.s32.totalorder %s23, 1
      %p146 = por %p144, %p145
      %p147 = scmp.ne.s32.totalorder %s138, %s139
      %p148 = scmp.eq.s32.totalorder %s23, 0
      %p149 = por %p147, %p148
      %p150 = scmp.ne.s32.totalorder %s138, %s139
      %p151 = scmp.eq.s32.totalorder %s24, 1
      %p152 = por %p150, %p151
      %p154 = scmp.ne.s32.totalorder %s139, %s153
      %p155 = scmp.eq.s32.totalorder %s24, 0
      %p156 = por %p154, %p155
      %s158 = sadd.s32 %s157, 1
      %p161 = scmp.eq.s32.totalorder %s18, 1
      %p162 = scmp.ne.s32.totalorder %s157, %s159
      %p163 = scmp.eq.s32.totalorder %s18, 0
      %p164 = por %p162, %p163
      %p165 = scmp.ne.s32.totalorder %s157, %s159
      %p166 = scmp.eq.s32.totalorder %s23, 1
      %p167 = por %p165, %p166
      %p168 = scmp.ne.s32.totalorder %s159, %s160
      %p169 = scmp.eq.s32.totalorder %s23, 0
      %p170 = por %p168, %p169
      %p171 = scmp.ne.s32.totalorder %s159, %s160
      %p172 = scmp.eq.s32.totalorder %s24, 1
      %p173 = por %p171, %p172
      %p175 = scmp.ne.s32.totalorder %s160, %s174
      %p176 = scmp.eq.s32.totalorder %s24, 0
      %p177 = por %p175, %p176
      %s178 = ssub.s32 %s18, %s25
      %p179 = scmp.eq.s32.totalorder %s178, 0
      %s181 = sadd.s32 %s180, 1
      %s182 = scalar_select %p179, %s180, %s181
      %p185 = pneg %p179
      %p186 = scmp.eq.s32.totalorder %s18, 1
      %p187 = por %p185, %p186
      %p188 = scmp.ne.s32.totalorder %s180, %s183
      %p189 = scmp.eq.s32.totalorder %s18, 0
      %p190 = por %p188, %p189
      %p191 = scmp.ne.s32.totalorder %s180, %s183
      %p192 = scmp.eq.s32.totalorder %s23, 1
      %p193 = por %p191, %p192
      %p194 = scmp.ne.s32.totalorder %s183, %s184
      %p195 = scmp.eq.s32.totalorder %s23, 0
      %p196 = por %p194, %p195
      %p197 = scmp.ne.s32.totalorder %s183, %s184
      %p198 = scmp.eq.s32.totalorder %s24, 1
      %p199 = por %p197, %p198
      %p201 = scmp.ne.s32.totalorder %s184, %s200
      %p202 = scmp.eq.s32.totalorder %s24, 0
      %p203 = por %p201, %p202
      %p204 = scmp.le.s32.totalorder 1, %s18
      %p205 = scmp.lt.s32.totalorder %s18, 3
      %p206 = pnand %p204, %p205
      %p207 = pneg %p206
      // Predicated region
      $region9: #{tpu_custom_call.1} parent=5 // pred_check
        _
      $region10: #{tpu_custom_call.1} parent=5 // pred_check_branch
        %209 = sbr.rel (%p206) target = $region12
      $region11: #{tpu_custom_call.1} parent=5 // pred_region
        %s210 = ssub.s32 %s18, 1
        // Predicated region
        $region13: #{tpu_custom_call.1} parent=11 // pred_check
          %p211 = pneg %p65
        $region14: #{tpu_custom_call.1} parent=11 // pred_check_branch
          %213 = sbr.rel (%p211) target = $region16
        $region15: #{tpu_custom_call.1} parent=11 // pred_region
          %s215 = ssub.s32 2048, 2048
          %216 = vsyncadd [#allocation5], %s215
          %s217 = sshll.u32 [#allocation4], 4
          %s218 = int_to_ptr.vmem [resolvable:$true] %s217
          %223 = dma.hbm_to_vmem [thread:$0]  %s1, 2048, %s218, [#allocation5], 64, 64, 4
        $region16: #{tpu_custom_call.1} parent=11 // pred_fallthru
          _
        // Predicated region
        $region17: #{tpu_custom_call.1} parent=11 // pred_check
          %p224 = pneg %p86
        $region18: #{tpu_custom_call.1} parent=11 // pred_check_branch
          %226 = sbr.rel (%p224) target = $region20
        $region19: #{tpu_custom_call.1} parent=11 // pred_region
          _
        $region20: #{tpu_custom_call.1} parent=11 // pred_fallthru
          _
        // Predicated region
        $region21: #{tpu_custom_call.1} parent=11 // pred_check
          %p227 = pneg %p107
        $region22: #{tpu_custom_call.1} parent=11 // pred_check_branch
          %229 = sbr.rel (%p227) target = $region24
        $region23: #{tpu_custom_call.1} parent=11 // pred_region
          %s231 = ssub.s32 16384, 16384
          %232 = vsyncadd [#allocation5], %s231
          %s233 = sshll.u32 [#allocation6], 4
          %s234 = int_to_ptr.vmem [resolvable:$true] %s233
          %239 = dma.hbm_to_vmem [thread:$0]  %s3, 16384, %s234, [#allocation5], 64, 64, 4
        $region24: #{tpu_custom_call.1} parent=11 // pred_fallthru
          _
        // Predicated region
        $region25: #{tpu_custom_call.1} parent=11 // pred_check
          %p240 = pneg %p128
        $region26: #{tpu_custom_call.1} parent=11 // pred_check_branch
          %242 = sbr.rel (%p240) target = $region28
        $region27: #{tpu_custom_call.1} parent=11 // pred_region
          _
        $region28: #{tpu_custom_call.1} parent=11 // pred_fallthru
          _
        // Predicated region
        $region29: #{tpu_custom_call.1} parent=11 // pred_check
          %p243 = pneg %p149
        $region30: #{tpu_custom_call.1} parent=11 // pred_check_branch
          %245 = sbr.rel (%p243) target = $region32
        $region31: #{tpu_custom_call.1} parent=11 // pred_region
          %s247 = ssub.s32 9216, 9216
          %248 = vsyncadd [#allocation8], %s247
          %s249 = sshll.u32 [#allocation7], 4
          %s250 = int_to_ptr.vmem [resolvable:$true] %s249
          %255 = dma.hbm_to_vmem [thread:$0]  %s5, 9216, %s250, [#allocation8], 64, 64, 4
        $region32: #{tpu_custom_call.1} parent=11 // pred_fallthru
          _
        // Predicated region
        $region33: #{tpu_custom_call.1} parent=11 // pred_check
          %p256 = pneg %p170
        $region34: #{tpu_custom_call.1} parent=11 // pred_check_branch
          %258 = sbr.rel (%p256) target = $region36
        $region35: #{tpu_custom_call.1} parent=11 // pred_region
          _
        $region36: #{tpu_custom_call.1} parent=11 // pred_fallthru
          _
      $region12: #{tpu_custom_call.1} parent=5 // pred_fallthru
        _
      %p259 = scmp.lt.s32.totalorder %s18, 2
      // Predicated region
      $region37: #{tpu_custom_call.1} parent=5 // pred_check
        %p260 = pneg %p259
      $region38: #{tpu_custom_call.1} parent=5 // pred_check_branch
        %262 = sbr.rel (%p260) target = $region40
      $region39: #{tpu_custom_call.1} parent=5 // pred_region
        // Predicated region
        $region41: #{tpu_custom_call.1} parent=39 // pred_check
          %p263 = pneg %p38
        $region42: #{tpu_custom_call.1} parent=39 // pred_check_branch
          %265 = sbr.rel (%p263) target = $region44
        $region43: #{tpu_custom_call.1} parent=39 // pred_region
          %s266 = sand.u32 %s28, 1
          %s267 = scalar_lea.sflag [#allocation3], %s266
          %s268 = sand.u32 %s28, 1
          %s269 = smul.addr %s268, 400
          %s270 = scalar_lea.vmem [#allocation2], %s269
          %s272 = ssub.s32 6400, 6400
          %273 = vsyncadd %s267, %s272
          %s274 = smul.addr %s18, 100
          %s275 = smul.addr %s274, 64
          %s276 = scalar_lea.hbm %s0, %s275
          %s277 = sshll.u32 %s270, 4
          %s278 = int_to_ptr.vmem [resolvable:$true] %s277
          %283 = dma.hbm_to_vmem [thread:$0]  %s276, 6400, %s278, %s267, 128, 128, 8
        $region44: #{tpu_custom_call.1} parent=39 // pred_fallthru
          _
      $region40: #{tpu_custom_call.1} parent=5 // pred_fallthru
        _
      %p284 = scmp.le.s32.totalorder 1, %s18
      %p285 = scmp.lt.s32.totalorder %s18, 3
      %p286 = pnand %p284, %p285
      %p287 = pneg %p286
      // Predicated region
      $region45: #{tpu_custom_call.1} parent=5 // pred_check
        _
      $region46: #{tpu_custom_call.1} parent=5 // pred_check_branch
        %289 = sbr.rel (%p286) target = $region48
      $region47: #{tpu_custom_call.1} parent=5 // pred_region
        %s290 = ssub.s32 %s18, 1
        %s291 = sand.u32 %s31, 1
        %s292 = scalar_lea.sflag [#allocation3], %s291
        %s293 = sand.u32 %s31, 1
        %s294 = smul.addr %s293, 400
        %s295 = scalar_lea.vmem [#allocation2], %s294
        // Predicated region
        $region49: #{tpu_custom_call.1} parent=47 // pred_check
          %p296 = pneg %p44
        $region50: #{tpu_custom_call.1} parent=47 // pred_check_branch
          %298 = sbr.rel (%p296) target = $region52
        $region51: #{tpu_custom_call.1} parent=47 // pred_region
          %299 = dma.done %s292, 6400
        $region52: #{tpu_custom_call.1} parent=47 // pred_fallthru
          _
        // Predicated region
        $region53: #{tpu_custom_call.1} parent=47 // pred_check
          %p300 = pneg %p65
        $region54: #{tpu_custom_call.1} parent=47 // pred_check_branch
          %302 = sbr.rel (%p300) target = $region56
        $region55: #{tpu_custom_call.1} parent=47 // pred_region
          %303 = dma.done [#allocation5], 2048
        $region56: #{tpu_custom_call.1} parent=47 // pred_fallthru
          _
        // Predicated region
        $region57: #{tpu_custom_call.1} parent=47 // pred_check
          %p304 = pneg %p107
        $region58: #{tpu_custom_call.1} parent=47 // pred_check_branch
          %306 = sbr.rel (%p304) target = $region60
        $region59: #{tpu_custom_call.1} parent=47 // pred_region
          %307 = dma.done [#allocation5], 16384
        $region60: #{tpu_custom_call.1} parent=47 // pred_fallthru
          _
        // Predicated region
        $region61: #{tpu_custom_call.1} parent=47 // pred_check
          %p308 = pneg %p149
        $region62: #{tpu_custom_call.1} parent=47 // pred_check_branch
          %310 = sbr.rel (%p308) target = $region64
        $region63: #{tpu_custom_call.1} parent=47 // pred_region
          %311 = dma.done [#allocation8], 9216
        $region64: #{tpu_custom_call.1} parent=47 // pred_fallthru
          _
        %s312 = sand.u32 %s31, 1
        %s313 = scalar_lea.sflag [#allocation3], %s312
        %s314 = sand.u32 %s31, 1
        %s315 = smul.addr %s314, 400
        %s316 = scalar_lea.vmem [#allocation2], %s315
        %p317 = pneg %p44
        %p318 = pneg %p41
        %p319 = pneg %p65
        %p320 = pneg %p62
        %p321 = pneg %p86
        %p322 = pneg %p83
        %p323 = pneg %p107
        %p324 = pneg %p104
        %p325 = pneg %p128
        %p326 = pneg %p125
        %p327 = pneg %p149
        %p328 = pneg %p146
        %p329 = pneg %p170
        %p330 = pneg %p167
        %p331 = pneg %p196
        %p332 = pneg %p193
        %p333 = scmp.lt.s32.totalorder %s23, 1
        %s334 = scalar_select %p333, %s23, 1
        %s335 = smul.addr %s334, 9
        %s336 = smul.addr %s335, 4
        %s337 = scalar_lea.vmem %s7, %s336
        %p338 = scmp.lt.s32.totalorder %s23, 1
        %s339 = scalar_select %p338, %s23, 1
        %s340 = smul.addr %s339, 9
        %s341 = smul.addr %s340, 4
        %s342 = scalar_lea.vmem %s7, %s341
        %v344 = vld [vmem:[%s295] sm:$0xff]
        %v345 = vld [vmem:[%s295 + $0x8] sm:$0xff]
        %v346 = vld [vmem:[%s295 + $0x10] sm:$0xff]
        %v347 = vld [vmem:[%s295 + $0x18] sm:$0xff]
        %v348 = vld [vmem:[%s295 + $0x20] sm:$0xff]
        %v349 = vld [vmem:[%s295 + $0x28] sm:$0xff]
        %v350 = vld [vmem:[%s295 + $0x30] sm:$0xff]
        %v351 = vld [vmem:[%s295 + $0x38] sm:$0xff]
        %v352 = vld [vmem:[%s295 + $0x40] sm:$0xff]
        %v353 = vld [vmem:[%s295 + $0x48] sm:$0xff]
        %v354 = vld [vmem:[%s295 + $0x50] sm:$0xff]
        %v355 = vld [vmem:[%s295 + $0x58] sm:$0xff]
        %v356 = vld [vmem:[%s295 + $0x60] sm:$0xff]
        %v357 = vld [vmem:[%s295 + $0x68] sm:$0xff]
        %v358 = vld [vmem:[%s295 + $0x70] sm:$0xff]
        %v359 = vld [vmem:[%s295 + $0x78] sm:$0xff]
        %v360 = vld [vmem:[%s295 + $0x80] sm:$0xff]
        %v361 = vld [vmem:[%s295 + $0x88] sm:$0xff]
        %v362 = vld [vmem:[%s295 + $0x90] sm:$0xff]
        %v363 = vld [vmem:[%s295 + $0x98] sm:$0xff]
        %v364 = vld [vmem:[%s295 + $0xa0] sm:$0xff]
        %v365 = vld [vmem:[%s295 + $0xa8] sm:$0xff]
        %v366 = vld [vmem:[%s295 + $0xb0] sm:$0xff]
        %v367 = vld [vmem:[%s295 + $0xb8] sm:$0xff]
        %v368 = vld [vmem:[%s295 + $0xc0] sm:$0xff]
        %v369 = vld [vmem:[%s295 + $0xc8] sm:$0xff]
        %v370 = vld [vmem:[%s295 + $0xd0] sm:$0xff]
        %v371 = vld [vmem:[%s295 + $0xd8] sm:$0xff]
        %v372 = vld [vmem:[%s295 + $0xe0] sm:$0xff]
        %v373 = vld [vmem:[%s295 + $0xe8] sm:$0xff]
        %v374 = vld [vmem:[%s295 + $0xf0] sm:$0xff]
        %v375 = vld [vmem:[%s295 + $0xf8] sm:$0xff]
        %v376 = vld [vmem:[%s295 + $0x100] sm:$0xff]
        %v377 = vld [vmem:[%s295 + $0x108] sm:$0xff]
        %v378 = vld [vmem:[%s295 + $0x110] sm:$0xff]
        %v379 = vld [vmem:[%s295 + $0x118] sm:$0xff]
        %v380 = vld [vmem:[%s295 + $0x120] sm:$0xff]
        %v381 = vld [vmem:[%s295 + $0x128] sm:$0xff]
        %v382 = vld [vmem:[%s295 + $0x130] sm:$0xff]
        %v383 = vld [vmem:[%s295 + $0x138] sm:$0xff]
        %v384 = vld [vmem:[%s295 + $0x140] sm:$0xff]
        %v385 = vld [vmem:[%s295 + $0x148] sm:$0xff]
        %v386 = vld [vmem:[%s295 + $0x150] sm:$0xff]
        %v387 = vld [vmem:[%s295 + $0x158] sm:$0xff]
        %v388 = vld [vmem:[%s295 + $0x160] sm:$0xff]
        %v389 = vld [vmem:[%s295 + $0x168] sm:$0xff]
        %v390 = vld [vmem:[%s295 + $0x170] sm:$0xff]
        %v391 = vld [vmem:[%s295 + $0x178] sm:$0xff]
        %v392 = vld [vmem:[%s295 + $0x180] sm:$0xff]
        %v393 = vld [vmem:[%s295 + $0x188] sm:$0xff]
        %v394 = vld [vmem:[#allocation4] sm:$0xf]
        %v395 = vld [vmem:[#allocation4 + $0x4] sm:$0xf]
        %v396 = vld [vmem:[#allocation4 + $0x8] sm:$0xf]
        %v397 = vld [vmem:[#allocation4 + $0xc] sm:$0xf]
        %v398 = vld [vmem:[#allocation4 + $0x10] sm:$0xf]
        %v399 = vld [vmem:[#allocation4 + $0x14] sm:$0xf]
        %v400 = vld [vmem:[#allocation4 + $0x18] sm:$0xf]
        %v401 = vld [vmem:[#allocation4 + $0x1c] sm:$0xf]
        %v402 = vld [vmem:[#allocation4 + $0x20] sm:$0xf]
        %v403 = vld [vmem:[#allocation4 + $0x24] sm:$0xf]
        %v404 = vld [vmem:[#allocation4 + $0x28] sm:$0xf]
        %v405 = vld [vmem:[#allocation4 + $0x2c] sm:$0xf]
        %v406 = vld [vmem:[#allocation4 + $0x30] sm:$0xf]
        %v407 = vld [vmem:[#allocation4 + $0x34] sm:$0xf]
        %v408 = vld [vmem:[#allocation4 + $0x38] sm:$0xf]
        %v409 = vld [vmem:[#allocation4 + $0x3c] sm:$0xf]
        %v410 = vld [vmem:[#allocation4 + $0x40] sm:$0xf]
        %v411 = vld [vmem:[#allocation4 + $0x44] sm:$0xf]
        %v412 = vld [vmem:[#allocation4 + $0x48] sm:$0xf]
        %v413 = vld [vmem:[#allocation4 + $0x4c] sm:$0xf]
        %v414 = vld [vmem:[#allocation4 + $0x50] sm:$0xf]
        %v415 = vld [vmem:[#allocation4 + $0x54] sm:$0xf]
        %v416 = vld [vmem:[#allocation4 + $0x58] sm:$0xf]
        %v417 = vld [vmem:[#allocation4 + $0x5c] sm:$0xf]
        %v418 = vld [vmem:[#allocation4 + $0x60] sm:$0xf]
        %v419 = vld [vmem:[#allocation4 + $0x64] sm:$0xf]
        %v420 = vld [vmem:[#allocation4 + $0x68] sm:$0xf]
        %v421 = vld [vmem:[#allocation4 + $0x6c] sm:$0xf]
        %v422 = vld [vmem:[#allocation4 + $0x70] sm:$0xf]
        %v423 = vld [vmem:[#allocation4 + $0x74] sm:$0xf]
        %v424 = vld [vmem:[#allocation4 + $0x78] sm:$0xf]
        %v425 = vld [vmem:[#allocation4 + $0x7c] sm:$0xf]
        %v426 = vld [vmem:[%s2] sm:$0x1]
        %v428 = vlaneseq
        %v429 = vshrl.u32 %v428, 7
        %v430 = vsub.s32 0, %v429
        %v431 = vrot.slane %v426, %v430
        %v483 = vunpack.c.l.b16 %v344
        %v484 = vunpack.c.h.b16 %v344
        %v485 = vunpack.c.l.b16 %v345
        %v486 = vunpack.c.h.b16 %v345
        %v487 = vunpack.c.l.b16 %v346
        %v488 = vunpack.c.h.b16 %v346
        %v489 = vunpack.c.l.b16 %v347
        %v490 = vunpack.c.h.b16 %v347
        %v491 = vunpack.c.l.b16 %v348
        %v492 = vunpack.c.h.b16 %v348
        %v493 = vunpack.c.l.b16 %v349
        %v494 = vunpack.c.h.b16 %v349
        %v495 = vunpack.c.l.b16 %v350
        %v496 = vunpack.c.h.b16 %v350
        %v497 = vunpack.c.l.b16 %v351
        %v498 = vunpack.c.h.b16 %v351
        %v499 = vunpack.c.l.b16 %v352
        %v500 = vunpack.c.h.b16 %v352
        %v501 = vunpack.c.l.b16 %v353
        %v502 = vunpack.c.h.b16 %v353
        %v503 = vunpack.c.l.b16 %v354
        %v504 = vunpack.c.h.b16 %v354
        %v505 = vunpack.c.l.b16 %v355
        %v506 = vunpack.c.h.b16 %v355
        %v507 = vunpack.c.l.b16 %v356
        %v508 = vunpack.c.h.b16 %v356
        %v509 = vunpack.c.l.b16 %v357
        %v510 = vunpack.c.h.b16 %v357
        %v511 = vunpack.c.l.b16 %v358
        %v512 = vunpack.c.h.b16 %v358
        %v513 = vunpack.c.l.b16 %v359
        %v514 = vunpack.c.h.b16 %v359
        %v515 = vunpack.c.l.b16 %v360
        %v516 = vunpack.c.h.b16 %v360
        %v517 = vunpack.c.l.b16 %v361
        %v518 = vunpack.c.h.b16 %v361
        %v519 = vunpack.c.l.b16 %v362
        %v520 = vunpack.c.h.b16 %v362
        %v521 = vunpack.c.l.b16 %v363
        %v522 = vunpack.c.h.b16 %v363
        %v523 = vunpack.c.l.b16 %v364
        %v524 = vunpack.c.h.b16 %v364
        %v525 = vunpack.c.l.b16 %v365
        %v526 = vunpack.c.h.b16 %v365
        %v527 = vunpack.c.l.b16 %v366
        %v528 = vunpack.c.h.b16 %v366
        %v529 = vunpack.c.l.b16 %v367
        %v530 = vunpack.c.h.b16 %v367
        %v531 = vunpack.c.l.b16 %v368
        %v532 = vunpack.c.h.b16 %v368
        %v533 = vunpack.c.l.b16 %v369
        %v534 = vunpack.c.h.b16 %v369
        %v535 = vunpack.c.l.b16 %v370
        %v536 = vunpack.c.h.b16 %v370
        %v537 = vunpack.c.l.b16 %v371
        %v538 = vunpack.c.h.b16 %v371
        %v539 = vunpack.c.l.b16 %v372
        %v540 = vunpack.c.h.b16 %v372
        %v541 = vunpack.c.l.b16 %v373
        %v542 = vunpack.c.h.b16 %v373
        %v543 = vunpack.c.l.b16 %v374
        %v544 = vunpack.c.h.b16 %v374
        %v545 = vunpack.c.l.b16 %v375
        %v546 = vunpack.c.h.b16 %v375
        %v547 = vunpack.c.l.b16 %v376
        %v548 = vunpack.c.h.b16 %v376
        %v549 = vunpack.c.l.b16 %v377
        %v550 = vunpack.c.h.b16 %v377
        %v551 = vunpack.c.l.b16 %v378
        %v552 = vunpack.c.h.b16 %v378
        %v553 = vunpack.c.l.b16 %v379
        %v554 = vunpack.c.h.b16 %v379
        %v555 = vunpack.c.l.b16 %v380
        %v556 = vunpack.c.h.b16 %v380
        %v557 = vunpack.c.l.b16 %v381
        %v558 = vunpack.c.h.b16 %v381
        %v559 = vunpack.c.l.b16 %v382
        %v560 = vunpack.c.h.b16 %v382
        %v561 = vunpack.c.l.b16 %v383
        %v562 = vunpack.c.h.b16 %v383
        %v563 = vunpack.c.l.b16 %v384
        %v564 = vunpack.c.h.b16 %v384
        %v565 = vunpack.c.l.b16 %v385
        %v566 = vunpack.c.h.b16 %v385
        %v567 = vunpack.c.l.b16 %v386
        %v568 = vunpack.c.h.b16 %v386
        %v569 = vunpack.c.l.b16 %v387
        %v570 = vunpack.c.h.b16 %v387
        %v571 = vunpack.c.l.b16 %v388
        %v572 = vunpack.c.h.b16 %v388
        %v573 = vunpack.c.l.b16 %v389
        %v574 = vunpack.c.h.b16 %v389
        %v575 = vunpack.c.l.b16 %v390
        %v576 = vunpack.c.h.b16 %v390
        %v577 = vunpack.c.l.b16 %v391
        %v578 = vunpack.c.h.b16 %v391
        %v579 = vunpack.c.l.b16 %v392
        %v580 = vunpack.c.h.b16 %v392
        %v581 = vunpack.c.l.b16 %v393
        %v582 = vunpack.c.h.b16 %v393
        %v583 = vpack.c.b16 %v485, %v483
        %v584 = vpack.c.b16 %v486, %v484
        %v585 = vpack.c.b16 %v489, %v487
        %v586 = vpack.c.b16 %v490, %v488
        %v587 = vpack.c.b16 %v493, %v491
        %v588 = vpack.c.b16 %v494, %v492
        %v589 = vpack.c.b16 %v497, %v495
        %v590 = vpack.c.b16 %v498, %v496
        %v591 = vpack.c.b16 %v501, %v499
        %v592 = vpack.c.b16 %v502, %v500
        %v593 = vpack.c.b16 %v505, %v503
        %v594 = vpack.c.b16 %v506, %v504
        %v595 = vpack.c.b16 %v509, %v507
        %v596 = vpack.c.b16 %v510, %v508
        %v597 = vpack.c.b16 %v513, %v511
        %v598 = vpack.c.b16 %v514, %v512
        %v599 = vpack.c.b16 %v517, %v515
        %v600 = vpack.c.b16 %v518, %v516
        %v601 = vpack.c.b16 %v521, %v519
        %v602 = vpack.c.b16 %v522, %v520
        %v603 = vpack.c.b16 %v525, %v523
        %v604 = vpack.c.b16 %v526, %v524
        %v605 = vpack.c.b16 %v529, %v527
        %v606 = vpack.c.b16 %v530, %v528
        %v607 = vpack.c.b16 %v533, %v531
        %v608 = vpack.c.b16 %v534, %v532
        %v609 = vpack.c.b16 %v537, %v535
        %v610 = vpack.c.b16 %v538, %v536
        %v611 = vpack.c.b16 %v541, %v539
        %v612 = vpack.c.b16 %v542, %v540
        %v613 = vpack.c.b16 %v545, %v543
        %v614 = vpack.c.b16 %v546, %v544
        %v615 = vpack.c.b16 %v549, %v547
        %v616 = vpack.c.b16 %v550, %v548
        %v617 = vpack.c.b16 %v553, %v551
        %v618 = vpack.c.b16 %v554, %v552
        %v619 = vpack.c.b16 %v557, %v555
        %v620 = vpack.c.b16 %v558, %v556
        %v621 = vpack.c.b16 %v561, %v559
        %v622 = vpack.c.b16 %v562, %v560
        %v623 = vpack.c.b16 %v565, %v563
        %v624 = vpack.c.b16 %v566, %v564
        %v625 = vpack.c.b16 %v569, %v567
        %v626 = vpack.c.b16 %v570, %v568
        %v627 = vpack.c.b16 %v573, %v571
        %v628 = vpack.c.b16 %v574, %v572
        %v629 = vpack.c.b16 %v577, %v575
        %v630 = vpack.c.b16 %v578, %v576
        %v631 = vpack.c.b16 %v581, %v579
        %v632 = vpack.c.b16 %v582, %v580
        %v715 = vunpack.c.l.b16 %v394
        %v716 = vunpack.c.l.b16 %v395
        %v717 = vunpack.c.l.b16 %v396
        %v718 = vunpack.c.l.b16 %v397
        %v719 = vunpack.c.l.b16 %v398
        %v720 = vunpack.c.l.b16 %v399
        %v721 = vunpack.c.l.b16 %v400
        %v722 = vunpack.c.l.b16 %v401
        %v723 = vunpack.c.l.b16 %v402
        %v724 = vunpack.c.l.b16 %v403
        %v725 = vunpack.c.l.b16 %v404
        %v726 = vunpack.c.l.b16 %v405
        %v727 = vunpack.c.l.b16 %v406
        %v728 = vunpack.c.l.b16 %v407
        %v729 = vunpack.c.l.b16 %v408
        %v730 = vunpack.c.l.b16 %v409
        %v731 = vunpack.c.l.b16 %v410
        %v732 = vunpack.c.l.b16 %v411
        %v733 = vunpack.c.l.b16 %v412
        %v734 = vunpack.c.l.b16 %v413
        %v735 = vunpack.c.l.b16 %v414
        %v736 = vunpack.c.l.b16 %v415
        %v737 = vunpack.c.l.b16 %v416
        %v738 = vunpack.c.l.b16 %v417
        %v739 = vunpack.c.l.b16 %v418
        %v740 = vunpack.c.l.b16 %v419
        %v741 = vunpack.c.l.b16 %v420
        %v742 = vunpack.c.l.b16 %v421
        %v743 = vunpack.c.l.b16 %v422
        %v744 = vunpack.c.l.b16 %v423
        %v745 = vunpack.c.l.b16 %v424
        %v746 = vunpack.c.l.b16 %v425
        %v747 = vpack.c.b16 %v716, %v715
        %v748 = vpack.c.b16 %v718, %v717
        %v749 = vpack.c.b16 %v720, %v719
        %v750 = vpack.c.b16 %v722, %v721
        %v751 = vpack.c.b16 %v724, %v723
        %v752 = vpack.c.b16 %v726, %v725
        %v753 = vpack.c.b16 %v728, %v727
        %v754 = vpack.c.b16 %v730, %v729
        %v755 = vpack.c.b16 %v732, %v731
        %v756 = vpack.c.b16 %v734, %v733
        %v757 = vpack.c.b16 %v736, %v735
        %v758 = vpack.c.b16 %v738, %v737
        %v759 = vpack.c.b16 %v740, %v739
        %v760 = vpack.c.b16 %v742, %v741
        %v761 = vpack.c.b16 %v744, %v743
        %v762 = vpack.c.b16 %v746, %v745
        %779 = vmatprep.subr.bf16.mxu0 0
        %780 = vmatpush1.bf16.msra.mxu0 %v747
        %781 = vmatprep.subr.bf16.mxu0 0
        %782 = vmatpush1.bf16.msra.mxu0 %v748
        %783 = vmatprep.subr.bf16.mxu0 0
        %784 = vmatpush1.bf16.msra.mxu0 %v749
        %785 = vmatprep.subr.bf16.mxu0 0
        %786 = vmatpush1.bf16.msra.mxu0 %v750
        %787 = vmatprep.subr.bf16.mxu0 0
        %788 = vmatpush1.bf16.msra.mxu0 %v751
        %789 = vmatprep.subr.bf16.mxu0 0
        %790 = vmatpush1.bf16.msra.mxu0 %v752
        %791 = vmatprep.subr.bf16.mxu0 0
        %792 = vmatpush1.bf16.msra.mxu0 %v753
        %793 = vmatprep.subr.bf16.mxu0 0
        %794 = vmatpush1.bf16.msra.mxu0 %v754
        %795 = vmatprep.subr.bf16.mxu0 0
        %796 = vmatpush1.bf16.msra.mxu0 %v755
        %797 = vmatprep.subr.bf16.mxu0 0
        %798 = vmatpush1.bf16.msra.mxu0 %v756
        %799 = vmatprep.subr.bf16.mxu0 0
        %800 = vmatpush1.bf16.msra.mxu0 %v757
        %801 = vmatprep.subr.bf16.mxu0 0
        %802 = vmatpush1.bf16.msra.mxu0 %v758
        %803 = vmatprep.subr.bf16.mxu0 0
        %804 = vmatpush1.bf16.msra.mxu0 %v759
        %805 = vmatprep.subr.bf16.mxu0 0
        %806 = vmatpush1.bf16.msra.mxu0 %v760
        %807 = vmatprep.subr.bf16.mxu0 0
        %808 = vmatpush1.bf16.msra.mxu0 %v761
        %809 = vmatprep.subr.bf16.mxu0 0
        %810 = vmatpush1.bf16.msra.mxu0 %v762
        %811 = vmatprep.mubr.bf16.mxu0 %v584
        %812 = vmatmul.mubr.bf16.gmra.mrb[0].mxu0 %v583
        %v813 = vpop.f32.mrb[0].mxu0
        %v814 = vadd.f32 %v431, %v813
        %v815 = vpop.f32.mrb[0].mxu0
        %v816 = vpop.f32.mrb[0].mxu0
        %v817 = vadd.f32 %v431, %v816
        %v818 = vpop.f32.mrb[0].mxu0
        %819 = vmatprep.mubr.bf16.mxu0 %v586
        %820 = vmatmul.mubr.bf16.gmra.mrb[0].mxu0 %v585
        %v821 = vpop.f32.mrb[0].mxu0
        %v822 = vadd.f32 %v431, %v821
        %v823 = vpop.f32.mrb[0].mxu0
        %v824 = vpop.f32.mrb[0].mxu0
        %v825 = vadd.f32 %v431, %v824
        %v826 = vpop.f32.mrb[0].mxu0
        %827 = vmatprep.mubr.bf16.mxu0 %v588
        %828 = vmatmul.mubr.bf16.gmra.mrb[0].mxu0 %v587
        %v829 = vpop.f32.mrb[0].mxu0
        %v830 = vadd.f32 %v431, %v829
        %v831 = vpop.f32.mrb[0].mxu0
        %v832 = vpop.f32.mrb[0].mxu0
        %v833 = vadd.f32 %v431, %v832
        %v834 = vpop.f32.mrb[0].mxu0
        %835 = vmatprep.mubr.bf16.mxu0 %v590
        %836 = vmatmul.mubr.bf16.gmra.mrb[0].mxu0 %v589
        %v837 = vpop.f32.mrb[0].mxu0
        %v838 = vadd.f32 %v431, %v837
        %v839 = vpop.f32.mrb[0].mxu0
        %v840 = vpop.f32.mrb[0].mxu0
        %v841 = vadd.f32 %v431, %v840
        %v842 = vpop.f32.mrb[0].mxu0
        %843 = vmatprep.mubr.bf16.mxu0 %v592
        %844 = vmatmul.mubr.bf16.gmra.mrb[0].mxu0 %v591
        %v845 = vpop.f32.mrb[0].mxu0
        %v846 = vadd.f32 %v431, %v845
        %v847 = vpop.f32.mrb[0].mxu0
        %v848 = vpop.f32.mrb[0].mxu0
        %v849 = vadd.f32 %v431, %v848
        %v850 = vpop.f32.mrb[0].mxu0
        %851 = vmatprep.mubr.bf16.mxu0 %v594
        %852 = vmatmul.mubr.bf16.gmra.mrb[0].mxu0 %v593
        %v853 = vpop.f32.mrb[0].mxu0
        %v854 = vadd.f32 %v431, %v853
        %v855 = vpop.f32.mrb[0].mxu0
        %v856 = vpop.f32.mrb[0].mxu0
        %v857 = vadd.f32 %v431, %v856
        %v858 = vpop.f32.mrb[0].mxu0
        %859 = vmatprep.mubr.bf16.mxu0 %v596
        %860 = vmatmul.mubr.bf16.gmra.mrb[0].mxu0 %v595
        %v861 = vpop.f32.mrb[0].mxu0
        %v862 = vadd.f32 %v431, %v861
        %v863 = vpop.f32.mrb[0].mxu0
        %v864 = vpop.f32.mrb[0].mxu0
        %v865 = vadd.f32 %v431, %v864
        %v866 = vpop.f32.mrb[0].mxu0
        %867 = vmatprep.mubr.bf16.mxu0 %v598
        %868 = vmatmul.mubr.bf16.gmra.mrb[0].mxu0 %v597
        %v869 = vpop.f32.mrb[0].mxu0
        %v870 = vadd.f32 %v431, %v869
        %v871 = vpop.f32.mrb[0].mxu0
        %v872 = vpop.f32.mrb[0].mxu0
        %v873 = vadd.f32 %v431, %v872
        %v874 = vpop.f32.mrb[0].mxu0
        %875 = vmatprep.mubr.bf16.mxu0 %v600
        %876 = vmatmul.mubr.bf16.gmra.mrb[0].mxu0 %v599
        %v877 = vpop.f32.mrb[0].mxu0
        %v878 = vadd.f32 %v431, %v877
        %v879 = vpop.f32.mrb[0].mxu0
        %v880 = vpop.f32.mrb[0].mxu0
        %v881 = vadd.f32 %v431, %v880
        %v882 = vpop.f32.mrb[0].mxu0
        %883 = vmatprep.mubr.bf16.mxu0 %v602
        %884 = vmatmul.mubr.bf16.gmra.mrb[0].mxu0 %v601
        %v885 = vpop.f32.mrb[0].mxu0
        %v886 = vadd.f32 %v431, %v885
        %v887 = vpop.f32.mrb[0].mxu0
        %v888 = vpop.f32.mrb[0].mxu0
        %v889 = vadd.f32 %v431, %v888
        %v890 = vpop.f32.mrb[0].mxu0
        %891 = vmatprep.mubr.bf16.mxu0 %v604
        %892 = vmatmul.mubr.bf16.gmra.mrb[0].mxu0 %v603
        %v893 = vpop.f32.mrb[0].mxu0
        %v894 = vadd.f32 %v431, %v893
        %v895 = vpop.f32.mrb[0].mxu0
        %v896 = vpop.f32.mrb[0].mxu0
        %v897 = vadd.f32 %v431, %v896
        %v898 = vpop.f32.mrb[0].mxu0
        %899 = vmatprep.mubr.bf16.mxu0 %v606
        %900 = vmatmul.mubr.bf16.gmra.mrb[0].mxu0 %v605
        %v901 = vpop.f32.mrb[0].mxu0
        %v902 = vadd.f32 %v431, %v901
        %v903 = vpop.f32.mrb[0].mxu0
        %v904 = vpop.f32.mrb[0].mxu0
        %v905 = vadd.f32 %v431, %v904
        %v906 = vpop.f32.mrb[0].mxu0
        %907 = vmatprep.mubr.bf16.mxu0 %v608
        %908 = vmatmul.mubr.bf16.gmra.mrb[0].mxu0 %v607
        %v909 = vpop.f32.mrb[0].mxu0
        %v910 = vadd.f32 %v431, %v909
        %v911 = vpop.f32.mrb[0].mxu0
        %v912 = vpop.f32.mrb[0].mxu0
        %v913 = vadd.f32 %v431, %v912
        %v914 = vpop.f32.mrb[0].mxu0
        %915 = vmatprep.mubr.bf16.mxu0 %v610
        %916 = vmatmul.mubr.bf16.gmra.mrb[0].mxu0 %v609
        %v917 = vpop.f32.mrb[0].mxu0
        %v918 = vadd.f32 %v431, %v917
        %v919 = vpop.f32.mrb[0].mxu0
        %v920 = vpop.f32.mrb[0].mxu0
        %v921 = vadd.f32 %v431, %v920
        %v922 = vpop.f32.mrb[0].mxu0
        %923 = vmatprep.mubr.bf16.mxu0 %v612
        %924 = vmatmul.mubr.bf16.gmra.mrb[0].mxu0 %v611
        %v925 = vpop.f32.mrb[0].mxu0
        %v926 = vadd.f32 %v431, %v925
        %v927 = vpop.f32.mrb[0].mxu0
        %v928 = vpop.f32.mrb[0].mxu0
        %v929 = vadd.f32 %v431, %v928
        %v930 = vpop.f32.mrb[0].mxu0
        %931 = vmatprep.mubr.bf16.mxu0 %v614
        %932 = vmatmul.mubr.bf16.gmra.mrb[0].mxu0 %v613
        %v933 = vpop.f32.mrb[0].mxu0
        %v934 = vadd.f32 %v431, %v933
        %v935 = vpop.f32.mrb[0].mxu0
        %v936 = vpop.f32.mrb[0].mxu0
        %v937 = vadd.f32 %v431, %v936
        %v938 = vpop.f32.mrb[0].mxu0
        %939 = vmatprep.mubr.bf16.mxu0 %v616
        %940 = vmatmul.mubr.bf16.gmra.mrb[0].mxu0 %v615
        %v941 = vpop.f32.mrb[0].mxu0
        %v942 = vadd.f32 %v431, %v941
        %v943 = vpop.f32.mrb[0].mxu0
        %v944 = vpop.f32.mrb[0].mxu0
        %v945 = vadd.f32 %v431, %v944
        %v946 = vpop.f32.mrb[0].mxu0
        %947 = vmatprep.mubr.bf16.mxu0 %v618
        %948 = vmatmul.mubr.bf16.gmra.mrb[0].mxu0 %v617
        %v949 = vpop.f32.mrb[0].mxu0
        %v950 = vadd.f32 %v431, %v949
        %v951 = vpop.f32.mrb[0].mxu0
        %v952 = vpop.f32.mrb[0].mxu0
        %v953 = vadd.f32 %v431, %v952
        %v954 = vpop.f32.mrb[0].mxu0
        %955 = vmatprep.mubr.bf16.mxu0 %v620
        %956 = vmatmul.mubr.bf16.gmra.mrb[0].mxu0 %v619
        %v957 = vpop.f32.mrb[0].mxu0
        %v958 = vadd.f32 %v431, %v957
        %v959 = vpop.f32.mrb[0].mxu0
        %v960 = vpop.f32.mrb[0].mxu0
        %v961 = vadd.f32 %v431, %v960
        %v962 = vpop.f32.mrb[0].mxu0
        %963 = vmatprep.mubr.bf16.mxu0 %v622
        %964 = vmatmul.mubr.bf16.gmra.mrb[0].mxu0 %v621
        %v965 = vpop.f32.mrb[0].mxu0
        %v966 = vadd.f32 %v431, %v965
        %v967 = vpop.f32.mrb[0].mxu0
        %v968 = vpop.f32.mrb[0].mxu0
        %v969 = vadd.f32 %v431, %v968
        %v970 = vpop.f32.mrb[0].mxu0
        %971 = vmatprep.mubr.bf16.mxu0 %v624
        %972 = vmatmul.mubr.bf16.gmra.mrb[0].mxu0 %v623
        %v973 = vpop.f32.mrb[0].mxu0
        %v974 = vadd.f32 %v431, %v973
        %v975 = vpop.f32.mrb[0].mxu0
        %v976 = vpop.f32.mrb[0].mxu0
        %v977 = vadd.f32 %v431, %v976
        %v978 = vpop.f32.mrb[0].mxu0
        %979 = vmatprep.mubr.bf16.mxu0 %v626
        %980 = vmatmul.mubr.bf16.gmra.mrb[0].mxu0 %v625
        %v981 = vpop.f32.mrb[0].mxu0
        %v982 = vadd.f32 %v431, %v981
        %v983 = vpop.f32.mrb[0].mxu0
        %v984 = vpop.f32.mrb[0].mxu0
        %v985 = vadd.f32 %v431, %v984
        %v986 = vpop.f32.mrb[0].mxu0
        %987 = vmatprep.mubr.bf16.mxu0 %v628
        %988 = vmatmul.mubr.bf16.gmra.mrb[0].mxu0 %v627
        %v989 = vpop.f32.mrb[0].mxu0
        %v990 = vadd.f32 %v431, %v989
        %v991 = vpop.f32.mrb[0].mxu0
        %v992 = vpop.f32.mrb[0].mxu0
        %v993 = vadd.f32 %v431, %v992
        %v994 = vpop.f32.mrb[0].mxu0
        %995 = vmatprep.mubr.bf16.mxu0 %v630
        %996 = vmatmul.mubr.bf16.gmra.mrb[0].mxu0 %v629
        %v997 = vpop.f32.mrb[0].mxu0
        %v998 = vadd.f32 %v431, %v997
        %v999 = vpop.f32.mrb[0].mxu0
        %v1000 = vpop.f32.mrb[0].mxu0
        %v1001 = vadd.f32 %v431, %v1000
        %v1002 = vpop.f32.mrb[0].mxu0
        %1003 = vmatprep.mubr.bf16.mxu0 %v632
        %1004 = vmatmul.mubr.bf16.gmra.mrb[0].mxu0 %v631
        %v1005 = vpop.f32.mrb[0].mxu0
        %v1006 = vadd.f32 %v431, %v1005
        %v1007 = vpop.f32.mrb[0].mxu0
        %v1008 = vpop.f32.mrb[0].mxu0
        %v1009 = vadd.f32 %v431, %v1008
        %v1010 = vpop.f32.mrb[0].mxu0
        %1011 = vdwg.mxu0
        %v1012 = vmax.f32 %v814, 0.0
        %v1013 = vmax.f32 %v817, 0.0
        %v1014 = vmax.f32 %v822, 0.0
        %v1015 = vmax.f32 %v825, 0.0
        %v1016 = vmax.f32 %v830, 0.0
        %v1017 = vmax.f32 %v833, 0.0
        %v1018 = vmax.f32 %v838, 0.0
        %v1019 = vmax.f32 %v841, 0.0
        %v1020 = vmax.f32 %v846, 0.0
        %v1021 = vmax.f32 %v849, 0.0
        %v1022 = vmax.f32 %v854, 0.0
        %v1023 = vmax.f32 %v857, 0.0
        %v1024 = vmax.f32 %v862, 0.0
        %v1025 = vmax.f32 %v865, 0.0
        %v1026 = vmax.f32 %v870, 0.0
        %v1027 = vmax.f32 %v873, 0.0
        %v1028 = vmax.f32 %v878, 0.0
        %v1029 = vmax.f32 %v881, 0.0
        %v1030 = vmax.f32 %v886, 0.0
        %v1031 = vmax.f32 %v889, 0.0
        %v1032 = vmax.f32 %v894, 0.0
        %v1033 = vmax.f32 %v897, 0.0
        %v1034 = vmax.f32 %v902, 0.0
        %v1035 = vmax.f32 %v905, 0.0
        %v1036 = vmax.f32 %v910, 0.0
        %v1037 = vmax.f32 %v913, 0.0
        %v1038 = vmax.f32 %v918, 0.0
        %v1039 = vmax.f32 %v921, 0.0
        %v1040 = vmax.f32 %v926, 0.0
        %v1041 = vmax.f32 %v929, 0.0
        %v1042 = vmax.f32 %v934, 0.0
        %v1043 = vmax.f32 %v937, 0.0
        %v1044 = vmax.f32 %v942, 0.0
        %v1045 = vmax.f32 %v945, 0.0
        %v1046 = vmax.f32 %v950, 0.0
        %v1047 = vmax.f32 %v953, 0.0
        %v1048 = vmax.f32 %v958, 0.0
        %v1049 = vmax.f32 %v961, 0.0
        %v1050 = vmax.f32 %v966, 0.0
        %v1051 = vmax.f32 %v969, 0.0
        %v1052 = vmax.f32 %v974, 0.0
        %v1053 = vmax.f32 %v977, 0.0
        %v1054 = vmax.f32 %v982, 0.0
        %v1055 = vmax.f32 %v985, 0.0
        %v1056 = vmax.f32 %v990, 0.0
        %v1057 = vmax.f32 %v993, 0.0
        %v1058 = vmax.f32 %v998, 0.0
        %v1059 = vmax.f32 %v1001, 0.0
        %v1060 = vmax.f32 %v1006, 0.0
        %v1061 = vmax.f32 %v1009, 0.0
        %v1062 = vpack.c.bf16 %v1013, %v1012
        %v1063 = vpack.c.bf16 %v1015, %v1014
        %v1064 = vpack.c.bf16 %v1017, %v1016
        %v1065 = vpack.c.bf16 %v1019, %v1018
        %v1066 = vpack.c.bf16 %v1021, %v1020
        %v1067 = vpack.c.bf16 %v1023, %v1022
        %v1068 = vpack.c.bf16 %v1025, %v1024
        %v1069 = vpack.c.bf16 %v1027, %v1026
        %v1070 = vpack.c.bf16 %v1029, %v1028
        %v1071 = vpack.c.bf16 %v1031, %v1030
        %v1072 = vpack.c.bf16 %v1033, %v1032
        %v1073 = vpack.c.bf16 %v1035, %v1034
        %v1074 = vpack.c.bf16 %v1037, %v1036
        %v1075 = vpack.c.bf16 %v1039, %v1038
        %v1076 = vpack.c.bf16 %v1041, %v1040
        %v1077 = vpack.c.bf16 %v1043, %v1042
        %v1078 = vpack.c.bf16 %v1045, %v1044
        %v1079 = vpack.c.bf16 %v1047, %v1046
        %v1080 = vpack.c.bf16 %v1049, %v1048
        %v1081 = vpack.c.bf16 %v1051, %v1050
        %v1082 = vpack.c.bf16 %v1053, %v1052
        %v1083 = vpack.c.bf16 %v1055, %v1054
        %v1084 = vpack.c.bf16 %v1057, %v1056
        %v1085 = vpack.c.bf16 %v1059, %v1058
        %v1086 = vpack.c.bf16 %v1061, %v1060
        %v1087 = vld [vmem:[#allocation6] sm:$0xf]
        %v1088 = vld [vmem:[#allocation6 + $0x4] sm:$0xf]
        %v1089 = vld [vmem:[#allocation6 + $0x8] sm:$0xf]
        %v1090 = vld [vmem:[#allocation6 + $0xc] sm:$0xf]
        %v1091 = vld [vmem:[#allocation6 + $0x10] sm:$0xf]
        %v1092 = vld [vmem:[#allocation6 + $0x14] sm:$0xf]
        %v1093 = vld [vmem:[#allocation6 + $0x18] sm:$0xf]
        %v1094 = vld [vmem:[#allocation6 + $0x1c] sm:$0xf]
        %v1095 = vld [vmem:[#allocation6 + $0x20] sm:$0xf]
        %v1096 = vld [vmem:[#allocation6 + $0x24] sm:$0xf]
        %v1097 = vld [vmem:[#allocation6 + $0x28] sm:$0xf]
        %v1098 = vld [vmem:[#allocation6 + $0x2c] sm:$0xf]
        %v1099 = vld [vmem:[#allocation6 + $0x30] sm:$0xf]
        %v1100 = vld [vmem:[#allocation6 + $0x34] sm:$0xf]
        %v1101 = vld [vmem:[#allocation6 + $0x38] sm:$0xf]
        %v1102 = vld [vmem:[#allocation6 + $0x3c] sm:$0xf]
        %s1103 = scalar_lea.vmem [#allocation6], 64
        %v1104 = vld [vmem:[%s1103] sm:$0xf]
        %v1105 = vld [vmem:[%s1103 + $0x4] sm:$0xf]
        %v1106 = vld [vmem:[%s1103 + $0x8] sm:$0xf]
        %v1107 = vld [vmem:[%s1103 + $0xc] sm:$0xf]
        %v1108 = vld [vmem:[%s1103 + $0x10] sm:$0xf]
        %v1109 = vld [vmem:[%s1103 + $0x14] sm:$0xf]
        %v1110 = vld [vmem:[%s1103 + $0x18] sm:$0xf]
        %v1111 = vld [vmem:[%s1103 + $0x1c] sm:$0xf]
        %v1112 = vld [vmem:[%s1103 + $0x20] sm:$0xf]
        %v1113 = vld [vmem:[%s1103 + $0x24] sm:$0xf]
        %v1114 = vld [vmem:[%s1103 + $0x28] sm:$0xf]
        %v1115 = vld [vmem:[%s1103 + $0x2c] sm:$0xf]
        %v1116 = vld [vmem:[%s1103 + $0x30] sm:$0xf]
        %v1117 = vld [vmem:[%s1103 + $0x34] sm:$0xf]
        %v1118 = vld [vmem:[%s1103 + $0x38] sm:$0xf]
        %v1119 = vld [vmem:[%s1103 + $0x3c] sm:$0xf]
        %vm1127 = vcmask 1045504
        %v1128 = vrot.slane %v1068, 2
        %v1129 = vrot.slane %v1069, 2
        %v1130 = vsel %vm1127, %v1128, %v1129
        %v1131 = vrot.slane %v1070, 2
        %v1132 = vsel %vm1127, %v1129, %v1131
        %v1133 = vrot.slane %v1071, 2
        %v1134 = vsel %vm1127, %v1131, %v1133
        %v1135 = vrot.slane %v1072, 2
        %v1136 = vsel %vm1127, %v1133, %v1135
        %v1137 = vrot.slane %v1073, 2
        %v1138 = vsel %vm1127, %v1135, %v1137
        %v1139 = vrot.slane %v1074, 2
        %v1140 = vsel %vm1127, %v1137, %v1139
        %v1163 = vunpack.c.l.b16 %v1104
        %v1164 = vunpack.c.l.b16 %v1105
        %v1165 = vunpack.c.l.b16 %v1106
        %v1166 = vunpack.c.l.b16 %v1107
        %v1167 = vunpack.c.l.b16 %v1108
        %v1168 = vunpack.c.l.b16 %v1109
        %v1169 = vunpack.c.l.b16 %v1110
        %v1170 = vunpack.c.l.b16 %v1111
        %v1171 = vunpack.c.l.b16 %v1112
        %v1172 = vunpack.c.l.b16 %v1113
        %v1173 = vunpack.c.l.b16 %v1114
        %v1174 = vunpack.c.l.b16 %v1115
        %v1175 = vunpack.c.l.b16 %v1116
        %v1176 = vunpack.c.l.b16 %v1117
        %v1177 = vunpack.c.l.b16 %v1118
        %v1178 = vunpack.c.l.b16 %v1119
        %v1179 = vpack.c.b16 %v1164, %v1163
        %v1180 = vpack.c.b16 %v1166, %v1165
        %v1181 = vpack.c.b16 %v1168, %v1167
        %v1182 = vpack.c.b16 %v1170, %v1169
        %v1183 = vpack.c.b16 %v1172, %v1171
        %v1184 = vpack.c.b16 %v1174, %v1173
        %v1185 = vpack.c.b16 %v1176, %v1175
        %v1186 = vpack.c.b16 %v1178, %v1177
        %1195 = vmatprep.subr.bf16.mxu0 0
        %1196 = vmatpush1.bf16.msra.mxu0 %v1179
        %1197 = vmatprep.subr.bf16.mxu0 0
        %1198 = vmatpush1.bf16.msra.mxu0 %v1180
        %1199 = vmatprep.subr.bf16.mxu0 0
        %1200 = vmatpush1.bf16.msra.mxu0 %v1181
        %1201 = vmatprep.subr.bf16.mxu0 0
        %1202 = vmatpush1.bf16.msra.mxu0 %v1182
        %1203 = vmatprep.subr.bf16.mxu0 0
        %1204 = vmatpush1.bf16.msra.mxu0 %v1183
        %1205 = vmatprep.subr.bf16.mxu0 0
        %1206 = vmatpush1.bf16.msra.mxu0 %v1184
        %1207 = vmatprep.subr.bf16.mxu0 0
        %1208 = vmatpush1.bf16.msra.mxu0 %v1185
        %1209 = vmatprep.subr.bf16.mxu0 0
        %1210 = vmatpush1.bf16.msra.mxu0 %v1186
        %1211 = vmatprep.subr.bf16.mxu0 0
        %1212 = vmatpush1.bf16.msra.mxu0 0
        %1213 = vmatprep.subr.bf16.mxu0 0
        %1214 = vmatpush1.bf16.msra.mxu0 0
        %1215 = vmatprep.subr.bf16.mxu0 0
        %1216 = vmatpush1.bf16.msra.mxu0 0
        %1217 = vmatprep.subr.bf16.mxu0 0
        %1218 = vmatpush1.bf16.msra.mxu0 0
        %1219 = vmatprep.subr.bf16.mxu0 0
        %1220 = vmatpush1.bf16.msra.mxu0 0
        %1221 = vmatprep.subr.bf16.mxu0 0
        %1222 = vmatpush1.bf16.msra.mxu0 0
        %1223 = vmatprep.subr.bf16.mxu0 0
        %1224 = vmatpush1.bf16.msra.mxu0 0
        %1225 = vmatprep.subr.bf16.mxu0 0
        %1226 = vmatpush1.bf16.msra.mxu0 0
        %1227 = vmatprep.mubr.bf16.mxu0 0
        %1228 = vmatmul.mubr.bf16.gmra.mrb[0].mxu0 %v1130
        %v1229 = vpop.f32.mrb[0].mxu0
        %v1230 = vadd.f32 0.0, %v1229
        %v1231 = vpop.f32.mrb[0].mxu0
        %v1232 = vpop.f32.mrb[0].mxu0
        %v1233 = vadd.f32 0.0, %v1232
        %v1234 = vpop.f32.mrb[0].mxu0
        %1235 = vmatprep.mubr.bf16.mxu0 0
        %1236 = vmatmul.mubr.bf16.gmra.mrb[0].mxu0 %v1132
        %v1237 = vpop.f32.mrb[0].mxu0
        %v1238 = vadd.f32 0.0, %v1237
        %v1239 = vpop.f32.mrb[0].mxu0
        %v1240 = vpop.f32.mrb[0].mxu0
        %v1241 = vadd.f32 0.0, %v1240
        %v1242 = vpop.f32.mrb[0].mxu0
        %1243 = vmatprep.mubr.bf16.mxu0 0
        %1244 = vmatmul.mubr.bf16.gmra.mrb[0].mxu0 %v1134
        %v1245 = vpop.f32.mrb[0].mxu0
        %v1246 = vadd.f32 0.0, %v1245
        %v1247 = vpop.f32.mrb[0].mxu0
        %v1248 = vpop.f32.mrb[0].mxu0
        %v1249 = vadd.f32 0.0, %v1248
        %v1250 = vpop.f32.mrb[0].mxu0
        %1251 = vmatprep.mubr.bf16.mxu0 0
        %1252 = vmatmul.mubr.bf16.gmra.mrb[0].mxu0 %v1136
        %v1253 = vpop.f32.mrb[0].mxu0
        %v1254 = vadd.f32 0.0, %v1253
        %v1255 = vpop.f32.mrb[0].mxu0
        %v1256 = vpop.f32.mrb[0].mxu0
        %v1257 = vadd.f32 0.0, %v1256
        %v1258 = vpop.f32.mrb[0].mxu0
        %1259 = vmatprep.mubr.bf16.mxu0 0
        %1260 = vmatmul.mubr.bf16.gmra.mrb[0].mxu0 %v1138
        %v1261 = vpop.f32.mrb[0].mxu0
        %v1262 = vadd.f32 0.0, %v1261
        %v1263 = vpop.f32.mrb[0].mxu0
        %v1264 = vpop.f32.mrb[0].mxu0
        %v1265 = vadd.f32 0.0, %v1264
        %v1266 = vpop.f32.mrb[0].mxu0
        %1267 = vmatprep.mubr.bf16.mxu0 0
        %1268 = vmatmul.mubr.bf16.gmra.mrb[0].mxu0 %v1140
        %v1269 = vpop.f32.mrb[0].mxu0
        %v1270 = vadd.f32 0.0, %v1269
        %v1271 = vpop.f32.mrb[0].mxu0
        %v1272 = vpop.f32.mrb[0].mxu0
        %v1273 = vadd.f32 0.0, %v1272
        %v1274 = vpop.f32.mrb[0].mxu0
        %1275 = vdwg.mxu0
        %v1292 = vunpack.c.l.b16 %v1087
        %v1293 = vunpack.c.l.b16 %v1088
        %v1294 = vunpack.c.l.b16 %v1089
        %v1295 = vunpack.c.l.b16 %v1090
        %v1296 = vunpack.c.l.b16 %v1091
        %v1297 = vunpack.c.l.b16 %v1092
        %v1298 = vunpack.c.l.b16 %v1093
        %v1299 = vunpack.c.l.b16 %v1094
        %v1300 = vunpack.c.l.b16 %v1095
        %v1301 = vunpack.c.l.b16 %v1096
        %v1302 = vunpack.c.l.b16 %v1097
        %v1303 = vunpack.c.l.b16 %v1098
        %v1304 = vunpack.c.l.b16 %v1099
        %v1305 = vunpack.c.l.b16 %v1100
        %v1306 = vunpack.c.l.b16 %v1101
        %v1307 = vunpack.c.l.b16 %v1102
        %v1308 = vpack.c.b16 %v1293, %v1292
        %v1309 = vpack.c.b16 %v1295, %v1294
        %v1310 = vpack.c.b16 %v1297, %v1296
        %v1311 = vpack.c.b16 %v1299, %v1298
        %v1312 = vpack.c.b16 %v1301, %v1300
        %v1313 = vpack.c.b16 %v1303, %v1302
        %v1314 = vpack.c.b16 %v1305, %v1304
        %v1315 = vpack.c.b16 %v1307, %v1306
        %1324 = vmatprep.subr.bf16.mxu0 0
        %1325 = vmatpush1.bf16.msra.mxu0 %v1308
        %1326 = vmatprep.subr.bf16.mxu0 0
        %1327 = vmatpush1.bf16.msra.mxu0 %v1309
        %1328 = vmatprep.subr.bf16.mxu0 0
        %1329 = vmatpush1.bf16.msra.mxu0 %v1310
        %1330 = vmatprep.subr.bf16.mxu0 0
        %1331 = vmatpush1.bf16.msra.mxu0 %v1311
        %1332 = vmatprep.subr.bf16.mxu0 0
        %1333 = vmatpush1.bf16.msra.mxu0 %v1312
        %1334 = vmatprep.subr.bf16.mxu0 0
        %1335 = vmatpush1.bf16.msra.mxu0 %v1313
        %1336 = vmatprep.subr.bf16.mxu0 0
        %1337 = vmatpush1.bf16.msra.mxu0 %v1314
        %1338 = vmatprep.subr.bf16.mxu0 0
        %1339 = vmatpush1.bf16.msra.mxu0 %v1315
        %1340 = vmatprep.subr.bf16.mxu0 0
        %1341 = vmatpush1.bf16.msra.mxu0 0
        %1342 = vmatprep.subr.bf16.mxu0 0
        %1343 = vmatpush1.bf16.msra.mxu0 0
        %1344 = vmatprep.subr.bf16.mxu0 0
        %1345 = vmatpush1.bf16.msra.mxu0 0
        %1346 = vmatprep.subr.bf16.mxu0 0
        %1347 = vmatpush1.bf16.msra.mxu0 0
        %1348 = vmatprep.subr.bf16.mxu0 0
        %1349 = vmatpush1.bf16.msra.mxu0 0
        %1350 = vmatprep.subr.bf16.mxu0 0
        %1351 = vmatpush1.bf16.msra.mxu0 0
        %1352 = vmatprep.subr.bf16.mxu0 0
        %1353 = vmatpush1.bf16.msra.mxu0 0
        %1354 = vmatprep.subr.bf16.mxu0 0
        %1355 = vmatpush1.bf16.msra.mxu0 0
        %1356 = vmatprep.mubr.bf16.mxu0 0
        %1357 = vmatmul.mubr.bf16.gmra.mrb[0].mxu0 %v1062
        %v1358 = vpop.f32.mrb[0].mxu0
        %v1359 = vadd.f32 %v1230, %v1358
        %v1360 = vpop.f32.mrb[0].mxu0
        %v1361 = vpop.f32.mrb[0].mxu0
        %v1362 = vadd.f32 %v1233, %v1361
        %v1363 = vpop.f32.mrb[0].mxu0
        %1364 = vmatprep.mubr.bf16.mxu0 0
        %1365 = vmatmul.mubr.bf16.gmra.mrb[0].mxu0 %v1063
        %v1366 = vpop.f32.mrb[0].mxu0
        %v1367 = vadd.f32 %v1238, %v1366
        %v1368 = vpop.f32.mrb[0].mxu0
        %v1369 = vpop.f32.mrb[0].mxu0
        %v1370 = vadd.f32 %v1241, %v1369
        %v1371 = vpop.f32.mrb[0].mxu0
        %1372 = vmatprep.mubr.bf16.mxu0 0
        %1373 = vmatmul.mubr.bf16.gmra.mrb[0].mxu0 %v1064
        %v1374 = vpop.f32.mrb[0].mxu0
        %v1375 = vadd.f32 %v1246, %v1374
        %v1376 = vpop.f32.mrb[0].mxu0
        %v1377 = vpop.f32.mrb[0].mxu0
        %v1378 = vadd.f32 %v1249, %v1377
        %v1379 = vpop.f32.mrb[0].mxu0
        %1380 = vmatprep.mubr.bf16.mxu0 0
        %1381 = vmatmul.mubr.bf16.gmra.mrb[0].mxu0 %v1065
        %v1382 = vpop.f32.mrb[0].mxu0
        %v1383 = vadd.f32 %v1254, %v1382
        %v1384 = vpop.f32.mrb[0].mxu0
        %v1385 = vpop.f32.mrb[0].mxu0
        %v1386 = vadd.f32 %v1257, %v1385
        %v1387 = vpop.f32.mrb[0].mxu0
        %1388 = vmatprep.mubr.bf16.mxu0 0
        %1389 = vmatmul.mubr.bf16.gmra.mrb[0].mxu0 %v1066
        %v1390 = vpop.f32.mrb[0].mxu0
        %v1391 = vadd.f32 %v1262, %v1390
        %v1392 = vpop.f32.mrb[0].mxu0
        %v1393 = vpop.f32.mrb[0].mxu0
        %v1394 = vadd.f32 %v1265, %v1393
        %v1395 = vpop.f32.mrb[0].mxu0
        %1396 = vmatprep.mubr.bf16.mxu0 0
        %1397 = vmatmul.mubr.bf16.gmra.mrb[0].mxu0 %v1067
        %v1398 = vpop.f32.mrb[0].mxu0
        %v1399 = vadd.f32 %v1270, %v1398
        %v1400 = vpop.f32.mrb[0].mxu0
        %v1401 = vpop.f32.mrb[0].mxu0
        %v1402 = vadd.f32 %v1273, %v1401
        %v1403 = vpop.f32.mrb[0].mxu0
        %1404 = vdwg.mxu0
        %s1405 = scalar_lea.vmem [#allocation6], 128
        %v1406 = vld [vmem:[%s1405] sm:$0xf]
        %v1407 = vld [vmem:[%s1405 + $0x4] sm:$0xf]
        %v1408 = vld [vmem:[%s1405 + $0x8] sm:$0xf]
        %v1409 = vld [vmem:[%s1405 + $0xc] sm:$0xf]
        %v1410 = vld [vmem:[%s1405 + $0x10] sm:$0xf]
        %v1411 = vld [vmem:[%s1405 + $0x14] sm:$0xf]
        %v1412 = vld [vmem:[%s1405 + $0x18] sm:$0xf]
        %v1413 = vld [vmem:[%s1405 + $0x1c] sm:$0xf]
        %v1414 = vld [vmem:[%s1405 + $0x20] sm:$0xf]
        %v1415 = vld [vmem:[%s1405 + $0x24] sm:$0xf]
        %v1416 = vld [vmem:[%s1405 + $0x28] sm:$0xf]
        %v1417 = vld [vmem:[%s1405 + $0x2c] sm:$0xf]
        %v1418 = vld [vmem:[%s1405 + $0x30] sm:$0xf]
        %v1419 = vld [vmem:[%s1405 + $0x34] sm:$0xf]
        %v1420 = vld [vmem:[%s1405 + $0x38] sm:$0xf]
        %v1421 = vld [vmem:[%s1405 + $0x3c] sm:$0xf]
        %vm1422 = vsmask.f32 7424
        %v1424 = vshrl.u32 %v1062, 16
        %v1426 = vshll.u32 %v1062, 16
        %v1428 = vrot.slane %v1426, 1
        %v1429 = vor.u32 %v1424, %v1428
        %v1431 = vshll.u32 %v1063, 16
        %v1433 = vrot.slane %v1431, 1
        %v1434 = vsel %vm1422, %v1429, %v1433
        %v1435 = vshrl.u32 %v1063, 16
        %v1437 = vor.u32 %v1435, %v1433
        %v1439 = vshll.u32 %v1064, 16
        %v1441 = vrot.slane %v1439, 1
        %v1442 = vsel %vm1422, %v1437, %v1441
        %v1443 = vshrl.u32 %v1064, 16
        %v1445 = vor.u32 %v1443, %v1441
        %v1447 = vshll.u32 %v1065, 16
        %v1449 = vrot.slane %v1447, 1
        %v1450 = vsel %vm1422, %v1445, %v1449
        %v1451 = vshrl.u32 %v1065, 16
        %v1453 = vor.u32 %v1451, %v1449
        %v1455 = vshll.u32 %v1066, 16
        %v1457 = vrot.slane %v1455, 1
        %v1458 = vsel %vm1422, %v1453, %v1457
        %v1459 = vshrl.u32 %v1066, 16
        %v1461 = vor.u32 %v1459, %v1457
        %v1463 = vshll.u32 %v1067, 16
        %v1465 = vrot.slane %v1463, 1
        %v1466 = vsel %vm1422, %v1461, %v1465
        %v1467 = vshrl.u32 %v1067, 16
        %v1469 = vor.u32 %v1467, %v1465
        %v1471 = vshll.u32 %v1068, 16
        %v1473 = vrot.slane %v1471, 1
        %v1474 = vsel %vm1422, %v1469, %v1473
        %v1497 = vunpack.c.l.b16 %v1406
        %v1498 = vunpack.c.l.b16 %v1407
        %v1499 = vunpack.c.l.b16 %v1408
        %v1500 = vunpack.c.l.b16 %v1409
        %v1501 = vunpack.c.l.b16 %v1410
        %v1502 = vunpack.c.l.b16 %v1411
        %v1503 = vunpack.c.l.b16 %v1412
        %v1504 = vunpack.c.l.b16 %v1413
        %v1505 = vunpack.c.l.b16 %v1414
        %v1506 = vunpack.c.l.b16 %v1415
        %v1507 = vunpack.c.l.b16 %v1416
        %v1508 = vunpack.c.l.b16 %v1417
        %v1509 = vunpack.c.l.b16 %v1418
        %v1510 = vunpack.c.l.b16 %v1419
        %v1511 = vunpack.c.l.b16 %v1420
        %v1512 = vunpack.c.l.b16 %v1421
        %v1513 = vpack.c.b16 %v1498, %v1497
        %v1514 = vpack.c.b16 %v1500, %v1499
        %v1515 = vpack.c.b16 %v1502, %v1501
        %v1516 = vpack.c.b16 %v1504, %v1503
        %v1517 = vpack.c.b16 %v1506, %v1505
        %v1518 = vpack.c.b16 %v1508, %v1507
        %v1519 = vpack.c.b16 %v1510, %v1509
        %v1520 = vpack.c.b16 %v1512, %v1511
        %1529 = vmatprep.subr.bf16.mxu0 0
        %1530 = vmatpush1.bf16.msra.mxu0 %v1513
        %1531 = vmatprep.subr.bf16.mxu0 0
        %1532 = vmatpush1.bf16.msra.mxu0 %v1514
        %1533 = vmatprep.subr.bf16.mxu0 0
        %1534 = vmatpush1.bf16.msra.mxu0 %v1515
        %1535 = vmatprep.subr.bf16.mxu0 0
        %1536 = vmatpush1.bf16.msra.mxu0 %v1516
        %1537 = vmatprep.subr.bf16.mxu0 0
        %1538 = vmatpush1.bf16.msra.mxu0 %v1517
        %1539 = vmatprep.subr.bf16.mxu0 0
        %1540 = vmatpush1.bf16.msra.mxu0 %v1518
        %1541 = vmatprep.subr.bf16.mxu0 0
        %1542 = vmatpush1.bf16.msra.mxu0 %v1519
        %1543 = vmatprep.subr.bf16.mxu0 0
        %1544 = vmatpush1.bf16.msra.mxu0 %v1520
        %1545 = vmatprep.subr.bf16.mxu0 0
        %1546 = vmatpush1.bf16.msra.mxu0 0
        %1547 = vmatprep.subr.bf16.mxu0 0
        %1548 = vmatpush1.bf16.msra.mxu0 0
        %1549 = vmatprep.subr.bf16.mxu0 0
        %1550 = vmatpush1.bf16.msra.mxu0 0
        %1551 = vmatprep.subr.bf16.mxu0 0
        %1552 = vmatpush1.bf16.msra.mxu0 0
        %1553 = vmatprep.subr.bf16.mxu0 0
        %1554 = vmatpush1.bf16.msra.mxu0 0
        %1555 = vmatprep.subr.bf16.mxu0 0
        %1556 = vmatpush1.bf16.msra.mxu0 0
        %1557 = vmatprep.subr.bf16.mxu0 0
        %1558 = vmatpush1.bf16.msra.mxu0 0
        %1559 = vmatprep.subr.bf16.mxu0 0
        %1560 = vmatpush1.bf16.msra.mxu0 0
        %1561 = vmatprep.mubr.bf16.mxu0 0
        %1562 = vmatmul.mubr.bf16.gmra.mrb[0].mxu0 %v1434
        %v1563 = vpop.f32.mrb[0].mxu0
        %v1564 = vadd.f32 0.0, %v1563
        %v1565 = vpop.f32.mrb[0].mxu0
        %v1566 = vpop.f32.mrb[0].mxu0
        %v1567 = vadd.f32 0.0, %v1566
        %v1568 = vpop.f32.mrb[0].mxu0
        %1569 = vmatprep.mubr.bf16.mxu0 0
        %1570 = vmatmul.mubr.bf16.gmra.mrb[0].mxu0 %v1442
        %v1571 = vpop.f32.mrb[0].mxu0
        %v1572 = vadd.f32 0.0, %v1571
        %v1573 = vpop.f32.mrb[0].mxu0
        %v1574 = vpop.f32.mrb[0].mxu0
        %v1575 = vadd.f32 0.0, %v1574
        %v1576 = vpop.f32.mrb[0].mxu0
        %1577 = vmatprep.mubr.bf16.mxu0 0
        %1578 = vmatmul.mubr.bf16.gmra.mrb[0].mxu0 %v1450
        %v1579 = vpop.f32.mrb[0].mxu0
        %v1580 = vadd.f32 0.0, %v1579
        %v1581 = vpop.f32.mrb[0].mxu0
        %v1582 = vpop.f32.mrb[0].mxu0
        %v1583 = vadd.f32 0.0, %v1582
        %v1584 = vpop.f32.mrb[0].mxu0
        %1585 = vmatprep.mubr.bf16.mxu0 0
        %1586 = vmatmul.mubr.bf16.gmra.mrb[0].mxu0 %v1458
        %v1587 = vpop.f32.mrb[0].mxu0
        %v1588 = vadd.f32 0.0, %v1587
        %v1589 = vpop.f32.mrb[0].mxu0
        %v1590 = vpop.f32.mrb[0].mxu0
        %v1591 = vadd.f32 0.0, %v1590
        %v1592 = vpop.f32.mrb[0].mxu0
        %1593 = vmatprep.mubr.bf16.mxu0 0
        %1594 = vmatmul.mubr.bf16.gmra.mrb[0].mxu0 %v1466
        %v1595 = vpop.f32.mrb[0].mxu0
        %v1596 = vadd.f32 0.0, %v1595
        %v1597 = vpop.f32.mrb[0].mxu0
        %v1598 = vpop.f32.mrb[0].mxu0
        %v1599 = vadd.f32 0.0, %v1598
        %v1600 = vpop.f32.mrb[0].mxu0
        %1601 = vmatprep.mubr.bf16.mxu0 0
        %1602 = vmatmul.mubr.bf16.gmra.mrb[0].mxu0 %v1474
        %v1603 = vpop.f32.mrb[0].mxu0
        %v1604 = vadd.f32 0.0, %v1603
        %v1605 = vpop.f32.mrb[0].mxu0
        %v1606 = vpop.f32.mrb[0].mxu0
        %v1607 = vadd.f32 0.0, %v1606
        %v1608 = vpop.f32.mrb[0].mxu0
        %1609 = vdwg.mxu0
        %v1610 = vadd.f32 %v1359, %v1564
        %v1611 = vadd.f32 %v1362, %v1567
        %v1612 = vadd.f32 %v1367, %v1572
        %v1613 = vadd.f32 %v1370, %v1575
        %v1614 = vadd.f32 %v1375, %v1580
        %v1615 = vadd.f32 %v1378, %v1583
        %v1616 = vadd.f32 %v1383, %v1588
        %v1617 = vadd.f32 %v1386, %v1591
        %v1618 = vadd.f32 %v1391, %v1596
        %v1619 = vadd.f32 %v1394, %v1599
        %v1620 = vadd.f32 %v1399, %v1604
        %v1621 = vadd.f32 %v1402, %v1607
        %s1622 = scalar_lea.vmem [#allocation6], 192
        %v1623 = vld [vmem:[%s1622] sm:$0xf]
        %v1624 = vld [vmem:[%s1622 + $0x4] sm:$0xf]
        %v1625 = vld [vmem:[%s1622 + $0x8] sm:$0xf]
        %v1626 = vld [vmem:[%s1622 + $0xc] sm:$0xf]
        %v1627 = vld [vmem:[%s1622 + $0x10] sm:$0xf]
        %v1628 = vld [vmem:[%s1622 + $0x14] sm:$0xf]
        %v1629 = vld [vmem:[%s1622 + $0x18] sm:$0xf]
        %v1630 = vld [vmem:[%s1622 + $0x1c] sm:$0xf]
        %v1631 = vld [vmem:[%s1622 + $0x20] sm:$0xf]
        %v1632 = vld [vmem:[%s1622 + $0x24] sm:$0xf]
        %v1633 = vld [vmem:[%s1622 + $0x28] sm:$0xf]
        %v1634 = vld [vmem:[%s1622 + $0x2c] sm:$0xf]
        %v1635 = vld [vmem:[%s1622 + $0x30] sm:$0xf]
        %v1636 = vld [vmem:[%s1622 + $0x34] sm:$0xf]
        %v1637 = vld [vmem:[%s1622 + $0x38] sm:$0xf]
        %v1638 = vld [vmem:[%s1622 + $0x3c] sm:$0xf]
        %vm1639 = vsmask.f32 5376
        %v1640 = vshrl.u32 %v1068, 16
        %v1642 = vrot.slane %v1640, 2
        %v1643 = vrot.slane %v1471, 3
        %v1644 = vor.u32 %v1642, %v1643
        %v1646 = vshrl.u32 %v1069, 16
        %v1648 = vrot.slane %v1646, 2
        %v1649 = vshll.u32 %v1069, 16
        %v1651 = vrot.slane %v1649, 3
        %v1652 = vor.u32 %v1648, %v1651
        %v1653 = vsel %vm1639, %v1644, %v1652
        %v1655 = vshrl.u32 %v1070, 16
        %v1657 = vrot.slane %v1655, 2
        %v1658 = vshll.u32 %v1070, 16
        %v1660 = vrot.slane %v1658, 3
        %v1661 = vor.u32 %v1657, %v1660
        %v1662 = vsel %vm1639, %v1652, %v1661
        %v1664 = vshrl.u32 %v1071, 16
        %v1666 = vrot.slane %v1664, 2
        %v1667 = vshll.u32 %v1071, 16
        %v1669 = vrot.slane %v1667, 3
        %v1670 = vor.u32 %v1666, %v1669
        %v1671 = vsel %vm1639, %v1661, %v1670
        %v1673 = vshrl.u32 %v1072, 16
        %v1675 = vrot.slane %v1673, 2
        %v1676 = vshll.u32 %v1072, 16
        %v1678 = vrot.slane %v1676, 3
        %v1679 = vor.u32 %v1675, %v1678
        %v1680 = vsel %vm1639, %v1670, %v1679
        %v1682 = vshrl.u32 %v1073, 16
        %v1684 = vrot.slane %v1682, 2
        %v1685 = vshll.u32 %v1073, 16
        %v1687 = vrot.slane %v1685, 3
        %v1688 = vor.u32 %v1684, %v1687
        %v1689 = vsel %vm1639, %v1679, %v1688
        %v1691 = vshrl.u32 %v1074, 16
        %v1693 = vrot.slane %v1691, 2
        %v1694 = vshll.u32 %v1074, 16
        %v1696 = vrot.slane %v1694, 3
        %v1697 = vor.u32 %v1693, %v1696
        %v1698 = vsel %vm1639, %v1688, %v1697
        %v1721 = vunpack.c.l.b16 %v1623
        %v1722 = vunpack.c.l.b16 %v1624
        %v1723 = vunpack.c.l.b16 %v1625
        %v1724 = vunpack.c.l.b16 %v1626
        %v1725 = vunpack.c.l.b16 %v1627
        %v1726 = vunpack.c.l.b16 %v1628
        %v1727 = vunpack.c.l.b16 %v1629
        %v1728 = vunpack.c.l.b16 %v1630
        %v1729 = vunpack.c.l.b16 %v1631
        %v1730 = vunpack.c.l.b16 %v1632
        %v1731 = vunpack.c.l.b16 %v1633
        %v1732 = vunpack.c.l.b16 %v1634
        %v1733 = vunpack.c.l.b16 %v1635
        %v1734 = vunpack.c.l.b16 %v1636
        %v1735 = vunpack.c.l.b16 %v1637
        %v1736 = vunpack.c.l.b16 %v1638
        %v1737 = vpack.c.b16 %v1722, %v1721
        %v1738 = vpack.c.b16 %v1724, %v1723
        %v1739 = vpack.c.b16 %v1726, %v1725
        %v1740 = vpack.c.b16 %v1728, %v1727
        %v1741 = vpack.c.b16 %v1730, %v1729
        %v1742 = vpack.c.b16 %v1732, %v1731
        %v1743 = vpack.c.b16 %v1734, %v1733
        %v1744 = vpack.c.b16 %v1736, %v1735
        %1753 = vmatprep.subr.bf16.mxu0 0
        %1754 = vmatpush1.bf16.msra.mxu0 %v1737
        %1755 = vmatprep.subr.bf16.mxu0 0
        %1756 = vmatpush1.bf16.msra.mxu0 %v1738
        %1757 = vmatprep.subr.bf16.mxu0 0
        %1758 = vmatpush1.bf16.msra.mxu0 %v1739
        %1759 = vmatprep.subr.bf16.mxu0 0
        %1760 = vmatpush1.bf16.msra.mxu0 %v1740
        %1761 = vmatprep.subr.bf16.mxu0 0
        %1762 = vmatpush1.bf16.msra.mxu0 %v1741
        %1763 = vmatprep.subr.bf16.mxu0 0
        %1764 = vmatpush1.bf16.msra.mxu0 %v1742
        %1765 = vmatprep.subr.bf16.mxu0 0
        %1766 = vmatpush1.bf16.msra.mxu0 %v1743
        %1767 = vmatprep.subr.bf16.mxu0 0
        %1768 = vmatpush1.bf16.msra.mxu0 %v1744
        %1769 = vmatprep.subr.bf16.mxu0 0
        %1770 = vmatpush1.bf16.msra.mxu0 0
        %1771 = vmatprep.subr.bf16.mxu0 0
        %1772 = vmatpush1.bf16.msra.mxu0 0
        %1773 = vmatprep.subr.bf16.mxu0 0
        %1774 = vmatpush1.bf16.msra.mxu0 0
        %1775 = vmatprep.subr.bf16.mxu0 0
        %1776 = vmatpush1.bf16.msra.mxu0 0
        %1777 = vmatprep.subr.bf16.mxu0 0
        %1778 = vmatpush1.bf16.msra.mxu0 0
        %1779 = vmatprep.subr.bf16.mxu0 0
        %1780 = vmatpush1.bf16.msra.mxu0 0
        %1781 = vmatprep.subr.bf16.mxu0 0
        %1782 = vmatpush1.bf16.msra.mxu0 0
        %1783 = vmatprep.subr.bf16.mxu0 0
        %1784 = vmatpush1.bf16.msra.mxu0 0
        %1785 = vmatprep.mubr.bf16.mxu0 0
        %1786 = vmatmul.mubr.bf16.gmra.mrb[0].mxu0 %v1653
        %v1787 = vpop.f32.mrb[0].mxu0
        %v1788 = vadd.f32 0.0, %v1787
        %v1789 = vpop.f32.mrb[0].mxu0
        %v1790 = vpop.f32.mrb[0].mxu0
        %v1791 = vadd.f32 0.0, %v1790
        %v1792 = vpop.f32.mrb[0].mxu0
        %1793 = vmatprep.mubr.bf16.mxu0 0
        %1794 = vmatmul.mubr.bf16.gmra.mrb[0].mxu0 %v1662
        %v1795 = vpop.f32.mrb[0].mxu0
        %v1796 = vadd.f32 0.0, %v1795
        %v1797 = vpop.f32.mrb[0].mxu0
        %v1798 = vpop.f32.mrb[0].mxu0
        %v1799 = vadd.f32 0.0, %v1798
        %v1800 = vpop.f32.mrb[0].mxu0
        %1801 = vmatprep.mubr.bf16.mxu0 0
        %1802 = vmatmul.mubr.bf16.gmra.mrb[0].mxu0 %v1671
        %v1803 = vpop.f32.mrb[0].mxu0
        %v1804 = vadd.f32 0.0, %v1803
        %v1805 = vpop.f32.mrb[0].mxu0
        %v1806 = vpop.f32.mrb[0].mxu0
        %v1807 = vadd.f32 0.0, %v1806
        %v1808 = vpop.f32.mrb[0].mxu0
        %1809 = vmatprep.mubr.bf16.mxu0 0
        %1810 = vmatmul.mubr.bf16.gmra.mrb[0].mxu0 %v1680
        %v1811 = vpop.f32.mrb[0].mxu0
        %v1812 = vadd.f32 0.0, %v1811
        %v1813 = vpop.f32.mrb[0].mxu0
        %v1814 = vpop.f32.mrb[0].mxu0
        %v1815 = vadd.f32 0.0, %v1814
        %v1816 = vpop.f32.mrb[0].mxu0
        %1817 = vmatprep.mubr.bf16.mxu0 0
        %1818 = vmatmul.mubr.bf16.gmra.mrb[0].mxu0 %v1689
        %v1819 = vpop.f32.mrb[0].mxu0
        %v1820 = vadd.f32 0.0, %v1819
        %v1821 = vpop.f32.mrb[0].mxu0
        %v1822 = vpop.f32.mrb[0].mxu0
        %v1823 = vadd.f32 0.0, %v1822
        %v1824 = vpop.f32.mrb[0].mxu0
        %1825 = vmatprep.mubr.bf16.mxu0 0
        %1826 = vmatmul.mubr.bf16.gmra.mrb[0].mxu0 %v1698
        %v1827 = vpop.f32.mrb[0].mxu0
        %v1828 = vadd.f32 0.0, %v1827
        %v1829 = vpop.f32.mrb[0].mxu0
        %v1830 = vpop.f32.mrb[0].mxu0
        %v1831 = vadd.f32 0.0, %v1830
        %v1832 = vpop.f32.mrb[0].mxu0
        %1833 = vdwg.mxu0
        %v1834 = vadd.f32 %v1610, %v1788
        %v1835 = vadd.f32 %v1611, %v1791
        %v1836 = vadd.f32 %v1612, %v1796
        %v1837 = vadd.f32 %v1613, %v1799
        %v1838 = vadd.f32 %v1614, %v1804
        %v1839 = vadd.f32 %v1615, %v1807
        %v1840 = vadd.f32 %v1616, %v1812
        %v1841 = vadd.f32 %v1617, %v1815
        %v1842 = vadd.f32 %v1618, %v1820
        %v1843 = vadd.f32 %v1619, %v1823
        %v1844 = vadd.f32 %v1620, %v1828
        %v1845 = vadd.f32 %v1621, %v1831
        %s1846 = scalar_lea.vmem [#allocation6], 256
        %v1847 = vld [vmem:[%s1846] sm:$0xf]
        %v1848 = vld [vmem:[%s1846 + $0x4] sm:$0xf]
        %v1849 = vld [vmem:[%s1846 + $0x8] sm:$0xf]
        %v1850 = vld [vmem:[%s1846 + $0xc] sm:$0xf]
        %v1851 = vld [vmem:[%s1846 + $0x10] sm:$0xf]
        %v1852 = vld [vmem:[%s1846 + $0x14] sm:$0xf]
        %v1853 = vld [vmem:[%s1846 + $0x18] sm:$0xf]
        %v1854 = vld [vmem:[%s1846 + $0x1c] sm:$0xf]
        %v1855 = vld [vmem:[%s1846 + $0x20] sm:$0xf]
        %v1856 = vld [vmem:[%s1846 + $0x24] sm:$0xf]
        %v1857 = vld [vmem:[%s1846 + $0x28] sm:$0xf]
        %v1858 = vld [vmem:[%s1846 + $0x2c] sm:$0xf]
        %v1859 = vld [vmem:[%s1846 + $0x30] sm:$0xf]
        %v1860 = vld [vmem:[%s1846 + $0x34] sm:$0xf]
        %v1861 = vld [vmem:[%s1846 + $0x38] sm:$0xf]
        %v1862 = vld [vmem:[%s1846 + $0x3c] sm:$0xf]
        %vm1869 = vcmask 1043456
        %v1870 = vrot.slane %v1074, 4
        %v1871 = vrot.slane %v1075, 4
        %v1872 = vsel %vm1869, %v1870, %v1871
        %v1873 = vrot.slane %v1076, 4
        %v1874 = vsel %vm1869, %v1871, %v1873
        %v1875 = vrot.slane %v1077, 4
        %v1876 = vsel %vm1869, %v1873, %v1875
        %v1877 = vrot.slane %v1078, 4
        %v1878 = vsel %vm1869, %v1875, %v1877
        %v1879 = vrot.slane %v1079, 4
        %v1880 = vsel %vm1869, %v1877, %v1879
        %v1881 = vrot.slane %v1080, 4
        %v1882 = vsel %vm1869, %v1879, %v1881
        %v1905 = vunpack.c.l.b16 %v1847
        %v1906 = vunpack.c.l.b16 %v1848
        %v1907 = vunpack.c.l.b16 %v1849
        %v1908 = vunpack.c.l.b16 %v1850
        %v1909 = vunpack.c.l.b16 %v1851
        %v1910 = vunpack.c.l.b16 %v1852
        %v1911 = vunpack.c.l.b16 %v1853
        %v1912 = vunpack.c.l.b16 %v1854
        %v1913 = vunpack.c.l.b16 %v1855
        %v1914 = vunpack.c.l.b16 %v1856
        %v1915 = vunpack.c.l.b16 %v1857
        %v1916 = vunpack.c.l.b16 %v1858
        %v1917 = vunpack.c.l.b16 %v1859
        %v1918 = vunpack.c.l.b16 %v1860
        %v1919 = vunpack.c.l.b16 %v1861
        %v1920 = vunpack.c.l.b16 %v1862
        %v1921 = vpack.c.b16 %v1906, %v1905
        %v1922 = vpack.c.b16 %v1908, %v1907
        %v1923 = vpack.c.b16 %v1910, %v1909
        %v1924 = vpack.c.b16 %v1912, %v1911
        %v1925 = vpack.c.b16 %v1914, %v1913
        %v1926 = vpack.c.b16 %v1916, %v1915
        %v1927 = vpack.c.b16 %v1918, %v1917
        %v1928 = vpack.c.b16 %v1920, %v1919
        %1937 = vmatprep.subr.bf16.mxu0 0
        %1938 = vmatpush1.bf16.msra.mxu0 %v1921
        %1939 = vmatprep.subr.bf16.mxu0 0
        %1940 = vmatpush1.bf16.msra.mxu0 %v1922
        %1941 = vmatprep.subr.bf16.mxu0 0
        %1942 = vmatpush1.bf16.msra.mxu0 %v1923
        %1943 = vmatprep.subr.bf16.mxu0 0
        %1944 = vmatpush1.bf16.msra.mxu0 %v1924
        %1945 = vmatprep.subr.bf16.mxu0 0
        %1946 = vmatpush1.bf16.msra.mxu0 %v1925
        %1947 = vmatprep.subr.bf16.mxu0 0
        %1948 = vmatpush1.bf16.msra.mxu0 %v1926
        %1949 = vmatprep.subr.bf16.mxu0 0
        %1950 = vmatpush1.bf16.msra.mxu0 %v1927
        %1951 = vmatprep.subr.bf16.mxu0 0
        %1952 = vmatpush1.bf16.msra.mxu0 %v1928
        %1953 = vmatprep.subr.bf16.mxu0 0
        %1954 = vmatpush1.bf16.msra.mxu0 0
        %1955 = vmatprep.subr.bf16.mxu0 0
        %1956 = vmatpush1.bf16.msra.mxu0 0
        %1957 = vmatprep.subr.bf16.mxu0 0
        %1958 = vmatpush1.bf16.msra.mxu0 0
        %1959 = vmatprep.subr.bf16.mxu0 0
        %1960 = vmatpush1.bf16.msra.mxu0 0
        %1961 = vmatprep.subr.bf16.mxu0 0
        %1962 = vmatpush1.bf16.msra.mxu0 0
        %1963 = vmatprep.subr.bf16.mxu0 0
        %1964 = vmatpush1.bf16.msra.mxu0 0
        %1965 = vmatprep.subr.bf16.mxu0 0
        %1966 = vmatpush1.bf16.msra.mxu0 0
        %1967 = vmatprep.subr.bf16.mxu0 0
        %1968 = vmatpush1.bf16.msra.mxu0 0
        %1969 = vmatprep.mubr.bf16.mxu0 0
        %1970 = vmatmul.mubr.bf16.gmra.mrb[0].mxu0 %v1872
        %v1971 = vpop.f32.mrb[0].mxu0
        %v1972 = vadd.f32 0.0, %v1971
        %v1973 = vpop.f32.mrb[0].mxu0
        %v1974 = vpop.f32.mrb[0].mxu0
        %v1975 = vadd.f32 0.0, %v1974
        %v1976 = vpop.f32.mrb[0].mxu0
        %1977 = vmatprep.mubr.bf16.mxu0 0
        %1978 = vmatmul.mubr.bf16.gmra.mrb[0].mxu0 %v1874
        %v1979 = vpop.f32.mrb[0].mxu0
        %v1980 = vadd.f32 0.0, %v1979
        %v1981 = vpop.f32.mrb[0].mxu0
        %v1982 = vpop.f32.mrb[0].mxu0
        %v1983 = vadd.f32 0.0, %v1982
        %v1984 = vpop.f32.mrb[0].mxu0
        %1985 = vmatprep.mubr.bf16.mxu0 0
        %1986 = vmatmul.mubr.bf16.gmra.mrb[0].mxu0 %v1876
        %v1987 = vpop.f32.mrb[0].mxu0
        %v1988 = vadd.f32 0.0, %v1987
        %v1989 = vpop.f32.mrb[0].mxu0
        %v1990 = vpop.f32.mrb[0].mxu0
        %v1991 = vadd.f32 0.0, %v1990
        %v1992 = vpop.f32.mrb[0].mxu0
        %1993 = vmatprep.mubr.bf16.mxu0 0
        %1994 = vmatmul.mubr.bf16.gmra.mrb[0].mxu0 %v1878
        %v1995 = vpop.f32.mrb[0].mxu0
        %v1996 = vadd.f32 0.0, %v1995
        %v1997 = vpop.f32.mrb[0].mxu0
        %v1998 = vpop.f32.mrb[0].mxu0
        %v1999 = vadd.f32 0.0, %v1998
        %v2000 = vpop.f32.mrb[0].mxu0
        %2001 = vmatprep.mubr.bf16.mxu0 0
        %2002 = vmatmul.mubr.bf16.gmra.mrb[0].mxu0 %v1880
        %v2003 = vpop.f32.mrb[0].mxu0
        %v2004 = vadd.f32 0.0, %v2003
        %v2005 = vpop.f32.mrb[0].mxu0
        %v2006 = vpop.f32.mrb[0].mxu0
        %v2007 = vadd.f32 0.0, %v2006
        %v2008 = vpop.f32.mrb[0].mxu0
        %2009 = vmatprep.mubr.bf16.mxu0 0
        %2010 = vmatmul.mubr.bf16.gmra.mrb[0].mxu0 %v1882
        %v2011 = vpop.f32.mrb[0].mxu0
        %v2012 = vadd.f32 0.0, %v2011
        %v2013 = vpop.f32.mrb[0].mxu0
        %v2014 = vpop.f32.mrb[0].mxu0
        %v2015 = vadd.f32 0.0, %v2014
        %v2016 = vpop.f32.mrb[0].mxu0
        %2017 = vdwg.mxu0
        %v2018 = vadd.f32 %v1834, %v1972
        %v2019 = vadd.f32 %v1835, %v1975
        %v2020 = vadd.f32 %v1836, %v1980
        %v2021 = vadd.f32 %v1837, %v1983
        %v2022 = vadd.f32 %v1838, %v1988
        %v2023 = vadd.f32 %v1839, %v1991
        %v2024 = vadd.f32 %v1840, %v1996
        %v2025 = vadd.f32 %v1841, %v1999
        %v2026 = vadd.f32 %v1842, %v2004
        %v2027 = vadd.f32 %v1843, %v2007
        %v2028 = vadd.f32 %v1844, %v2012
        %v2029 = vadd.f32 %v1845, %v2015
        %s2030 = scalar_lea.vmem [#allocation6], 320
        %v2031 = vld [vmem:[%s2030] sm:$0xf]
        %v2032 = vld [vmem:[%s2030 + $0x4] sm:$0xf]
        %v2033 = vld [vmem:[%s2030 + $0x8] sm:$0xf]
        %v2034 = vld [vmem:[%s2030 + $0xc] sm:$0xf]
        %v2035 = vld [vmem:[%s2030 + $0x10] sm:$0xf]
        %v2036 = vld [vmem:[%s2030 + $0x14] sm:$0xf]
        %v2037 = vld [vmem:[%s2030 + $0x18] sm:$0xf]
        %v2038 = vld [vmem:[%s2030 + $0x1c] sm:$0xf]
        %v2039 = vld [vmem:[%s2030 + $0x20] sm:$0xf]
        %v2040 = vld [vmem:[%s2030 + $0x24] sm:$0xf]
        %v2041 = vld [vmem:[%s2030 + $0x28] sm:$0xf]
        %v2042 = vld [vmem:[%s2030 + $0x2c] sm:$0xf]
        %v2043 = vld [vmem:[%s2030 + $0x30] sm:$0xf]
        %v2044 = vld [vmem:[%s2030 + $0x34] sm:$0xf]
        %v2045 = vld [vmem:[%s2030 + $0x38] sm:$0xf]
        %v2046 = vld [vmem:[%s2030 + $0x3c] sm:$0xf]
        %vm2053 = vcmask 1041408
        %v2054 = vrot.slane %v1080, 6
        %v2055 = vrot.slane %v1081, 6
        %v2056 = vsel %vm2053, %v2054, %v2055
        %v2057 = vrot.slane %v1082, 6
        %v2058 = vsel %vm2053, %v2055, %v2057
        %v2059 = vrot.slane %v1083, 6
        %v2060 = vsel %vm2053, %v2057, %v2059
        %v2061 = vrot.slane %v1084, 6
        %v2062 = vsel %vm2053, %v2059, %v2061
        %v2063 = vrot.slane %v1085, 6
        %v2064 = vsel %vm2053, %v2061, %v2063
        %v2065 = vrot.slane %v1086, 6
        %v2066 = vsel %vm2053, %v2063, %v2065
        %v2089 = vunpack.c.l.b16 %v2031
        %v2090 = vunpack.c.l.b16 %v2032
        %v2091 = vunpack.c.l.b16 %v2033
        %v2092 = vunpack.c.l.b16 %v2034
        %v2093 = vunpack.c.l.b16 %v2035
        %v2094 = vunpack.c.l.b16 %v2036
        %v2095 = vunpack.c.l.b16 %v2037
        %v2096 = vunpack.c.l.b16 %v2038
        %v2097 = vunpack.c.l.b16 %v2039
        %v2098 = vunpack.c.l.b16 %v2040
        %v2099 = vunpack.c.l.b16 %v2041
        %v2100 = vunpack.c.l.b16 %v2042
        %v2101 = vunpack.c.l.b16 %v2043
        %v2102 = vunpack.c.l.b16 %v2044
        %v2103 = vunpack.c.l.b16 %v2045
        %v2104 = vunpack.c.l.b16 %v2046
        %v2105 = vpack.c.b16 %v2090, %v2089
        %v2106 = vpack.c.b16 %v2092, %v2091
        %v2107 = vpack.c.b16 %v2094, %v2093
        %v2108 = vpack.c.b16 %v2096, %v2095
        %v2109 = vpack.c.b16 %v2098, %v2097
        %v2110 = vpack.c.b16 %v2100, %v2099
        %v2111 = vpack.c.b16 %v2102, %v2101
        %v2112 = vpack.c.b16 %v2104, %v2103
        %2121 = vmatprep.subr.bf16.mxu0 0
        %2122 = vmatpush1.bf16.msra.mxu0 %v2105
        %2123 = vmatprep.subr.bf16.mxu0 0
        %2124 = vmatpush1.bf16.msra.mxu0 %v2106
        %2125 = vmatprep.subr.bf16.mxu0 0
        %2126 = vmatpush1.bf16.msra.mxu0 %v2107
        %2127 = vmatprep.subr.bf16.mxu0 0
        %2128 = vmatpush1.bf16.msra.mxu0 %v2108
        %2129 = vmatprep.subr.bf16.mxu0 0
        %2130 = vmatpush1.bf16.msra.mxu0 %v2109
        %2131 = vmatprep.subr.bf16.mxu0 0
        %2132 = vmatpush1.bf16.msra.mxu0 %v2110
        %2133 = vmatprep.subr.bf16.mxu0 0
        %2134 = vmatpush1.bf16.msra.mxu0 %v2111
        %2135 = vmatprep.subr.bf16.mxu0 0
        %2136 = vmatpush1.bf16.msra.mxu0 %v2112
        %2137 = vmatprep.subr.bf16.mxu0 0
        %2138 = vmatpush1.bf16.msra.mxu0 0
        %2139 = vmatprep.subr.bf16.mxu0 0
        %2140 = vmatpush1.bf16.msra.mxu0 0
        %2141 = vmatprep.subr.bf16.mxu0 0
        %2142 = vmatpush1.bf16.msra.mxu0 0
        %2143 = vmatprep.subr.bf16.mxu0 0
        %2144 = vmatpush1.bf16.msra.mxu0 0
        %2145 = vmatprep.subr.bf16.mxu0 0
        %2146 = vmatpush1.bf16.msra.mxu0 0
        %2147 = vmatprep.subr.bf16.mxu0 0
        %2148 = vmatpush1.bf16.msra.mxu0 0
        %2149 = vmatprep.subr.bf16.mxu0 0
        %2150 = vmatpush1.bf16.msra.mxu0 0
        %2151 = vmatprep.subr.bf16.mxu0 0
        %2152 = vmatpush1.bf16.msra.mxu0 0
        %2153 = vmatprep.mubr.bf16.mxu0 0
        %2154 = vmatmul.mubr.bf16.gmra.mrb[0].mxu0 %v2056
        %v2155 = vpop.f32.mrb[0].mxu0
        %v2156 = vadd.f32 0.0, %v2155
        %v2157 = vpop.f32.mrb[0].mxu0
        %v2158 = vpop.f32.mrb[0].mxu0
        %v2159 = vadd.f32 0.0, %v2158
        %v2160 = vpop.f32.mrb[0].mxu0
        %2161 = vmatprep.mubr.bf16.mxu0 0
        %2162 = vmatmul.mubr.bf16.gmra.mrb[0].mxu0 %v2058
        %v2163 = vpop.f32.mrb[0].mxu0
        %v2164 = vadd.f32 0.0, %v2163
        %v2165 = vpop.f32.mrb[0].mxu0
        %v2166 = vpop.f32.mrb[0].mxu0
        %v2167 = vadd.f32 0.0, %v2166
        %v2168 = vpop.f32.mrb[0].mxu0
        %2169 = vmatprep.mubr.bf16.mxu0 0
        %2170 = vmatmul.mubr.bf16.gmra.mrb[0].mxu0 %v2060
        %v2171 = vpop.f32.mrb[0].mxu0
        %v2172 = vadd.f32 0.0, %v2171
        %v2173 = vpop.f32.mrb[0].mxu0
        %v2174 = vpop.f32.mrb[0].mxu0
        %v2175 = vadd.f32 0.0, %v2174
        %v2176 = vpop.f32.mrb[0].mxu0
        %2177 = vmatprep.mubr.bf16.mxu0 0
        %2178 = vmatmul.mubr.bf16.gmra.mrb[0].mxu0 %v2062
        %v2179 = vpop.f32.mrb[0].mxu0
        %v2180 = vadd.f32 0.0, %v2179
        %v2181 = vpop.f32.mrb[0].mxu0
        %v2182 = vpop.f32.mrb[0].mxu0
        %v2183 = vadd.f32 0.0, %v2182
        %v2184 = vpop.f32.mrb[0].mxu0
        %2185 = vmatprep.mubr.bf16.mxu0 0
        %2186 = vmatmul.mubr.bf16.gmra.mrb[0].mxu0 %v2064
        %v2187 = vpop.f32.mrb[0].mxu0
        %v2188 = vadd.f32 0.0, %v2187
        %v2189 = vpop.f32.mrb[0].mxu0
        %v2190 = vpop.f32.mrb[0].mxu0
        %v2191 = vadd.f32 0.0, %v2190
        %v2192 = vpop.f32.mrb[0].mxu0
        %2193 = vmatprep.mubr.bf16.mxu0 0
        %2194 = vmatmul.mubr.bf16.gmra.mrb[0].mxu0 %v2066
        %v2195 = vpop.f32.mrb[0].mxu0
        %v2196 = vadd.f32 0.0, %v2195
        %v2197 = vpop.f32.mrb[0].mxu0
        %v2198 = vpop.f32.mrb[0].mxu0
        %v2199 = vadd.f32 0.0, %v2198
        %v2200 = vpop.f32.mrb[0].mxu0
        %2201 = vdwg.mxu0
        %v2202 = vadd.f32 %v2018, %v2156
        %v2203 = vadd.f32 %v2019, %v2159
        %v2204 = vadd.f32 %v2020, %v2164
        %v2205 = vadd.f32 %v2021, %v2167
        %v2206 = vadd.f32 %v2022, %v2172
        %v2207 = vadd.f32 %v2023, %v2175
        %v2208 = vadd.f32 %v2024, %v2180
        %v2209 = vadd.f32 %v2025, %v2183
        %v2210 = vadd.f32 %v2026, %v2188
        %v2211 = vadd.f32 %v2027, %v2191
        %v2212 = vadd.f32 %v2028, %v2196
        %v2213 = vadd.f32 %v2029, %v2199
        %s2214 = scalar_lea.vmem [#allocation6], 384
        %v2215 = vld [vmem:[%s2214] sm:$0xf]
        %v2216 = vld [vmem:[%s2214 + $0x4] sm:$0xf]
        %v2217 = vld [vmem:[%s2214 + $0x8] sm:$0xf]
        %v2218 = vld [vmem:[%s2214 + $0xc] sm:$0xf]
        %v2219 = vld [vmem:[%s2214 + $0x10] sm:$0xf]
        %v2220 = vld [vmem:[%s2214 + $0x14] sm:$0xf]
        %v2221 = vld [vmem:[%s2214 + $0x18] sm:$0xf]
        %v2222 = vld [vmem:[%s2214 + $0x1c] sm:$0xf]
        %v2223 = vld [vmem:[%s2214 + $0x20] sm:$0xf]
        %v2224 = vld [vmem:[%s2214 + $0x24] sm:$0xf]
        %v2225 = vld [vmem:[%s2214 + $0x28] sm:$0xf]
        %v2226 = vld [vmem:[%s2214 + $0x2c] sm:$0xf]
        %v2227 = vld [vmem:[%s2214 + $0x30] sm:$0xf]
        %v2228 = vld [vmem:[%s2214 + $0x34] sm:$0xf]
        %v2229 = vld [vmem:[%s2214 + $0x38] sm:$0xf]
        %v2230 = vld [vmem:[%s2214 + $0x3c] sm:$0xf]
        %vm2231 = vsmask.f32 3328
        %v2232 = vrot.slane %v1691, 4
        %v2233 = vrot.slane %v1694, 5
        %v2234 = vor.u32 %v2232, %v2233
        %v2236 = vshrl.u32 %v1075, 16
        %v2238 = vrot.slane %v2236, 4
        %v2239 = vshll.u32 %v1075, 16
        %v2241 = vrot.slane %v2239, 5
        %v2242 = vor.u32 %v2238, %v2241
        %v2243 = vsel %vm2231, %v2234, %v2242
        %v2245 = vshrl.u32 %v1076, 16
        %v2247 = vrot.slane %v2245, 4
        %v2248 = vshll.u32 %v1076, 16
        %v2250 = vrot.slane %v2248, 5
        %v2251 = vor.u32 %v2247, %v2250
        %v2252 = vsel %vm2231, %v2242, %v2251
        %v2254 = vshrl.u32 %v1077, 16
        %v2256 = vrot.slane %v2254, 4
        %v2257 = vshll.u32 %v1077, 16
        %v2259 = vrot.slane %v2257, 5
        %v2260 = vor.u32 %v2256, %v2259
        %v2261 = vsel %vm2231, %v2251, %v2260
        %v2263 = vshrl.u32 %v1078, 16
        %v2265 = vrot.slane %v2263, 4
        %v2266 = vshll.u32 %v1078, 16
        %v2268 = vrot.slane %v2266, 5
        %v2269 = vor.u32 %v2265, %v2268
        %v2270 = vsel %vm2231, %v2260, %v2269
        %v2272 = vshrl.u32 %v1079, 16
        %v2274 = vrot.slane %v2272, 4
        %v2275 = vshll.u32 %v1079, 16
        %v2277 = vrot.slane %v2275, 5
        %v2278 = vor.u32 %v2274, %v2277
        %v2279 = vsel %vm2231, %v2269, %v2278
        %v2281 = vshrl.u32 %v1080, 16
        %v2283 = vrot.slane %v2281, 4
        %v2284 = vshll.u32 %v1080, 16
        %v2286 = vrot.slane %v2284, 5
        %v2287 = vor.u32 %v2283, %v2286
        %v2288 = vsel %vm2231, %v2278, %v2287
        %v2311 = vunpack.c.l.b16 %v2215
        %v2312 = vunpack.c.l.b16 %v2216
        %v2313 = vunpack.c.l.b16 %v2217
        %v2314 = vunpack.c.l.b16 %v2218
        %v2315 = vunpack.c.l.b16 %v2219
        %v2316 = vunpack.c.l.b16 %v2220
        %v2317 = vunpack.c.l.b16 %v2221
        %v2318 = vunpack.c.l.b16 %v2222
        %v2319 = vunpack.c.l.b16 %v2223
        %v2320 = vunpack.c.l.b16 %v2224
        %v2321 = vunpack.c.l.b16 %v2225
        %v2322 = vunpack.c.l.b16 %v2226
        %v2323 = vunpack.c.l.b16 %v2227
        %v2324 = vunpack.c.l.b16 %v2228
        %v2325 = vunpack.c.l.b16 %v2229
        %v2326 = vunpack.c.l.b16 %v2230
        %v2327 = vpack.c.b16 %v2312, %v2311
        %v2328 = vpack.c.b16 %v2314, %v2313
        %v2329 = vpack.c.b16 %v2316, %v2315
        %v2330 = vpack.c.b16 %v2318, %v2317
        %v2331 = vpack.c.b16 %v2320, %v2319
        %v2332 = vpack.c.b16 %v2322, %v2321
        %v2333 = vpack.c.b16 %v2324, %v2323
        %v2334 = vpack.c.b16 %v2326, %v2325
        %2343 = vmatprep.subr.bf16.mxu0 0
        %2344 = vmatpush1.bf16.msra.mxu0 %v2327
        %2345 = vmatprep.subr.bf16.mxu0 0
        %2346 = vmatpush1.bf16.msra.mxu0 %v2328
        %2347 = vmatprep.subr.bf16.mxu0 0
        %2348 = vmatpush1.bf16.msra.mxu0 %v2329
        %2349 = vmatprep.subr.bf16.mxu0 0
        %2350 = vmatpush1.bf16.msra.mxu0 %v2330
        %2351 = vmatprep.subr.bf16.mxu0 0
        %2352 = vmatpush1.bf16.msra.mxu0 %v2331
        %2353 = vmatprep.subr.bf16.mxu0 0
        %2354 = vmatpush1.bf16.msra.mxu0 %v2332
        %2355 = vmatprep.subr.bf16.mxu0 0
        %2356 = vmatpush1.bf16.msra.mxu0 %v2333
        %2357 = vmatprep.subr.bf16.mxu0 0
        %2358 = vmatpush1.bf16.msra.mxu0 %v2334
        %2359 = vmatprep.subr.bf16.mxu0 0
        %2360 = vmatpush1.bf16.msra.mxu0 0
        %2361 = vmatprep.subr.bf16.mxu0 0
        %2362 = vmatpush1.bf16.msra.mxu0 0
        %2363 = vmatprep.subr.bf16.mxu0 0
        %2364 = vmatpush1.bf16.msra.mxu0 0
        %2365 = vmatprep.subr.bf16.mxu0 0
        %2366 = vmatpush1.bf16.msra.mxu0 0
        %2367 = vmatprep.subr.bf16.mxu0 0
        %2368 = vmatpush1.bf16.msra.mxu0 0
        %2369 = vmatprep.subr.bf16.mxu0 0
        %2370 = vmatpush1.bf16.msra.mxu0 0
        %2371 = vmatprep.subr.bf16.mxu0 0
        %2372 = vmatpush1.bf16.msra.mxu0 0
        %2373 = vmatprep.subr.bf16.mxu0 0
        %2374 = vmatpush1.bf16.msra.mxu0 0
        %2375 = vmatprep.mubr.bf16.mxu0 0
        %2376 = vmatmul.mubr.bf16.gmra.mrb[0].mxu0 %v2243
        %v2377 = vpop.f32.mrb[0].mxu0
        %v2378 = vadd.f32 0.0, %v2377
        %v2379 = vpop.f32.mrb[0].mxu0
        %v2380 = vpop.f32.mrb[0].mxu0
        %v2381 = vadd.f32 0.0, %v2380
        %v2382 = vpop.f32.mrb[0].mxu0
        %2383 = vmatprep.mubr.bf16.mxu0 0
        %2384 = vmatmul.mubr.bf16.gmra.mrb[0].mxu0 %v2252
        %v2385 = vpop.f32.mrb[0].mxu0
        %v2386 = vadd.f32 0.0, %v2385
        %v2387 = vpop.f32.mrb[0].mxu0
        %v2388 = vpop.f32.mrb[0].mxu0
        %v2389 = vadd.f32 0.0, %v2388
        %v2390 = vpop.f32.mrb[0].mxu0
        %2391 = vmatprep.mubr.bf16.mxu0 0
        %2392 = vmatmul.mubr.bf16.gmra.mrb[0].mxu0 %v2261
        %v2393 = vpop.f32.mrb[0].mxu0
        %v2394 = vadd.f32 0.0, %v2393
        %v2395 = vpop.f32.mrb[0].mxu0
        %v2396 = vpop.f32.mrb[0].mxu0
        %v2397 = vadd.f32 0.0, %v2396
        %v2398 = vpop.f32.mrb[0].mxu0
        %2399 = vmatprep.mubr.bf16.mxu0 0
        %2400 = vmatmul.mubr.bf16.gmra.mrb[0].mxu0 %v2270
        %v2401 = vpop.f32.mrb[0].mxu0
        %v2402 = vadd.f32 0.0, %v2401
        %v2403 = vpop.f32.mrb[0].mxu0
        %v2404 = vpop.f32.mrb[0].mxu0
        %v2405 = vadd.f32 0.0, %v2404
        %v2406 = vpop.f32.mrb[0].mxu0
        %2407 = vmatprep.mubr.bf16.mxu0 0
        %2408 = vmatmul.mubr.bf16.gmra.mrb[0].mxu0 %v2279
        %v2409 = vpop.f32.mrb[0].mxu0
        %v2410 = vadd.f32 0.0, %v2409
        %v2411 = vpop.f32.mrb[0].mxu0
        %v2412 = vpop.f32.mrb[0].mxu0
        %v2413 = vadd.f32 0.0, %v2412
        %v2414 = vpop.f32.mrb[0].mxu0
        %2415 = vmatprep.mubr.bf16.mxu0 0
        %2416 = vmatmul.mubr.bf16.gmra.mrb[0].mxu0 %v2288
        %v2417 = vpop.f32.mrb[0].mxu0
        %v2418 = vadd.f32 0.0, %v2417
        %v2419 = vpop.f32.mrb[0].mxu0
        %v2420 = vpop.f32.mrb[0].mxu0
        %v2421 = vadd.f32 0.0, %v2420
        %v2422 = vpop.f32.mrb[0].mxu0
        %2423 = vdwg.mxu0
        %v2424 = vadd.f32 %v2202, %v2378
        %v2425 = vadd.f32 %v2203, %v2381
        %v2426 = vadd.f32 %v2204, %v2386
        %v2427 = vadd.f32 %v2205, %v2389
        %v2428 = vadd.f32 %v2206, %v2394
        %v2429 = vadd.f32 %v2207, %v2397
        %v2430 = vadd.f32 %v2208, %v2402
        %v2431 = vadd.f32 %v2209, %v2405
        %v2432 = vadd.f32 %v2210, %v2410
        %v2433 = vadd.f32 %v2211, %v2413
        %v2434 = vadd.f32 %v2212, %v2418
        %v2435 = vadd.f32 %v2213, %v2421
        %s2436 = scalar_lea.vmem [#allocation6], 448
        %v2437 = vld [vmem:[%s2436] sm:$0xf]
        %v2438 = vld [vmem:[%s2436 + $0x4] sm:$0xf]
        %v2439 = vld [vmem:[%s2436 + $0x8] sm:$0xf]
        %v2440 = vld [vmem:[%s2436 + $0xc] sm:$0xf]
        %v2441 = vld [vmem:[%s2436 + $0x10] sm:$0xf]
        %v2442 = vld [vmem:[%s2436 + $0x14] sm:$0xf]
        %v2443 = vld [vmem:[%s2436 + $0x18] sm:$0xf]
        %v2444 = vld [vmem:[%s2436 + $0x1c] sm:$0xf]
        %v2445 = vld [vmem:[%s2436 + $0x20] sm:$0xf]
        %v2446 = vld [vmem:[%s2436 + $0x24] sm:$0xf]
        %v2447 = vld [vmem:[%s2436 + $0x28] sm:$0xf]
        %v2448 = vld [vmem:[%s2436 + $0x2c] sm:$0xf]
        %v2449 = vld [vmem:[%s2436 + $0x30] sm:$0xf]
        %v2450 = vld [vmem:[%s2436 + $0x34] sm:$0xf]
        %v2451 = vld [vmem:[%s2436 + $0x38] sm:$0xf]
        %v2452 = vld [vmem:[%s2436 + $0x3c] sm:$0xf]
        %vm2453 = vsmask.f32 1280
        %v2454 = vrot.slane %v2281, 6
        %v2455 = vrot.slane %v2284, 7
        %v2456 = vor.u32 %v2454, %v2455
        %v2458 = vshrl.u32 %v1081, 16
        %v2460 = vrot.slane %v2458, 6
        %v2461 = vshll.u32 %v1081, 16
        %v2463 = vrot.slane %v2461, 7
        %v2464 = vor.u32 %v2460, %v2463
        %v2465 = vsel %vm2453, %v2456, %v2464
        %v2467 = vshrl.u32 %v1082, 16
        %v2469 = vrot.slane %v2467, 6
        %v2470 = vshll.u32 %v1082, 16
        %v2472 = vrot.slane %v2470, 7
        %v2473 = vor.u32 %v2469, %v2472
        %v2474 = vsel %vm2453, %v2464, %v2473
        %v2476 = vshrl.u32 %v1083, 16
        %v2478 = vrot.slane %v2476, 6
        %v2479 = vshll.u32 %v1083, 16
        %v2481 = vrot.slane %v2479, 7
        %v2482 = vor.u32 %v2478, %v2481
        %v2483 = vsel %vm2453, %v2473, %v2482
        %v2485 = vshrl.u32 %v1084, 16
        %v2487 = vrot.slane %v2485, 6
        %v2488 = vshll.u32 %v1084, 16
        %v2490 = vrot.slane %v2488, 7
        %v2491 = vor.u32 %v2487, %v2490
        %v2492 = vsel %vm2453, %v2482, %v2491
        %v2494 = vshrl.u32 %v1085, 16
        %v2496 = vrot.slane %v2494, 6
        %v2497 = vshll.u32 %v1085, 16
        %v2499 = vrot.slane %v2497, 7
        %v2500 = vor.u32 %v2496, %v2499
        %v2501 = vsel %vm2453, %v2491, %v2500
        %v2503 = vshrl.u32 %v1086, 16
        %v2505 = vrot.slane %v2503, 6
        %v2506 = vshll.u32 %v1086, 16
        %v2508 = vrot.slane %v2506, 7
        %v2509 = vor.u32 %v2505, %v2508
        %v2510 = vsel %vm2453, %v2500, %v2509
        %v2533 = vunpack.c.l.b16 %v2437
        %v2534 = vunpack.c.l.b16 %v2438
        %v2535 = vunpack.c.l.b16 %v2439
        %v2536 = vunpack.c.l.b16 %v2440
        %v2537 = vunpack.c.l.b16 %v2441
        %v2538 = vunpack.c.l.b16 %v2442
        %v2539 = vunpack.c.l.b16 %v2443
        %v2540 = vunpack.c.l.b16 %v2444
        %v2541 = vunpack.c.l.b16 %v2445
        %v2542 = vunpack.c.l.b16 %v2446
        %v2543 = vunpack.c.l.b16 %v2447
        %v2544 = vunpack.c.l.b16 %v2448
        %v2545 = vunpack.c.l.b16 %v2449
        %v2546 = vunpack.c.l.b16 %v2450
        %v2547 = vunpack.c.l.b16 %v2451
        %v2548 = vunpack.c.l.b16 %v2452
        %v2549 = vpack.c.b16 %v2534, %v2533
        %v2550 = vpack.c.b16 %v2536, %v2535
        %v2551 = vpack.c.b16 %v2538, %v2537
        %v2552 = vpack.c.b16 %v2540, %v2539
        %v2553 = vpack.c.b16 %v2542, %v2541
        %v2554 = vpack.c.b16 %v2544, %v2543
        %v2555 = vpack.c.b16 %v2546, %v2545
        %v2556 = vpack.c.b16 %v2548, %v2547
        %2565 = vmatprep.subr.bf16.mxu0 0
        %2566 = vmatpush1.bf16.msra.mxu0 %v2549
        %2567 = vmatprep.subr.bf16.mxu0 0
        %2568 = vmatpush1.bf16.msra.mxu0 %v2550
        %2569 = vmatprep.subr.bf16.mxu0 0
        %2570 = vmatpush1.bf16.msra.mxu0 %v2551
        %2571 = vmatprep.subr.bf16.mxu0 0
        %2572 = vmatpush1.bf16.msra.mxu0 %v2552
        %2573 = vmatprep.subr.bf16.mxu0 0
        %2574 = vmatpush1.bf16.msra.mxu0 %v2553
        %2575 = vmatprep.subr.bf16.mxu0 0
        %2576 = vmatpush1.bf16.msra.mxu0 %v2554
        %2577 = vmatprep.subr.bf16.mxu0 0
        %2578 = vmatpush1.bf16.msra.mxu0 %v2555
        %2579 = vmatprep.subr.bf16.mxu0 0
        %2580 = vmatpush1.bf16.msra.mxu0 %v2556
        %2581 = vmatprep.subr.bf16.mxu0 0
        %2582 = vmatpush1.bf16.msra.mxu0 0
        %2583 = vmatprep.subr.bf16.mxu0 0
        %2584 = vmatpush1.bf16.msra.mxu0 0
        %2585 = vmatprep.subr.bf16.mxu0 0
        %2586 = vmatpush1.bf16.msra.mxu0 0
        %2587 = vmatprep.subr.bf16.mxu0 0
        %2588 = vmatpush1.bf16.msra.mxu0 0
        %2589 = vmatprep.subr.bf16.mxu0 0
        %2590 = vmatpush1.bf16.msra.mxu0 0
        %2591 = vmatprep.subr.bf16.mxu0 0
        %2592 = vmatpush1.bf16.msra.mxu0 0
        %2593 = vmatprep.subr.bf16.mxu0 0
        %2594 = vmatpush1.bf16.msra.mxu0 0
        %2595 = vmatprep.subr.bf16.mxu0 0
        %2596 = vmatpush1.bf16.msra.mxu0 0
        %2597 = vmatprep.mubr.bf16.mxu0 0
        %2598 = vmatmul.mubr.bf16.gmra.mrb[0].mxu0 %v2465
        %v2599 = vpop.f32.mrb[0].mxu0
        %v2600 = vadd.f32 0.0, %v2599
        %v2601 = vpop.f32.mrb[0].mxu0
        %v2602 = vpop.f32.mrb[0].mxu0
        %v2603 = vadd.f32 0.0, %v2602
        %v2604 = vpop.f32.mrb[0].mxu0
        %2605 = vmatprep.mubr.bf16.mxu0 0
        %2606 = vmatmul.mubr.bf16.gmra.mrb[0].mxu0 %v2474
        %v2607 = vpop.f32.mrb[0].mxu0
        %v2608 = vadd.f32 0.0, %v2607
        %v2609 = vpop.f32.mrb[0].mxu0
        %v2610 = vpop.f32.mrb[0].mxu0
        %v2611 = vadd.f32 0.0, %v2610
        %v2612 = vpop.f32.mrb[0].mxu0
        %2613 = vmatprep.mubr.bf16.mxu0 0
        %2614 = vmatmul.mubr.bf16.gmra.mrb[0].mxu0 %v2483
        %v2615 = vpop.f32.mrb[0].mxu0
        %v2616 = vadd.f32 0.0, %v2615
        %v2617 = vpop.f32.mrb[0].mxu0
        %v2618 = vpop.f32.mrb[0].mxu0
        %v2619 = vadd.f32 0.0, %v2618
        %v2620 = vpop.f32.mrb[0].mxu0
        %2621 = vmatprep.mubr.bf16.mxu0 0
        %2622 = vmatmul.mubr.bf16.gmra.mrb[0].mxu0 %v2492
        %v2623 = vpop.f32.mrb[0].mxu0
        %v2624 = vadd.f32 0.0, %v2623
        %v2625 = vpop.f32.mrb[0].mxu0
        %v2626 = vpop.f32.mrb[0].mxu0
        %v2627 = vadd.f32 0.0, %v2626
        %v2628 = vpop.f32.mrb[0].mxu0
        %2629 = vmatprep.mubr.bf16.mxu0 0
        %2630 = vmatmul.mubr.bf16.gmra.mrb[0].mxu0 %v2501
        %v2631 = vpop.f32.mrb[0].mxu0
        %v2632 = vadd.f32 0.0, %v2631
        %v2633 = vpop.f32.mrb[0].mxu0
        %v2634 = vpop.f32.mrb[0].mxu0
        %v2635 = vadd.f32 0.0, %v2634
        %v2636 = vpop.f32.mrb[0].mxu0
        %2637 = vmatprep.mubr.bf16.mxu0 0
        %2638 = vmatmul.mubr.bf16.gmra.mrb[0].mxu0 %v2510
        %v2639 = vpop.f32.mrb[0].mxu0
        %v2640 = vadd.f32 0.0, %v2639
        %v2641 = vpop.f32.mrb[0].mxu0
        %v2642 = vpop.f32.mrb[0].mxu0
        %v2643 = vadd.f32 0.0, %v2642
        %v2644 = vpop.f32.mrb[0].mxu0
        %2645 = vdwg.mxu0
        %v2646 = vadd.f32 %v2424, %v2600
        %v2647 = vadd.f32 %v2425, %v2603
        %v2648 = vadd.f32 %v2426, %v2608
        %v2649 = vadd.f32 %v2427, %v2611
        %v2650 = vadd.f32 %v2428, %v2616
        %v2651 = vadd.f32 %v2429, %v2619
        %v2652 = vadd.f32 %v2430, %v2624
        %v2653 = vadd.f32 %v2431, %v2627
        %v2654 = vadd.f32 %v2432, %v2632
        %v2655 = vadd.f32 %v2433, %v2635
        %v2656 = vadd.f32 %v2434, %v2640
        %v2657 = vadd.f32 %v2435, %v2643
        %s2658 = scalar_lea.vmem [#allocation6], 512
        %v2659 = vld [vmem:[%s2658] sm:$0xf]
        %v2660 = vld [vmem:[%s2658 + $0x4] sm:$0xf]
        %v2661 = vld [vmem:[%s2658 + $0x8] sm:$0xf]
        %v2662 = vld [vmem:[%s2658 + $0xc] sm:$0xf]
        %v2663 = vld [vmem:[%s2658 + $0x10] sm:$0xf]
        %v2664 = vld [vmem:[%s2658 + $0x14] sm:$0xf]
        %v2665 = vld [vmem:[%s2658 + $0x18] sm:$0xf]
        %v2666 = vld [vmem:[%s2658 + $0x1c] sm:$0xf]
        %v2667 = vld [vmem:[%s2658 + $0x20] sm:$0xf]
        %v2668 = vld [vmem:[%s2658 + $0x24] sm:$0xf]
        %v2669 = vld [vmem:[%s2658 + $0x28] sm:$0xf]
        %v2670 = vld [vmem:[%s2658 + $0x2c] sm:$0xf]
        %v2671 = vld [vmem:[%s2658 + $0x30] sm:$0xf]
        %v2672 = vld [vmem:[%s2658 + $0x34] sm:$0xf]
        %v2673 = vld [vmem:[%s2658 + $0x38] sm:$0xf]
        %v2674 = vld [vmem:[%s2658 + $0x3c] sm:$0xf]
        %vm2681 = vcmask 1042432
        %v2682 = vrot.slane %v1062, 5
        %v2683 = vrot.slane %v1063, 5
        %v2684 = vsel %vm2681, %v2682, %v2683
        %v2685 = vrot.slane %v1064, 5
        %v2686 = vsel %vm2681, %v2683, %v2685
        %v2687 = vrot.slane %v1065, 5
        %v2688 = vsel %vm2681, %v2685, %v2687
        %v2689 = vrot.slane %v1066, 5
        %v2690 = vsel %vm2681, %v2687, %v2689
        %v2691 = vrot.slane %v1067, 5
        %v2692 = vsel %vm2681, %v2689, %v2691
        %v2693 = vrot.slane %v1068, 5
        %v2694 = vsel %vm2681, %v2691, %v2693
        %v2717 = vunpack.c.l.b16 %v2659
        %v2718 = vunpack.c.l.b16 %v2660
        %v2719 = vunpack.c.l.b16 %v2661
        %v2720 = vunpack.c.l.b16 %v2662
        %v2721 = vunpack.c.l.b16 %v2663
        %v2722 = vunpack.c.l.b16 %v2664
        %v2723 = vunpack.c.l.b16 %v2665
        %v2724 = vunpack.c.l.b16 %v2666
        %v2725 = vunpack.c.l.b16 %v2667
        %v2726 = vunpack.c.l.b16 %v2668
        %v2727 = vunpack.c.l.b16 %v2669
        %v2728 = vunpack.c.l.b16 %v2670
        %v2729 = vunpack.c.l.b16 %v2671
        %v2730 = vunpack.c.l.b16 %v2672
        %v2731 = vunpack.c.l.b16 %v2673
        %v2732 = vunpack.c.l.b16 %v2674
        %v2733 = vpack.c.b16 %v2718, %v2717
        %v2734 = vpack.c.b16 %v2720, %v2719
        %v2735 = vpack.c.b16 %v2722, %v2721
        %v2736 = vpack.c.b16 %v2724, %v2723
        %v2737 = vpack.c.b16 %v2726, %v2725
        %v2738 = vpack.c.b16 %v2728, %v2727
        %v2739 = vpack.c.b16 %v2730, %v2729
        %v2740 = vpack.c.b16 %v2732, %v2731
        %2749 = vmatprep.subr.bf16.mxu0 0
        %2750 = vmatpush1.bf16.msra.mxu0 %v2733
        %2751 = vmatprep.subr.bf16.mxu0 0
        %2752 = vmatpush1.bf16.msra.mxu0 %v2734
        %2753 = vmatprep.subr.bf16.mxu0 0
        %2754 = vmatpush1.bf16.msra.mxu0 %v2735
        %2755 = vmatprep.subr.bf16.mxu0 0
        %2756 = vmatpush1.bf16.msra.mxu0 %v2736
        %2757 = vmatprep.subr.bf16.mxu0 0
        %2758 = vmatpush1.bf16.msra.mxu0 %v2737
        %2759 = vmatprep.subr.bf16.mxu0 0
        %2760 = vmatpush1.bf16.msra.mxu0 %v2738
        %2761 = vmatprep.subr.bf16.mxu0 0
        %2762 = vmatpush1.bf16.msra.mxu0 %v2739
        %2763 = vmatprep.subr.bf16.mxu0 0
        %2764 = vmatpush1.bf16.msra.mxu0 %v2740
        %2765 = vmatprep.subr.bf16.mxu0 0
        %2766 = vmatpush1.bf16.msra.mxu0 0
        %2767 = vmatprep.subr.bf16.mxu0 0
        %2768 = vmatpush1.bf16.msra.mxu0 0
        %2769 = vmatprep.subr.bf16.mxu0 0
        %2770 = vmatpush1.bf16.msra.mxu0 0
        %2771 = vmatprep.subr.bf16.mxu0 0
        %2772 = vmatpush1.bf16.msra.mxu0 0
        %2773 = vmatprep.subr.bf16.mxu0 0
        %2774 = vmatpush1.bf16.msra.mxu0 0
        %2775 = vmatprep.subr.bf16.mxu0 0
        %2776 = vmatpush1.bf16.msra.mxu0 0
        %2777 = vmatprep.subr.bf16.mxu0 0
        %2778 = vmatpush1.bf16.msra.mxu0 0
        %2779 = vmatprep.subr.bf16.mxu0 0
        %2780 = vmatpush1.bf16.msra.mxu0 0
        %2781 = vmatprep.mubr.bf16.mxu0 0
        %2782 = vmatmul.mubr.bf16.gmra.mrb[0].mxu0 %v2684
        %v2783 = vpop.f32.mrb[0].mxu0
        %v2784 = vadd.f32 0.0, %v2783
        %v2785 = vpop.f32.mrb[0].mxu0
        %v2786 = vpop.f32.mrb[0].mxu0
        %v2787 = vadd.f32 0.0, %v2786
        %v2788 = vpop.f32.mrb[0].mxu0
        %2789 = vmatprep.mubr.bf16.mxu0 0
        %2790 = vmatmul.mubr.bf16.gmra.mrb[0].mxu0 %v2686
        %v2791 = vpop.f32.mrb[0].mxu0
        %v2792 = vadd.f32 0.0, %v2791
        %v2793 = vpop.f32.mrb[0].mxu0
        %v2794 = vpop.f32.mrb[0].mxu0
        %v2795 = vadd.f32 0.0, %v2794
        %v2796 = vpop.f32.mrb[0].mxu0
        %2797 = vmatprep.mubr.bf16.mxu0 0
        %2798 = vmatmul.mubr.bf16.gmra.mrb[0].mxu0 %v2688
        %v2799 = vpop.f32.mrb[0].mxu0
        %v2800 = vadd.f32 0.0, %v2799
        %v2801 = vpop.f32.mrb[0].mxu0
        %v2802 = vpop.f32.mrb[0].mxu0
        %v2803 = vadd.f32 0.0, %v2802
        %v2804 = vpop.f32.mrb[0].mxu0
        %2805 = vmatprep.mubr.bf16.mxu0 0
        %2806 = vmatmul.mubr.bf16.gmra.mrb[0].mxu0 %v2690
        %v2807 = vpop.f32.mrb[0].mxu0
        %v2808 = vadd.f32 0.0, %v2807
        %v2809 = vpop.f32.mrb[0].mxu0
        %v2810 = vpop.f32.mrb[0].mxu0
        %v2811 = vadd.f32 0.0, %v2810
        %v2812 = vpop.f32.mrb[0].mxu0
        %2813 = vmatprep.mubr.bf16.mxu0 0
        %2814 = vmatmul.mubr.bf16.gmra.mrb[0].mxu0 %v2692
        %v2815 = vpop.f32.mrb[0].mxu0
        %v2816 = vadd.f32 0.0, %v2815
        %v2817 = vpop.f32.mrb[0].mxu0
        %v2818 = vpop.f32.mrb[0].mxu0
        %v2819 = vadd.f32 0.0, %v2818
        %v2820 = vpop.f32.mrb[0].mxu0
        %2821 = vmatprep.mubr.bf16.mxu0 0
        %2822 = vmatmul.mubr.bf16.gmra.mrb[0].mxu0 %v2694
        %v2823 = vpop.f32.mrb[0].mxu0
        %v2824 = vadd.f32 0.0, %v2823
        %v2825 = vpop.f32.mrb[0].mxu0
        %v2826 = vpop.f32.mrb[0].mxu0
        %v2827 = vadd.f32 0.0, %v2826
        %v2828 = vpop.f32.mrb[0].mxu0
        %2829 = vdwg.mxu0
        %v2830 = vadd.f32 %v2646, %v2784
        %v2831 = vadd.f32 %v2647, %v2787
        %v2832 = vadd.f32 %v2648, %v2792
        %v2833 = vadd.f32 %v2649, %v2795
        %v2834 = vadd.f32 %v2650, %v2800
        %v2835 = vadd.f32 %v2651, %v2803
        %v2836 = vadd.f32 %v2652, %v2808
        %v2837 = vadd.f32 %v2653, %v2811
        %v2838 = vadd.f32 %v2654, %v2816
        %v2839 = vadd.f32 %v2655, %v2819
        %v2840 = vadd.f32 %v2656, %v2824
        %v2841 = vadd.f32 %v2657, %v2827
        %s2842 = scalar_lea.vmem [#allocation6], 576
        %v2843 = vld [vmem:[%s2842] sm:$0xf]
        %v2844 = vld [vmem:[%s2842 + $0x4] sm:$0xf]
        %v2845 = vld [vmem:[%s2842 + $0x8] sm:$0xf]
        %v2846 = vld [vmem:[%s2842 + $0xc] sm:$0xf]
        %v2847 = vld [vmem:[%s2842 + $0x10] sm:$0xf]
        %v2848 = vld [vmem:[%s2842 + $0x14] sm:$0xf]
        %v2849 = vld [vmem:[%s2842 + $0x18] sm:$0xf]
        %v2850 = vld [vmem:[%s2842 + $0x1c] sm:$0xf]
        %v2851 = vld [vmem:[%s2842 + $0x20] sm:$0xf]
        %v2852 = vld [vmem:[%s2842 + $0x24] sm:$0xf]
        %v2853 = vld [vmem:[%s2842 + $0x28] sm:$0xf]
        %v2854 = vld [vmem:[%s2842 + $0x2c] sm:$0xf]
        %v2855 = vld [vmem:[%s2842 + $0x30] sm:$0xf]
        %v2856 = vld [vmem:[%s2842 + $0x34] sm:$0xf]
        %v2857 = vld [vmem:[%s2842 + $0x38] sm:$0xf]
        %v2858 = vld [vmem:[%s2842 + $0x3c] sm:$0xf]
        %vm2859 = vcmask 1040384
        %v2860 = vrot.slane %v1068, 7
        %v2861 = vrot.slane %v1069, 7
        %v2862 = vsel %vm2859, %v2860, %v2861
        %v2863 = vrot.slane %v1070, 7
        %v2864 = vsel %vm2859, %v2861, %v2863
        %v2865 = vrot.slane %v1071, 7
        %v2866 = vsel %vm2859, %v2863, %v2865
        %v2867 = vrot.slane %v1072, 7
        %v2868 = vsel %vm2859, %v2865, %v2867
        %v2869 = vrot.slane %v1073, 7
        %v2870 = vsel %vm2859, %v2867, %v2869
        %v2871 = vrot.slane %v1074, 7
        %v2872 = vsel %vm2859, %v2869, %v2871
        %v2895 = vunpack.c.l.b16 %v2843
        %v2896 = vunpack.c.l.b16 %v2844
        %v2897 = vunpack.c.l.b16 %v2845
        %v2898 = vunpack.c.l.b16 %v2846
        %v2899 = vunpack.c.l.b16 %v2847
        %v2900 = vunpack.c.l.b16 %v2848
        %v2901 = vunpack.c.l.b16 %v2849
        %v2902 = vunpack.c.l.b16 %v2850
        %v2903 = vunpack.c.l.b16 %v2851
        %v2904 = vunpack.c.l.b16 %v2852
        %v2905 = vunpack.c.l.b16 %v2853
        %v2906 = vunpack.c.l.b16 %v2854
        %v2907 = vunpack.c.l.b16 %v2855
        %v2908 = vunpack.c.l.b16 %v2856
        %v2909 = vunpack.c.l.b16 %v2857
        %v2910 = vunpack.c.l.b16 %v2858
        %v2911 = vpack.c.b16 %v2896, %v2895
        %v2912 = vpack.c.b16 %v2898, %v2897
        %v2913 = vpack.c.b16 %v2900, %v2899
        %v2914 = vpack.c.b16 %v2902, %v2901
        %v2915 = vpack.c.b16 %v2904, %v2903
        %v2916 = vpack.c.b16 %v2906, %v2905
        %v2917 = vpack.c.b16 %v2908, %v2907
        %v2918 = vpack.c.b16 %v2910, %v2909
        %2927 = vmatprep.subr.bf16.mxu0 0
        %2928 = vmatpush1.bf16.msra.mxu0 %v2911
        %2929 = vmatprep.subr.bf16.mxu0 0
        %2930 = vmatpush1.bf16.msra.mxu0 %v2912
        %2931 = vmatprep.subr.bf16.mxu0 0
        %2932 = vmatpush1.bf16.msra.mxu0 %v2913
        %2933 = vmatprep.subr.bf16.mxu0 0
        %2934 = vmatpush1.bf16.msra.mxu0 %v2914
        %2935 = vmatprep.subr.bf16.mxu0 0
        %2936 = vmatpush1.bf16.msra.mxu0 %v2915
        %2937 = vmatprep.subr.bf16.mxu0 0
        %2938 = vmatpush1.bf16.msra.mxu0 %v2916
        %2939 = vmatprep.subr.bf16.mxu0 0
        %2940 = vmatpush1.bf16.msra.mxu0 %v2917
        %2941 = vmatprep.subr.bf16.mxu0 0
        %2942 = vmatpush1.bf16.msra.mxu0 %v2918
        %2943 = vmatprep.subr.bf16.mxu0 0
        %2944 = vmatpush1.bf16.msra.mxu0 0
        %2945 = vmatprep.subr.bf16.mxu0 0
        %2946 = vmatpush1.bf16.msra.mxu0 0
        %2947 = vmatprep.subr.bf16.mxu0 0
        %2948 = vmatpush1.bf16.msra.mxu0 0
        %2949 = vmatprep.subr.bf16.mxu0 0
        %2950 = vmatpush1.bf16.msra.mxu0 0
        %2951 = vmatprep.subr.bf16.mxu0 0
        %2952 = vmatpush1.bf16.msra.mxu0 0
        %2953 = vmatprep.subr.bf16.mxu0 0
        %2954 = vmatpush1.bf16.msra.mxu0 0
        %2955 = vmatprep.subr.bf16.mxu0 0
        %2956 = vmatpush1.bf16.msra.mxu0 0
        %2957 = vmatprep.subr.bf16.mxu0 0
        %2958 = vmatpush1.bf16.msra.mxu0 0
        %2959 = vmatprep.mubr.bf16.mxu0 0
        %2960 = vmatmul.mubr.bf16.gmra.mrb[0].mxu0 %v2862
        %v2961 = vpop.f32.mrb[0].mxu0
        %v2962 = vadd.f32 0.0, %v2961
        %v2963 = vpop.f32.mrb[0].mxu0
        %v2964 = vpop.f32.mrb[0].mxu0
        %v2965 = vadd.f32 0.0, %v2964
        %v2966 = vpop.f32.mrb[0].mxu0
        %2967 = vmatprep.mubr.bf16.mxu0 0
        %2968 = vmatmul.mubr.bf16.gmra.mrb[0].mxu0 %v2864
        %v2969 = vpop.f32.mrb[0].mxu0
        %v2970 = vadd.f32 0.0, %v2969
        %v2971 = vpop.f32.mrb[0].mxu0
        %v2972 = vpop.f32.mrb[0].mxu0
        %v2973 = vadd.f32 0.0, %v2972
        %v2974 = vpop.f32.mrb[0].mxu0
        %2975 = vmatprep.mubr.bf16.mxu0 0
        %2976 = vmatmul.mubr.bf16.gmra.mrb[0].mxu0 %v2866
        %v2977 = vpop.f32.mrb[0].mxu0
        %v2978 = vadd.f32 0.0, %v2977
        %v2979 = vpop.f32.mrb[0].mxu0
        %v2980 = vpop.f32.mrb[0].mxu0
        %v2981 = vadd.f32 0.0, %v2980
        %v2982 = vpop.f32.mrb[0].mxu0
        %2983 = vmatprep.mubr.bf16.mxu0 0
        %2984 = vmatmul.mubr.bf16.gmra.mrb[0].mxu0 %v2868
        %v2985 = vpop.f32.mrb[0].mxu0
        %v2986 = vadd.f32 0.0, %v2985
        %v2987 = vpop.f32.mrb[0].mxu0
        %v2988 = vpop.f32.mrb[0].mxu0
        %v2989 = vadd.f32 0.0, %v2988
        %v2990 = vpop.f32.mrb[0].mxu0
        %2991 = vmatprep.mubr.bf16.mxu0 0
        %2992 = vmatmul.mubr.bf16.gmra.mrb[0].mxu0 %v2870
        %v2993 = vpop.f32.mrb[0].mxu0
        %v2994 = vadd.f32 0.0, %v2993
        %v2995 = vpop.f32.mrb[0].mxu0
        %v2996 = vpop.f32.mrb[0].mxu0
        %v2997 = vadd.f32 0.0, %v2996
        %v2998 = vpop.f32.mrb[0].mxu0
        %2999 = vmatprep.mubr.bf16.mxu0 0
        %3000 = vmatmul.mubr.bf16.gmra.mrb[0].mxu0 %v2872
        %v3001 = vpop.f32.mrb[0].mxu0
        %v3002 = vadd.f32 0.0, %v3001
        %v3003 = vpop.f32.mrb[0].mxu0
        %v3004 = vpop.f32.mrb[0].mxu0
        %v3005 = vadd.f32 0.0, %v3004
        %v3006 = vpop.f32.mrb[0].mxu0
        %3007 = vdwg.mxu0
        %v3008 = vadd.f32 %v2830, %v2962
        %v3009 = vadd.f32 %v2831, %v2965
        %v3010 = vadd.f32 %v2832, %v2970
        %v3011 = vadd.f32 %v2833, %v2973
        %v3012 = vadd.f32 %v2834, %v2978
        %v3013 = vadd.f32 %v2835, %v2981
        %v3014 = vadd.f32 %v2836, %v2986
        %v3015 = vadd.f32 %v2837, %v2989
        %v3016 = vadd.f32 %v2838, %v2994
        %v3017 = vadd.f32 %v2839, %v2997
        %v3018 = vadd.f32 %v2840, %v3002
        %v3019 = vadd.f32 %v2841, %v3005
        %s3020 = scalar_lea.vmem [#allocation6], 640
        %v3021 = vld [vmem:[%s3020] sm:$0xf]
        %v3022 = vld [vmem:[%s3020 + $0x4] sm:$0xf]
        %v3023 = vld [vmem:[%s3020 + $0x8] sm:$0xf]
        %v3024 = vld [vmem:[%s3020 + $0xc] sm:$0xf]
        %v3025 = vld [vmem:[%s3020 + $0x10] sm:$0xf]
        %v3026 = vld [vmem:[%s3020 + $0x14] sm:$0xf]
        %v3027 = vld [vmem:[%s3020 + $0x18] sm:$0xf]
        %v3028 = vld [vmem:[%s3020 + $0x1c] sm:$0xf]
        %v3029 = vld [vmem:[%s3020 + $0x20] sm:$0xf]
        %v3030 = vld [vmem:[%s3020 + $0x24] sm:$0xf]
        %v3031 = vld [vmem:[%s3020 + $0x28] sm:$0xf]
        %v3032 = vld [vmem:[%s3020 + $0x2c] sm:$0xf]
        %v3033 = vld [vmem:[%s3020 + $0x30] sm:$0xf]
        %v3034 = vld [vmem:[%s3020 + $0x34] sm:$0xf]
        %v3035 = vld [vmem:[%s3020 + $0x38] sm:$0xf]
        %v3036 = vld [vmem:[%s3020 + $0x3c] sm:$0xf]
        %vm3037 = vsmask.f32 2304
        %v3038 = vrot.slane %v1424, 5
        %v3039 = vrot.slane %v1426, 6
        %v3040 = vor.u32 %v3038, %v3039
        %v3041 = vrot.slane %v1435, 5
        %v3042 = vrot.slane %v1431, 6
        %v3043 = vor.u32 %v3041, %v3042
        %v3044 = vsel %vm3037, %v3040, %v3043
        %v3045 = vrot.slane %v1443, 5
        %v3046 = vrot.slane %v1439, 6
        %v3047 = vor.u32 %v3045, %v3046
        %v3048 = vsel %vm3037, %v3043, %v3047
        %v3049 = vrot.slane %v1451, 5
        %v3050 = vrot.slane %v1447, 6
        %v3051 = vor.u32 %v3049, %v3050
        %v3052 = vsel %vm3037, %v3047, %v3051
        %v3053 = vrot.slane %v1459, 5
        %v3054 = vrot.slane %v1455, 6
        %v3055 = vor.u32 %v3053, %v3054
        %v3056 = vsel %vm3037, %v3051, %v3055
        %v3057 = vrot.slane %v1467, 5
        %v3058 = vrot.slane %v1463, 6
        %v3059 = vor.u32 %v3057, %v3058
        %v3060 = vsel %vm3037, %v3055, %v3059
        %v3061 = vrot.slane %v1640, 5
        %v3062 = vrot.slane %v1471, 6
        %v3063 = vor.u32 %v3061, %v3062
        %v3064 = vsel %vm3037, %v3059, %v3063
        %v3087 = vunpack.c.l.b16 %v3021
        %v3088 = vunpack.c.l.b16 %v3022
        %v3089 = vunpack.c.l.b16 %v3023
        %v3090 = vunpack.c.l.b16 %v3024
        %v3091 = vunpack.c.l.b16 %v3025
        %v3092 = vunpack.c.l.b16 %v3026
        %v3093 = vunpack.c.l.b16 %v3027
        %v3094 = vunpack.c.l.b16 %v3028
        %v3095 = vunpack.c.l.b16 %v3029
        %v3096 = vunpack.c.l.b16 %v3030
        %v3097 = vunpack.c.l.b16 %v3031
        %v3098 = vunpack.c.l.b16 %v3032
        %v3099 = vunpack.c.l.b16 %v3033
        %v3100 = vunpack.c.l.b16 %v3034
        %v3101 = vunpack.c.l.b16 %v3035
        %v3102 = vunpack.c.l.b16 %v3036
        %v3103 = vpack.c.b16 %v3088, %v3087
        %v3104 = vpack.c.b16 %v3090, %v3089
        %v3105 = vpack.c.b16 %v3092, %v3091
        %v3106 = vpack.c.b16 %v3094, %v3093
        %v3107 = vpack.c.b16 %v3096, %v3095
        %v3108 = vpack.c.b16 %v3098, %v3097
        %v3109 = vpack.c.b16 %v3100, %v3099
        %v3110 = vpack.c.b16 %v3102, %v3101
        %3119 = vmatprep.subr.bf16.mxu0 0
        %3120 = vmatpush1.bf16.msra.mxu0 %v3103
        %3121 = vmatprep.subr.bf16.mxu0 0
        %3122 = vmatpush1.bf16.msra.mxu0 %v3104
        %3123 = vmatprep.subr.bf16.mxu0 0
        %3124 = vmatpush1.bf16.msra.mxu0 %v3105
        %3125 = vmatprep.subr.bf16.mxu0 0
        %3126 = vmatpush1.bf16.msra.mxu0 %v3106
        %3127 = vmatprep.subr.bf16.mxu0 0
        %3128 = vmatpush1.bf16.msra.mxu0 %v3107
        %3129 = vmatprep.subr.bf16.mxu0 0
        %3130 = vmatpush1.bf16.msra.mxu0 %v3108
        %3131 = vmatprep.subr.bf16.mxu0 0
        %3132 = vmatpush1.bf16.msra.mxu0 %v3109
        %3133 = vmatprep.subr.bf16.mxu0 0
        %3134 = vmatpush1.bf16.msra.mxu0 %v3110
        %3135 = vmatprep.subr.bf16.mxu0 0
        %3136 = vmatpush1.bf16.msra.mxu0 0
        %3137 = vmatprep.subr.bf16.mxu0 0
        %3138 = vmatpush1.bf16.msra.mxu0 0
        %3139 = vmatprep.subr.bf16.mxu0 0
        %3140 = vmatpush1.bf16.msra.mxu0 0
        %3141 = vmatprep.subr.bf16.mxu0 0
        %3142 = vmatpush1.bf16.msra.mxu0 0
        %3143 = vmatprep.subr.bf16.mxu0 0
        %3144 = vmatpush1.bf16.msra.mxu0 0
        %3145 = vmatprep.subr.bf16.mxu0 0
        %3146 = vmatpush1.bf16.msra.mxu0 0
        %3147 = vmatprep.subr.bf16.mxu0 0
        %3148 = vmatpush1.bf16.msra.mxu0 0
        %3149 = vmatprep.subr.bf16.mxu0 0
        %3150 = vmatpush1.bf16.msra.mxu0 0
        %3151 = vmatprep.mubr.bf16.mxu0 0
        %3152 = vmatmul.mubr.bf16.gmra.mrb[0].mxu0 %v3044
        %v3153 = vpop.f32.mrb[0].mxu0
        %v3154 = vadd.f32 0.0, %v3153
        %v3155 = vpop.f32.mrb[0].mxu0
        %v3156 = vpop.f32.mrb[0].mxu0
        %v3157 = vadd.f32 0.0, %v3156
        %v3158 = vpop.f32.mrb[0].mxu0
        %3159 = vmatprep.mubr.bf16.mxu0 0
        %3160 = vmatmul.mubr.bf16.gmra.mrb[0].mxu0 %v3048
        %v3161 = vpop.f32.mrb[0].mxu0
        %v3162 = vadd.f32 0.0, %v3161
        %v3163 = vpop.f32.mrb[0].mxu0
        %v3164 = vpop.f32.mrb[0].mxu0
        %v3165 = vadd.f32 0.0, %v3164
        %v3166 = vpop.f32.mrb[0].mxu0
        %3167 = vmatprep.mubr.bf16.mxu0 0
        %3168 = vmatmul.mubr.bf16.gmra.mrb[0].mxu0 %v3052
        %v3169 = vpop.f32.mrb[0].mxu0
        %v3170 = vadd.f32 0.0, %v3169
        %v3171 = vpop.f32.mrb[0].mxu0
        %v3172 = vpop.f32.mrb[0].mxu0
        %v3173 = vadd.f32 0.0, %v3172
        %v3174 = vpop.f32.mrb[0].mxu0
        %3175 = vmatprep.mubr.bf16.mxu0 0
        %3176 = vmatmul.mubr.bf16.gmra.mrb[0].mxu0 %v3056
        %v3177 = vpop.f32.mrb[0].mxu0
        %v3178 = vadd.f32 0.0, %v3177
        %v3179 = vpop.f32.mrb[0].mxu0
        %v3180 = vpop.f32.mrb[0].mxu0
        %v3181 = vadd.f32 0.0, %v3180
        %v3182 = vpop.f32.mrb[0].mxu0
        %3183 = vmatprep.mubr.bf16.mxu0 0
        %3184 = vmatmul.mubr.bf16.gmra.mrb[0].mxu0 %v3060
        %v3185 = vpop.f32.mrb[0].mxu0
        %v3186 = vadd.f32 0.0, %v3185
        %v3187 = vpop.f32.mrb[0].mxu0
        %v3188 = vpop.f32.mrb[0].mxu0
        %v3189 = vadd.f32 0.0, %v3188
        %v3190 = vpop.f32.mrb[0].mxu0
        %3191 = vmatprep.mubr.bf16.mxu0 0
        %3192 = vmatmul.mubr.bf16.gmra.mrb[0].mxu0 %v3064
        %v3193 = vpop.f32.mrb[0].mxu0
        %v3194 = vadd.f32 0.0, %v3193
        %v3195 = vpop.f32.mrb[0].mxu0
        %v3196 = vpop.f32.mrb[0].mxu0
        %v3197 = vadd.f32 0.0, %v3196
        %v3198 = vpop.f32.mrb[0].mxu0
        %3199 = vdwg.mxu0
        %v3200 = vadd.f32 %v3008, %v3154
        %v3201 = vadd.f32 %v3009, %v3157
        %v3202 = vadd.f32 %v3010, %v3162
        %v3203 = vadd.f32 %v3011, %v3165
        %v3204 = vadd.f32 %v3012, %v3170
        %v3205 = vadd.f32 %v3013, %v3173
        %v3206 = vadd.f32 %v3014, %v3178
        %v3207 = vadd.f32 %v3015, %v3181
        %v3208 = vadd.f32 %v3016, %v3186
        %v3209 = vadd.f32 %v3017, %v3189
        %v3210 = vadd.f32 %v3018, %v3194
        %v3211 = vadd.f32 %v3019, %v3197
        %s3212 = scalar_lea.vmem [#allocation6], 704
        %v3213 = vld [vmem:[%s3212] sm:$0xf]
        %v3214 = vld [vmem:[%s3212 + $0x4] sm:$0xf]
        %v3215 = vld [vmem:[%s3212 + $0x8] sm:$0xf]
        %v3216 = vld [vmem:[%s3212 + $0xc] sm:$0xf]
        %v3217 = vld [vmem:[%s3212 + $0x10] sm:$0xf]
        %v3218 = vld [vmem:[%s3212 + $0x14] sm:$0xf]
        %v3219 = vld [vmem:[%s3212 + $0x18] sm:$0xf]
        %v3220 = vld [vmem:[%s3212 + $0x1c] sm:$0xf]
        %v3221 = vld [vmem:[%s3212 + $0x20] sm:$0xf]
        %v3222 = vld [vmem:[%s3212 + $0x24] sm:$0xf]
        %v3223 = vld [vmem:[%s3212 + $0x28] sm:$0xf]
        %v3224 = vld [vmem:[%s3212 + $0x2c] sm:$0xf]
        %v3225 = vld [vmem:[%s3212 + $0x30] sm:$0xf]
        %v3226 = vld [vmem:[%s3212 + $0x34] sm:$0xf]
        %v3227 = vld [vmem:[%s3212 + $0x38] sm:$0xf]
        %v3228 = vld [vmem:[%s3212 + $0x3c] sm:$0xf]
        %vm3229 = vsmask.f32 256
        %v3230 = vrot.slane %v1640, 7
        %v3231 = vrot.slane %v1646, 7
        %v3232 = vor.u32 %v3231, %v1649
        %v3233 = vsel %vm3229, %v3230, %v3232
        %v3234 = vrot.slane %v1655, 7
        %v3235 = vor.u32 %v3234, %v1658
        %v3236 = vsel %vm3229, %v3231, %v3235
        %v3237 = vrot.slane %v1664, 7
        %v3238 = vor.u32 %v3237, %v1667
        %v3239 = vsel %vm3229, %v3234, %v3238
        %v3240 = vrot.slane %v1673, 7
        %v3241 = vor.u32 %v3240, %v1676
        %v3242 = vsel %vm3229, %v3237, %v3241
        %v3243 = vrot.slane %v1682, 7
        %v3244 = vor.u32 %v3243, %v1685
        %v3245 = vsel %vm3229, %v3240, %v3244
        %v3246 = vrot.slane %v1691, 7
        %v3247 = vor.u32 %v3246, %v1694
        %v3248 = vsel %vm3229, %v3243, %v3247
        %v3271 = vunpack.c.l.b16 %v3213
        %v3272 = vunpack.c.l.b16 %v3214
        %v3273 = vunpack.c.l.b16 %v3215
        %v3274 = vunpack.c.l.b16 %v3216
        %v3275 = vunpack.c.l.b16 %v3217
        %v3276 = vunpack.c.l.b16 %v3218
        %v3277 = vunpack.c.l.b16 %v3219
        %v3278 = vunpack.c.l.b16 %v3220
        %v3279 = vunpack.c.l.b16 %v3221
        %v3280 = vunpack.c.l.b16 %v3222
        %v3281 = vunpack.c.l.b16 %v3223
        %v3282 = vunpack.c.l.b16 %v3224
        %v3283 = vunpack.c.l.b16 %v3225
        %v3284 = vunpack.c.l.b16 %v3226
        %v3285 = vunpack.c.l.b16 %v3227
        %v3286 = vunpack.c.l.b16 %v3228
        %v3287 = vpack.c.b16 %v3272, %v3271
        %v3288 = vpack.c.b16 %v3274, %v3273
        %v3289 = vpack.c.b16 %v3276, %v3275
        %v3290 = vpack.c.b16 %v3278, %v3277
        %v3291 = vpack.c.b16 %v3280, %v3279
        %v3292 = vpack.c.b16 %v3282, %v3281
        %v3293 = vpack.c.b16 %v3284, %v3283
        %v3294 = vpack.c.b16 %v3286, %v3285
        %3303 = vmatprep.subr.bf16.mxu0 0
        %3304 = vmatpush1.bf16.msra.mxu0 %v3287
        %3305 = vmatprep.subr.bf16.mxu0 0
        %3306 = vmatpush1.bf16.msra.mxu0 %v3288
        %3307 = vmatprep.subr.bf16.mxu0 0
        %3308 = vmatpush1.bf16.msra.mxu0 %v3289
        %3309 = vmatprep.subr.bf16.mxu0 0
        %3310 = vmatpush1.bf16.msra.mxu0 %v3290
        %3311 = vmatprep.subr.bf16.mxu0 0
        %3312 = vmatpush1.bf16.msra.mxu0 %v3291
        %3313 = vmatprep.subr.bf16.mxu0 0
        %3314 = vmatpush1.bf16.msra.mxu0 %v3292
        %3315 = vmatprep.subr.bf16.mxu0 0
        %3316 = vmatpush1.bf16.msra.mxu0 %v3293
        %3317 = vmatprep.subr.bf16.mxu0 0
        %3318 = vmatpush1.bf16.msra.mxu0 %v3294
        %3319 = vmatprep.subr.bf16.mxu0 0
        %3320 = vmatpush1.bf16.msra.mxu0 0
        %3321 = vmatprep.subr.bf16.mxu0 0
        %3322 = vmatpush1.bf16.msra.mxu0 0
        %3323 = vmatprep.subr.bf16.mxu0 0
        %3324 = vmatpush1.bf16.msra.mxu0 0
        %3325 = vmatprep.subr.bf16.mxu0 0
        %3326 = vmatpush1.bf16.msra.mxu0 0
        %3327 = vmatprep.subr.bf16.mxu0 0
        %3328 = vmatpush1.bf16.msra.mxu0 0
        %3329 = vmatprep.subr.bf16.mxu0 0
        %3330 = vmatpush1.bf16.msra.mxu0 0
        %3331 = vmatprep.subr.bf16.mxu0 0
        %3332 = vmatpush1.bf16.msra.mxu0 0
        %3333 = vmatprep.subr.bf16.mxu0 0
        %3334 = vmatpush1.bf16.msra.mxu0 0
        %3335 = vmatprep.mubr.bf16.mxu0 0
        %3336 = vmatmul.mubr.bf16.gmra.mrb[0].mxu0 %v3233
        %v3337 = vpop.f32.mrb[0].mxu0
        %v3338 = vadd.f32 0.0, %v3337
        %v3339 = vpop.f32.mrb[0].mxu0
        %v3340 = vpop.f32.mrb[0].mxu0
        %v3341 = vadd.f32 0.0, %v3340
        %v3342 = vpop.f32.mrb[0].mxu0
        %3343 = vmatprep.mubr.bf16.mxu0 0
        %3344 = vmatmul.mubr.bf16.gmra.mrb[0].mxu0 %v3236
        %v3345 = vpop.f32.mrb[0].mxu0
        %v3346 = vadd.f32 0.0, %v3345
        %v3347 = vpop.f32.mrb[0].mxu0
        %v3348 = vpop.f32.mrb[0].mxu0
        %v3349 = vadd.f32 0.0, %v3348
        %v3350 = vpop.f32.mrb[0].mxu0
        %3351 = vmatprep.mubr.bf16.mxu0 0
        %3352 = vmatmul.mubr.bf16.gmra.mrb[0].mxu0 %v3239
        %v3353 = vpop.f32.mrb[0].mxu0
        %v3354 = vadd.f32 0.0, %v3353
        %v3355 = vpop.f32.mrb[0].mxu0
        %v3356 = vpop.f32.mrb[0].mxu0
        %v3357 = vadd.f32 0.0, %v3356
        %v3358 = vpop.f32.mrb[0].mxu0
        %3359 = vmatprep.mubr.bf16.mxu0 0
        %3360 = vmatmul.mubr.bf16.gmra.mrb[0].mxu0 %v3242
        %v3361 = vpop.f32.mrb[0].mxu0
        %v3362 = vadd.f32 0.0, %v3361
        %v3363 = vpop.f32.mrb[0].mxu0
        %v3364 = vpop.f32.mrb[0].mxu0
        %v3365 = vadd.f32 0.0, %v3364
        %v3366 = vpop.f32.mrb[0].mxu0
        %3367 = vmatprep.mubr.bf16.mxu0 0
        %3368 = vmatmul.mubr.bf16.gmra.mrb[0].mxu0 %v3245
        %v3369 = vpop.f32.mrb[0].mxu0
        %v3370 = vadd.f32 0.0, %v3369
        %v3371 = vpop.f32.mrb[0].mxu0
        %v3372 = vpop.f32.mrb[0].mxu0
        %v3373 = vadd.f32 0.0, %v3372
        %v3374 = vpop.f32.mrb[0].mxu0
        %3375 = vmatprep.mubr.bf16.mxu0 0
        %3376 = vmatmul.mubr.bf16.gmra.mrb[0].mxu0 %v3248
        %v3377 = vpop.f32.mrb[0].mxu0
        %v3378 = vadd.f32 0.0, %v3377
        %v3379 = vpop.f32.mrb[0].mxu0
        %v3380 = vpop.f32.mrb[0].mxu0
        %v3381 = vadd.f32 0.0, %v3380
        %v3382 = vpop.f32.mrb[0].mxu0
        %3383 = vdwg.mxu0
        %v3384 = vadd.f32 %v3200, %v3338
        %v3385 = vadd.f32 %v3201, %v3341
        %v3386 = vadd.f32 %v3202, %v3346
        %v3387 = vadd.f32 %v3203, %v3349
        %v3388 = vadd.f32 %v3204, %v3354
        %v3389 = vadd.f32 %v3205, %v3357
        %v3390 = vadd.f32 %v3206, %v3362
        %v3391 = vadd.f32 %v3207, %v3365
        %v3392 = vadd.f32 %v3208, %v3370
        %v3393 = vadd.f32 %v3209, %v3373
        %v3394 = vadd.f32 %v3210, %v3378
        %v3395 = vadd.f32 %v3211, %v3381
        %s3396 = scalar_lea.vmem [#allocation6], 768
        %v3397 = vld [vmem:[%s3396] sm:$0xf]
        %v3398 = vld [vmem:[%s3396 + $0x4] sm:$0xf]
        %v3399 = vld [vmem:[%s3396 + $0x8] sm:$0xf]
        %v3400 = vld [vmem:[%s3396 + $0xc] sm:$0xf]
        %v3401 = vld [vmem:[%s3396 + $0x10] sm:$0xf]
        %v3402 = vld [vmem:[%s3396 + $0x14] sm:$0xf]
        %v3403 = vld [vmem:[%s3396 + $0x18] sm:$0xf]
        %v3404 = vld [vmem:[%s3396 + $0x1c] sm:$0xf]
        %v3405 = vld [vmem:[%s3396 + $0x20] sm:$0xf]
        %v3406 = vld [vmem:[%s3396 + $0x24] sm:$0xf]
        %v3407 = vld [vmem:[%s3396 + $0x28] sm:$0xf]
        %v3408 = vld [vmem:[%s3396 + $0x2c] sm:$0xf]
        %v3409 = vld [vmem:[%s3396 + $0x30] sm:$0xf]
        %v3410 = vld [vmem:[%s3396 + $0x34] sm:$0xf]
        %v3411 = vld [vmem:[%s3396 + $0x38] sm:$0xf]
        %v3412 = vld [vmem:[%s3396 + $0x3c] sm:$0xf]
        %vm3413 = vcmask 1046528
        %v3414 = vrot.slane %v1075, 1
        %v3415 = vrot.slane %v1076, 1
        %v3416 = vsel %vm3413, %v3414, %v3415
        %v3417 = vrot.slane %v1077, 1
        %v3418 = vsel %vm3413, %v3415, %v3417
        %v3419 = vrot.slane %v1078, 1
        %v3420 = vsel %vm3413, %v3417, %v3419
        %v3421 = vrot.slane %v1079, 1
        %v3422 = vsel %vm3413, %v3419, %v3421
        %v3423 = vrot.slane %v1080, 1
        %v3424 = vsel %vm3413, %v3421, %v3423
        %v3425 = vrot.slane %v1081, 1
        %v3426 = vsel %vm3413, %v3423, %v3425
        %v3449 = vunpack.c.l.b16 %v3397
        %v3450 = vunpack.c.l.b16 %v3398
        %v3451 = vunpack.c.l.b16 %v3399
        %v3452 = vunpack.c.l.b16 %v3400
        %v3453 = vunpack.c.l.b16 %v3401
        %v3454 = vunpack.c.l.b16 %v3402
        %v3455 = vunpack.c.l.b16 %v3403
        %v3456 = vunpack.c.l.b16 %v3404
        %v3457 = vunpack.c.l.b16 %v3405
        %v3458 = vunpack.c.l.b16 %v3406
        %v3459 = vunpack.c.l.b16 %v3407
        %v3460 = vunpack.c.l.b16 %v3408
        %v3461 = vunpack.c.l.b16 %v3409
        %v3462 = vunpack.c.l.b16 %v3410
        %v3463 = vunpack.c.l.b16 %v3411
        %v3464 = vunpack.c.l.b16 %v3412
        %v3465 = vpack.c.b16 %v3450, %v3449
        %v3466 = vpack.c.b16 %v3452, %v3451
        %v3467 = vpack.c.b16 %v3454, %v3453
        %v3468 = vpack.c.b16 %v3456, %v3455
        %v3469 = vpack.c.b16 %v3458, %v3457
        %v3470 = vpack.c.b16 %v3460, %v3459
        %v3471 = vpack.c.b16 %v3462, %v3461
        %v3472 = vpack.c.b16 %v3464, %v3463
        %3481 = vmatprep.subr.bf16.mxu0 0
        %3482 = vmatpush1.bf16.msra.mxu0 %v3465
        %3483 = vmatprep.subr.bf16.mxu0 0
        %3484 = vmatpush1.bf16.msra.mxu0 %v3466
        %3485 = vmatprep.subr.bf16.mxu0 0
        %3486 = vmatpush1.bf16.msra.mxu0 %v3467
        %3487 = vmatprep.subr.bf16.mxu0 0
        %3488 = vmatpush1.bf16.msra.mxu0 %v3468
        %3489 = vmatprep.subr.bf16.mxu0 0
        %3490 = vmatpush1.bf16.msra.mxu0 %v3469
        %3491 = vmatprep.subr.bf16.mxu0 0
        %3492 = vmatpush1.bf16.msra.mxu0 %v3470
        %3493 = vmatprep.subr.bf16.mxu0 0
        %3494 = vmatpush1.bf16.msra.mxu0 %v3471
        %3495 = vmatprep.subr.bf16.mxu0 0
        %3496 = vmatpush1.bf16.msra.mxu0 %v3472
        %3497 = vmatprep.subr.bf16.mxu0 0
        %3498 = vmatpush1.bf16.msra.mxu0 0
        %3499 = vmatprep.subr.bf16.mxu0 0
        %3500 = vmatpush1.bf16.msra.mxu0 0
        %3501 = vmatprep.subr.bf16.mxu0 0
        %3502 = vmatpush1.bf16.msra.mxu0 0
        %3503 = vmatprep.subr.bf16.mxu0 0
        %3504 = vmatpush1.bf16.msra.mxu0 0
        %3505 = vmatprep.subr.bf16.mxu0 0
        %3506 = vmatpush1.bf16.msra.mxu0 0
        %3507 = vmatprep.subr.bf16.mxu0 0
        %3508 = vmatpush1.bf16.msra.mxu0 0
        %3509 = vmatprep.subr.bf16.mxu0 0
        %3510 = vmatpush1.bf16.msra.mxu0 0
        %3511 = vmatprep.subr.bf16.mxu0 0
        %3512 = vmatpush1.bf16.msra.mxu0 0
        %3513 = vmatprep.mubr.bf16.mxu0 0
        %3514 = vmatmul.mubr.bf16.gmra.mrb[0].mxu0 %v3416
        %v3515 = vpop.f32.mrb[0].mxu0
        %v3516 = vadd.f32 0.0, %v3515
        %v3517 = vpop.f32.mrb[0].mxu0
        %v3518 = vpop.f32.mrb[0].mxu0
        %v3519 = vadd.f32 0.0, %v3518
        %v3520 = vpop.f32.mrb[0].mxu0
        %3521 = vmatprep.mubr.bf16.mxu0 0
        %3522 = vmatmul.mubr.bf16.gmra.mrb[0].mxu0 %v3418
        %v3523 = vpop.f32.mrb[0].mxu0
        %v3524 = vadd.f32 0.0, %v3523
        %v3525 = vpop.f32.mrb[0].mxu0
        %v3526 = vpop.f32.mrb[0].mxu0
        %v3527 = vadd.f32 0.0, %v3526
        %v3528 = vpop.f32.mrb[0].mxu0
        %3529 = vmatprep.mubr.bf16.mxu0 0
        %3530 = vmatmul.mubr.bf16.gmra.mrb[0].mxu0 %v3420
        %v3531 = vpop.f32.mrb[0].mxu0
        %v3532 = vadd.f32 0.0, %v3531
        %v3533 = vpop.f32.mrb[0].mxu0
        %v3534 = vpop.f32.mrb[0].mxu0
        %v3535 = vadd.f32 0.0, %v3534
        %v3536 = vpop.f32.mrb[0].mxu0
        %3537 = vmatprep.mubr.bf16.mxu0 0
        %3538 = vmatmul.mubr.bf16.gmra.mrb[0].mxu0 %v3422
        %v3539 = vpop.f32.mrb[0].mxu0
        %v3540 = vadd.f32 0.0, %v3539
        %v3541 = vpop.f32.mrb[0].mxu0
        %v3542 = vpop.f32.mrb[0].mxu0
        %v3543 = vadd.f32 0.0, %v3542
        %v3544 = vpop.f32.mrb[0].mxu0
        %3545 = vmatprep.mubr.bf16.mxu0 0
        %3546 = vmatmul.mubr.bf16.gmra.mrb[0].mxu0 %v3424
        %v3547 = vpop.f32.mrb[0].mxu0
        %v3548 = vadd.f32 0.0, %v3547
        %v3549 = vpop.f32.mrb[0].mxu0
        %v3550 = vpop.f32.mrb[0].mxu0
        %v3551 = vadd.f32 0.0, %v3550
        %v3552 = vpop.f32.mrb[0].mxu0
        %3553 = vmatprep.mubr.bf16.mxu0 0
        %3554 = vmatmul.mubr.bf16.gmra.mrb[0].mxu0 %v3426
        %v3555 = vpop.f32.mrb[0].mxu0
        %v3556 = vadd.f32 0.0, %v3555
        %v3557 = vpop.f32.mrb[0].mxu0
        %v3558 = vpop.f32.mrb[0].mxu0
        %v3559 = vadd.f32 0.0, %v3558
        %v3560 = vpop.f32.mrb[0].mxu0
        %3561 = vdwg.mxu0
        %v3562 = vadd.f32 %v3384, %v3516
        %v3563 = vadd.f32 %v3385, %v3519
        %v3564 = vadd.f32 %v3386, %v3524
        %v3565 = vadd.f32 %v3387, %v3527
        %v3566 = vadd.f32 %v3388, %v3532
        %v3567 = vadd.f32 %v3389, %v3535
        %v3568 = vadd.f32 %v3390, %v3540
        %v3569 = vadd.f32 %v3391, %v3543
        %v3570 = vadd.f32 %v3392, %v3548
        %v3571 = vadd.f32 %v3393, %v3551
        %v3572 = vadd.f32 %v3394, %v3556
        %v3573 = vadd.f32 %v3395, %v3559
        %s3574 = scalar_lea.vmem [#allocation6], 832
        %v3575 = vld [vmem:[%s3574] sm:$0xf]
        %v3576 = vld [vmem:[%s3574 + $0x4] sm:$0xf]
        %v3577 = vld [vmem:[%s3574 + $0x8] sm:$0xf]
        %v3578 = vld [vmem:[%s3574 + $0xc] sm:$0xf]
        %v3579 = vld [vmem:[%s3574 + $0x10] sm:$0xf]
        %v3580 = vld [vmem:[%s3574 + $0x14] sm:$0xf]
        %v3581 = vld [vmem:[%s3574 + $0x18] sm:$0xf]
        %v3582 = vld [vmem:[%s3574 + $0x1c] sm:$0xf]
        %v3583 = vld [vmem:[%s3574 + $0x20] sm:$0xf]
        %v3584 = vld [vmem:[%s3574 + $0x24] sm:$0xf]
        %v3585 = vld [vmem:[%s3574 + $0x28] sm:$0xf]
        %v3586 = vld [vmem:[%s3574 + $0x2c] sm:$0xf]
        %v3587 = vld [vmem:[%s3574 + $0x30] sm:$0xf]
        %v3588 = vld [vmem:[%s3574 + $0x34] sm:$0xf]
        %v3589 = vld [vmem:[%s3574 + $0x38] sm:$0xf]
        %v3590 = vld [vmem:[%s3574 + $0x3c] sm:$0xf]
        %vm3592 = vcmask 1044480
        %v3593 = vrot.slane %v1081, 3
        %v3594 = vrot.slane %v1082, 3
        %v3595 = vsel %vm3592, %v3593, %v3594
        %v3596 = vrot.slane %v1083, 3
        %v3597 = vsel %vm3592, %v3594, %v3596
        %v3598 = vrot.slane %v1084, 3
        %v3599 = vsel %vm3592, %v3596, %v3598
        %v3600 = vrot.slane %v1085, 3
        %v3601 = vsel %vm3592, %v3598, %v3600
        %v3602 = vrot.slane %v1086, 3
        %v3603 = vsel %vm3592, %v3600, %v3602
        %v3604 = vrot.slane 0, 3
        %v3605 = vsel %vm3592, %v3602, %v3604
        %v3628 = vunpack.c.l.b16 %v3575
        %v3629 = vunpack.c.l.b16 %v3576
        %v3630 = vunpack.c.l.b16 %v3577
        %v3631 = vunpack.c.l.b16 %v3578
        %v3632 = vunpack.c.l.b16 %v3579
        %v3633 = vunpack.c.l.b16 %v3580
        %v3634 = vunpack.c.l.b16 %v3581
        %v3635 = vunpack.c.l.b16 %v3582
        %v3636 = vunpack.c.l.b16 %v3583
        %v3637 = vunpack.c.l.b16 %v3584
        %v3638 = vunpack.c.l.b16 %v3585
        %v3639 = vunpack.c.l.b16 %v3586
        %v3640 = vunpack.c.l.b16 %v3587
        %v3641 = vunpack.c.l.b16 %v3588
        %v3642 = vunpack.c.l.b16 %v3589
        %v3643 = vunpack.c.l.b16 %v3590
        %v3644 = vpack.c.b16 %v3629, %v3628
        %v3645 = vpack.c.b16 %v3631, %v3630
        %v3646 = vpack.c.b16 %v3633, %v3632
        %v3647 = vpack.c.b16 %v3635, %v3634
        %v3648 = vpack.c.b16 %v3637, %v3636
        %v3649 = vpack.c.b16 %v3639, %v3638
        %v3650 = vpack.c.b16 %v3641, %v3640
        %v3651 = vpack.c.b16 %v3643, %v3642
        %3660 = vmatprep.subr.bf16.mxu0 0
        %3661 = vmatpush1.bf16.msra.mxu0 %v3644
        %3662 = vmatprep.subr.bf16.mxu0 0
        %3663 = vmatpush1.bf16.msra.mxu0 %v3645
        %3664 = vmatprep.subr.bf16.mxu0 0
        %3665 = vmatpush1.bf16.msra.mxu0 %v3646
        %3666 = vmatprep.subr.bf16.mxu0 0
        %3667 = vmatpush1.bf16.msra.mxu0 %v3647
        %3668 = vmatprep.subr.bf16.mxu0 0
        %3669 = vmatpush1.bf16.msra.mxu0 %v3648
        %3670 = vmatprep.subr.bf16.mxu0 0
        %3671 = vmatpush1.bf16.msra.mxu0 %v3649
        %3672 = vmatprep.subr.bf16.mxu0 0
        %3673 = vmatpush1.bf16.msra.mxu0 %v3650
        %3674 = vmatprep.subr.bf16.mxu0 0
        %3675 = vmatpush1.bf16.msra.mxu0 %v3651
        %3676 = vmatprep.subr.bf16.mxu0 0
        %3677 = vmatpush1.bf16.msra.mxu0 0
        %3678 = vmatprep.subr.bf16.mxu0 0
        %3679 = vmatpush1.bf16.msra.mxu0 0
        %3680 = vmatprep.subr.bf16.mxu0 0
        %3681 = vmatpush1.bf16.msra.mxu0 0
        %3682 = vmatprep.subr.bf16.mxu0 0
        %3683 = vmatpush1.bf16.msra.mxu0 0
        %3684 = vmatprep.subr.bf16.mxu0 0
        %3685 = vmatpush1.bf16.msra.mxu0 0
        %3686 = vmatprep.subr.bf16.mxu0 0
        %3687 = vmatpush1.bf16.msra.mxu0 0
        %3688 = vmatprep.subr.bf16.mxu0 0
        %3689 = vmatpush1.bf16.msra.mxu0 0
        %3690 = vmatprep.subr.bf16.mxu0 0
        %3691 = vmatpush1.bf16.msra.mxu0 0
        %3692 = vmatprep.mubr.bf16.mxu0 0
        %3693 = vmatmul.mubr.bf16.gmra.mrb[0].mxu0 %v3595
        %v3694 = vpop.f32.mrb[0].mxu0
        %v3695 = vadd.f32 0.0, %v3694
        %v3696 = vpop.f32.mrb[0].mxu0
        %v3697 = vpop.f32.mrb[0].mxu0
        %v3698 = vadd.f32 0.0, %v3697
        %v3699 = vpop.f32.mrb[0].mxu0
        %3700 = vmatprep.mubr.bf16.mxu0 0
        %3701 = vmatmul.mubr.bf16.gmra.mrb[0].mxu0 %v3597
        %v3702 = vpop.f32.mrb[0].mxu0
        %v3703 = vadd.f32 0.0, %v3702
        %v3704 = vpop.f32.mrb[0].mxu0
        %v3705 = vpop.f32.mrb[0].mxu0
        %v3706 = vadd.f32 0.0, %v3705
        %v3707 = vpop.f32.mrb[0].mxu0
        %3708 = vmatprep.mubr.bf16.mxu0 0
        %3709 = vmatmul.mubr.bf16.gmra.mrb[0].mxu0 %v3599
        %v3710 = vpop.f32.mrb[0].mxu0
        %v3711 = vadd.f32 0.0, %v3710
        %v3712 = vpop.f32.mrb[0].mxu0
        %v3713 = vpop.f32.mrb[0].mxu0
        %v3714 = vadd.f32 0.0, %v3713
        %v3715 = vpop.f32.mrb[0].mxu0
        %3716 = vmatprep.mubr.bf16.mxu0 0
        %3717 = vmatmul.mubr.bf16.gmra.mrb[0].mxu0 %v3601
        %v3718 = vpop.f32.mrb[0].mxu0
        %v3719 = vadd.f32 0.0, %v3718
        %v3720 = vpop.f32.mrb[0].mxu0
        %v3721 = vpop.f32.mrb[0].mxu0
        %v3722 = vadd.f32 0.0, %v3721
        %v3723 = vpop.f32.mrb[0].mxu0
        %3724 = vmatprep.mubr.bf16.mxu0 0
        %3725 = vmatmul.mubr.bf16.gmra.mrb[0].mxu0 %v3603
        %v3726 = vpop.f32.mrb[0].mxu0
        %v3727 = vadd.f32 0.0, %v3726
        %v3728 = vpop.f32.mrb[0].mxu0
        %v3729 = vpop.f32.mrb[0].mxu0
        %v3730 = vadd.f32 0.0, %v3729
        %v3731 = vpop.f32.mrb[0].mxu0
        %3732 = vmatprep.mubr.bf16.mxu0 0
        %3733 = vmatmul.mubr.bf16.gmra.mrb[0].mxu0 %v3605
        %v3734 = vpop.f32.mrb[0].mxu0
        %v3735 = vadd.f32 0.0, %v3734
        %v3736 = vpop.f32.mrb[0].mxu0
        %v3737 = vpop.f32.mrb[0].mxu0
        %v3738 = vadd.f32 0.0, %v3737
        %v3739 = vpop.f32.mrb[0].mxu0
        %3740 = vdwg.mxu0
        %v3741 = vadd.f32 %v3562, %v3695
        %v3742 = vadd.f32 %v3563, %v3698
        %v3743 = vadd.f32 %v3564, %v3703
        %v3744 = vadd.f32 %v3565, %v3706
        %v3745 = vadd.f32 %v3566, %v3711
        %v3746 = vadd.f32 %v3567, %v3714
        %v3747 = vadd.f32 %v3568, %v3719
        %v3748 = vadd.f32 %v3569, %v3722
        %v3749 = vadd.f32 %v3570, %v3727
        %v3750 = vadd.f32 %v3571, %v3730
        %v3751 = vadd.f32 %v3572, %v3735
        %v3752 = vadd.f32 %v3573, %v3738
        %s3753 = scalar_lea.vmem [#allocation6], 896
        %v3754 = vld [vmem:[%s3753] sm:$0xf]
        %v3755 = vld [vmem:[%s3753 + $0x4] sm:$0xf]
        %v3756 = vld [vmem:[%s3753 + $0x8] sm:$0xf]
        %v3757 = vld [vmem:[%s3753 + $0xc] sm:$0xf]
        %v3758 = vld [vmem:[%s3753 + $0x10] sm:$0xf]
        %v3759 = vld [vmem:[%s3753 + $0x14] sm:$0xf]
        %v3760 = vld [vmem:[%s3753 + $0x18] sm:$0xf]
        %v3761 = vld [vmem:[%s3753 + $0x1c] sm:$0xf]
        %v3762 = vld [vmem:[%s3753 + $0x20] sm:$0xf]
        %v3763 = vld [vmem:[%s3753 + $0x24] sm:$0xf]
        %v3764 = vld [vmem:[%s3753 + $0x28] sm:$0xf]
        %v3765 = vld [vmem:[%s3753 + $0x2c] sm:$0xf]
        %v3766 = vld [vmem:[%s3753 + $0x30] sm:$0xf]
        %v3767 = vld [vmem:[%s3753 + $0x34] sm:$0xf]
        %v3768 = vld [vmem:[%s3753 + $0x38] sm:$0xf]
        %v3769 = vld [vmem:[%s3753 + $0x3c] sm:$0xf]
        %vm3770 = vsmask.f32 6400
        %v3771 = vrot.slane %v2236, 1
        %v3772 = vrot.slane %v2239, 2
        %v3773 = vor.u32 %v3771, %v3772
        %v3774 = vrot.slane %v2245, 1
        %v3775 = vrot.slane %v2248, 2
        %v3776 = vor.u32 %v3774, %v3775
        %v3777 = vsel %vm3770, %v3773, %v3776
        %v3778 = vrot.slane %v2254, 1
        %v3779 = vrot.slane %v2257, 2
        %v3780 = vor.u32 %v3778, %v3779
        %v3781 = vsel %vm3770, %v3776, %v3780
        %v3782 = vrot.slane %v2263, 1
        %v3783 = vrot.slane %v2266, 2
        %v3784 = vor.u32 %v3782, %v3783
        %v3785 = vsel %vm3770, %v3780, %v3784
        %v3786 = vrot.slane %v2272, 1
        %v3787 = vrot.slane %v2275, 2
        %v3788 = vor.u32 %v3786, %v3787
        %v3789 = vsel %vm3770, %v3784, %v3788
        %v3790 = vrot.slane %v2281, 1
        %v3791 = vrot.slane %v2284, 2
        %v3792 = vor.u32 %v3790, %v3791
        %v3793 = vsel %vm3770, %v3788, %v3792
        %v3794 = vrot.slane %v2458, 1
        %v3795 = vrot.slane %v2461, 2
        %v3796 = vor.u32 %v3794, %v3795
        %v3797 = vsel %vm3770, %v3792, %v3796
        %v3820 = vunpack.c.l.b16 %v3754
        %v3821 = vunpack.c.l.b16 %v3755
        %v3822 = vunpack.c.l.b16 %v3756
        %v3823 = vunpack.c.l.b16 %v3757
        %v3824 = vunpack.c.l.b16 %v3758
        %v3825 = vunpack.c.l.b16 %v3759
        %v3826 = vunpack.c.l.b16 %v3760
        %v3827 = vunpack.c.l.b16 %v3761
        %v3828 = vunpack.c.l.b16 %v3762
        %v3829 = vunpack.c.l.b16 %v3763
        %v3830 = vunpack.c.l.b16 %v3764
        %v3831 = vunpack.c.l.b16 %v3765
        %v3832 = vunpack.c.l.b16 %v3766
        %v3833 = vunpack.c.l.b16 %v3767
        %v3834 = vunpack.c.l.b16 %v3768
        %v3835 = vunpack.c.l.b16 %v3769
        %v3836 = vpack.c.b16 %v3821, %v3820
        %v3837 = vpack.c.b16 %v3823, %v3822
        %v3838 = vpack.c.b16 %v3825, %v3824
        %v3839 = vpack.c.b16 %v3827, %v3826
        %v3840 = vpack.c.b16 %v3829, %v3828
        %v3841 = vpack.c.b16 %v3831, %v3830
        %v3842 = vpack.c.b16 %v3833, %v3832
        %v3843 = vpack.c.b16 %v3835, %v3834
        %3852 = vmatprep.subr.bf16.mxu0 0
        %3853 = vmatpush1.bf16.msra.mxu0 %v3836
        %3854 = vmatprep.subr.bf16.mxu0 0
        %3855 = vmatpush1.bf16.msra.mxu0 %v3837
        %3856 = vmatprep.subr.bf16.mxu0 0
        %3857 = vmatpush1.bf16.msra.mxu0 %v3838
        %3858 = vmatprep.subr.bf16.mxu0 0
        %3859 = vmatpush1.bf16.msra.mxu0 %v3839
        %3860 = vmatprep.subr.bf16.mxu0 0
        %3861 = vmatpush1.bf16.msra.mxu0 %v3840
        %3862 = vmatprep.subr.bf16.mxu0 0
        %3863 = vmatpush1.bf16.msra.mxu0 %v3841
        %3864 = vmatprep.subr.bf16.mxu0 0
        %3865 = vmatpush1.bf16.msra.mxu0 %v3842
        %3866 = vmatprep.subr.bf16.mxu0 0
        %3867 = vmatpush1.bf16.msra.mxu0 %v3843
        %3868 = vmatprep.subr.bf16.mxu0 0
        %3869 = vmatpush1.bf16.msra.mxu0 0
        %3870 = vmatprep.subr.bf16.mxu0 0
        %3871 = vmatpush1.bf16.msra.mxu0 0
        %3872 = vmatprep.subr.bf16.mxu0 0
        %3873 = vmatpush1.bf16.msra.mxu0 0
        %3874 = vmatprep.subr.bf16.mxu0 0
        %3875 = vmatpush1.bf16.msra.mxu0 0
        %3876 = vmatprep.subr.bf16.mxu0 0
        %3877 = vmatpush1.bf16.msra.mxu0 0
        %3878 = vmatprep.subr.bf16.mxu0 0
        %3879 = vmatpush1.bf16.msra.mxu0 0
        %3880 = vmatprep.subr.bf16.mxu0 0
        %3881 = vmatpush1.bf16.msra.mxu0 0
        %3882 = vmatprep.subr.bf16.mxu0 0
        %3883 = vmatpush1.bf16.msra.mxu0 0
        %3884 = vmatprep.mubr.bf16.mxu0 0
        %3885 = vmatmul.mubr.bf16.gmra.mrb[0].mxu0 %v3777
        %v3886 = vpop.f32.mrb[0].mxu0
        %v3887 = vadd.f32 0.0, %v3886
        %v3888 = vpop.f32.mrb[0].mxu0
        %v3889 = vpop.f32.mrb[0].mxu0
        %v3890 = vadd.f32 0.0, %v3889
        %v3891 = vpop.f32.mrb[0].mxu0
        %3892 = vmatprep.mubr.bf16.mxu0 0
        %3893 = vmatmul.mubr.bf16.gmra.mrb[0].mxu0 %v3781
        %v3894 = vpop.f32.mrb[0].mxu0
        %v3895 = vadd.f32 0.0, %v3894
        %v3896 = vpop.f32.mrb[0].mxu0
        %v3897 = vpop.f32.mrb[0].mxu0
        %v3898 = vadd.f32 0.0, %v3897
        %v3899 = vpop.f32.mrb[0].mxu0
        %3900 = vmatprep.mubr.bf16.mxu0 0
        %3901 = vmatmul.mubr.bf16.gmra.mrb[0].mxu0 %v3785
        %v3902 = vpop.f32.mrb[0].mxu0
        %v3903 = vadd.f32 0.0, %v3902
        %v3904 = vpop.f32.mrb[0].mxu0
        %v3905 = vpop.f32.mrb[0].mxu0
        %v3906 = vadd.f32 0.0, %v3905
        %v3907 = vpop.f32.mrb[0].mxu0
        %3908 = vmatprep.mubr.bf16.mxu0 0
        %3909 = vmatmul.mubr.bf16.gmra.mrb[0].mxu0 %v3789
        %v3910 = vpop.f32.mrb[0].mxu0
        %v3911 = vadd.f32 0.0, %v3910
        %v3912 = vpop.f32.mrb[0].mxu0
        %v3913 = vpop.f32.mrb[0].mxu0
        %v3914 = vadd.f32 0.0, %v3913
        %v3915 = vpop.f32.mrb[0].mxu0
        %3916 = vmatprep.mubr.bf16.mxu0 0
        %3917 = vmatmul.mubr.bf16.gmra.mrb[0].mxu0 %v3793
        %v3918 = vpop.f32.mrb[0].mxu0
        %v3919 = vadd.f32 0.0, %v3918
        %v3920 = vpop.f32.mrb[0].mxu0
        %v3921 = vpop.f32.mrb[0].mxu0
        %v3922 = vadd.f32 0.0, %v3921
        %v3923 = vpop.f32.mrb[0].mxu0
        %3924 = vmatprep.mubr.bf16.mxu0 0
        %3925 = vmatmul.mubr.bf16.gmra.mrb[0].mxu0 %v3797
        %v3926 = vpop.f32.mrb[0].mxu0
        %v3927 = vadd.f32 0.0, %v3926
        %v3928 = vpop.f32.mrb[0].mxu0
        %v3929 = vpop.f32.mrb[0].mxu0
        %v3930 = vadd.f32 0.0, %v3929
        %v3931 = vpop.f32.mrb[0].mxu0
        %3932 = vdwg.mxu0
        %v3933 = vadd.f32 %v3741, %v3887
        %v3934 = vadd.f32 %v3742, %v3890
        %v3935 = vadd.f32 %v3743, %v3895
        %v3936 = vadd.f32 %v3744, %v3898
        %v3937 = vadd.f32 %v3745, %v3903
        %v3938 = vadd.f32 %v3746, %v3906
        %v3939 = vadd.f32 %v3747, %v3911
        %v3940 = vadd.f32 %v3748, %v3914
        %v3941 = vadd.f32 %v3749, %v3919
        %v3942 = vadd.f32 %v3750, %v3922
        %v3943 = vadd.f32 %v3751, %v3927
        %v3944 = vadd.f32 %v3752, %v3930
        %s3945 = scalar_lea.vmem [#allocation6], 960
        %v3946 = vld [vmem:[%s3945] sm:$0xf]
        %v3947 = vld [vmem:[%s3945 + $0x4] sm:$0xf]
        %v3948 = vld [vmem:[%s3945 + $0x8] sm:$0xf]
        %v3949 = vld [vmem:[%s3945 + $0xc] sm:$0xf]
        %v3950 = vld [vmem:[%s3945 + $0x10] sm:$0xf]
        %v3951 = vld [vmem:[%s3945 + $0x14] sm:$0xf]
        %v3952 = vld [vmem:[%s3945 + $0x18] sm:$0xf]
        %v3953 = vld [vmem:[%s3945 + $0x1c] sm:$0xf]
        %v3954 = vld [vmem:[%s3945 + $0x20] sm:$0xf]
        %v3955 = vld [vmem:[%s3945 + $0x24] sm:$0xf]
        %v3956 = vld [vmem:[%s3945 + $0x28] sm:$0xf]
        %v3957 = vld [vmem:[%s3945 + $0x2c] sm:$0xf]
        %v3958 = vld [vmem:[%s3945 + $0x30] sm:$0xf]
        %v3959 = vld [vmem:[%s3945 + $0x34] sm:$0xf]
        %v3960 = vld [vmem:[%s3945 + $0x38] sm:$0xf]
        %v3961 = vld [vmem:[%s3945 + $0x3c] sm:$0xf]
        %vm3962 = vsmask.f32 4352
        %v3963 = vrot.slane %v2458, 3
        %v3964 = vrot.slane %v2461, 4
        %v3965 = vor.u32 %v3963, %v3964
        %v3966 = vrot.slane %v2467, 3
        %v3967 = vrot.slane %v2470, 4
        %v3968 = vor.u32 %v3966, %v3967
        %v3969 = vsel %vm3962, %v3965, %v3968
        %v3970 = vrot.slane %v2476, 3
        %v3971 = vrot.slane %v2479, 4
        %v3972 = vor.u32 %v3970, %v3971
        %v3973 = vsel %vm3962, %v3968, %v3972
        %v3974 = vrot.slane %v2485, 3
        %v3975 = vrot.slane %v2488, 4
        %v3976 = vor.u32 %v3974, %v3975
        %v3977 = vsel %vm3962, %v3972, %v3976
        %v3978 = vrot.slane %v2494, 3
        %v3979 = vrot.slane %v2497, 4
        %v3980 = vor.u32 %v3978, %v3979
        %v3981 = vsel %vm3962, %v3976, %v3980
        %v3982 = vrot.slane %v2503, 3
        %v3983 = vrot.slane %v2506, 4
        %v3984 = vor.u32 %v3982, %v3983
        %v3985 = vsel %vm3962, %v3980, %v3984
        %v3987 = vshrl.u32 0, 16
        %v3989 = vrot.slane %v3987, 3
        %v3990 = vshll.u32 0, 16
        %v3992 = vrot.slane %v3990, 4
        %v3993 = vor.u32 %v3989, %v3992
        %v3994 = vsel %vm3962, %v3984, %v3993
        %v4017 = vunpack.c.l.b16 %v3946
        %v4018 = vunpack.c.l.b16 %v3947
        %v4019 = vunpack.c.l.b16 %v3948
        %v4020 = vunpack.c.l.b16 %v3949
        %v4021 = vunpack.c.l.b16 %v3950
        %v4022 = vunpack.c.l.b16 %v3951
        %v4023 = vunpack.c.l.b16 %v3952
        %v4024 = vunpack.c.l.b16 %v3953
        %v4025 = vunpack.c.l.b16 %v3954
        %v4026 = vunpack.c.l.b16 %v3955
        %v4027 = vunpack.c.l.b16 %v3956
        %v4028 = vunpack.c.l.b16 %v3957
        %v4029 = vunpack.c.l.b16 %v3958
        %v4030 = vunpack.c.l.b16 %v3959
        %v4031 = vunpack.c.l.b16 %v3960
        %v4032 = vunpack.c.l.b16 %v3961
        %v4033 = vpack.c.b16 %v4018, %v4017
        %v4034 = vpack.c.b16 %v4020, %v4019
        %v4035 = vpack.c.b16 %v4022, %v4021
        %v4036 = vpack.c.b16 %v4024, %v4023
        %v4037 = vpack.c.b16 %v4026, %v4025
        %v4038 = vpack.c.b16 %v4028, %v4027
        %v4039 = vpack.c.b16 %v4030, %v4029
        %v4040 = vpack.c.b16 %v4032, %v4031
        %4049 = vmatprep.subr.bf16.mxu0 0
        %4050 = vmatpush1.bf16.msra.mxu0 %v4033
        %4051 = vmatprep.subr.bf16.mxu0 0
        %4052 = vmatpush1.bf16.msra.mxu0 %v4034
        %4053 = vmatprep.subr.bf16.mxu0 0
        %4054 = vmatpush1.bf16.msra.mxu0 %v4035
        %4055 = vmatprep.subr.bf16.mxu0 0
        %4056 = vmatpush1.bf16.msra.mxu0 %v4036
        %4057 = vmatprep.subr.bf16.mxu0 0
        %4058 = vmatpush1.bf16.msra.mxu0 %v4037
        %4059 = vmatprep.subr.bf16.mxu0 0
        %4060 = vmatpush1.bf16.msra.mxu0 %v4038
        %4061 = vmatprep.subr.bf16.mxu0 0
        %4062 = vmatpush1.bf16.msra.mxu0 %v4039
        %4063 = vmatprep.subr.bf16.mxu0 0
        %4064 = vmatpush1.bf16.msra.mxu0 %v4040
        %4065 = vmatprep.subr.bf16.mxu0 0
        %4066 = vmatpush1.bf16.msra.mxu0 0
        %4067 = vmatprep.subr.bf16.mxu0 0
        %4068 = vmatpush1.bf16.msra.mxu0 0
        %4069 = vmatprep.subr.bf16.mxu0 0
        %4070 = vmatpush1.bf16.msra.mxu0 0
        %4071 = vmatprep.subr.bf16.mxu0 0
        %4072 = vmatpush1.bf16.msra.mxu0 0
        %4073 = vmatprep.subr.bf16.mxu0 0
        %4074 = vmatpush1.bf16.msra.mxu0 0
        %4075 = vmatprep.subr.bf16.mxu0 0
        %4076 = vmatpush1.bf16.msra.mxu0 0
        %4077 = vmatprep.subr.bf16.mxu0 0
        %4078 = vmatpush1.bf16.msra.mxu0 0
        %4079 = vmatprep.subr.bf16.mxu0 0
        %4080 = vmatpush1.bf16.msra.mxu0 0
        %4081 = vmatprep.mubr.bf16.mxu0 0
        %4082 = vmatmul.mubr.bf16.gmra.mrb[0].mxu0 %v3969
        %v4083 = vpop.f32.mrb[0].mxu0
        %v4084 = vadd.f32 0.0, %v4083
        %v4085 = vpop.f32.mrb[0].mxu0
        %v4086 = vpop.f32.mrb[0].mxu0
        %v4087 = vadd.f32 0.0, %v4086
        %v4088 = vpop.f32.mrb[0].mxu0
        %4089 = vmatprep.mubr.bf16.mxu0 0
        %4090 = vmatmul.mubr.bf16.gmra.mrb[0].mxu0 %v3973
        %v4091 = vpop.f32.mrb[0].mxu0
        %v4092 = vadd.f32 0.0, %v4091
        %v4093 = vpop.f32.mrb[0].mxu0
        %v4094 = vpop.f32.mrb[0].mxu0
        %v4095 = vadd.f32 0.0, %v4094
        %v4096 = vpop.f32.mrb[0].mxu0
        %4097 = vmatprep.mubr.bf16.mxu0 0
        %4098 = vmatmul.mubr.bf16.gmra.mrb[0].mxu0 %v3977
        %v4099 = vpop.f32.mrb[0].mxu0
        %v4100 = vadd.f32 0.0, %v4099
        %v4101 = vpop.f32.mrb[0].mxu0
        %v4102 = vpop.f32.mrb[0].mxu0
        %v4103 = vadd.f32 0.0, %v4102
        %v4104 = vpop.f32.mrb[0].mxu0
        %4105 = vmatprep.mubr.bf16.mxu0 0
        %4106 = vmatmul.mubr.bf16.gmra.mrb[0].mxu0 %v3981
        %v4107 = vpop.f32.mrb[0].mxu0
        %v4108 = vadd.f32 0.0, %v4107
        %v4109 = vpop.f32.mrb[0].mxu0
        %v4110 = vpop.f32.mrb[0].mxu0
        %v4111 = vadd.f32 0.0, %v4110
        %v4112 = vpop.f32.mrb[0].mxu0
        %4113 = vmatprep.mubr.bf16.mxu0 0
        %4114 = vmatmul.mubr.bf16.gmra.mrb[0].mxu0 %v3985
        %v4115 = vpop.f32.mrb[0].mxu0
        %v4116 = vadd.f32 0.0, %v4115
        %v4117 = vpop.f32.mrb[0].mxu0
        %v4118 = vpop.f32.mrb[0].mxu0
        %v4119 = vadd.f32 0.0, %v4118
        %v4120 = vpop.f32.mrb[0].mxu0
        %4121 = vmatprep.mubr.bf16.mxu0 0
        %4122 = vmatmul.mubr.bf16.gmra.mrb[0].mxu0 %v3994
        %v4123 = vpop.f32.mrb[0].mxu0
        %v4124 = vadd.f32 0.0, %v4123
        %v4125 = vpop.f32.mrb[0].mxu0
        %v4126 = vpop.f32.mrb[0].mxu0
        %v4127 = vadd.f32 0.0, %v4126
        %v4128 = vpop.f32.mrb[0].mxu0
        %4129 = vdwg.mxu0
        %v4130 = vadd.f32 %v3933, %v4084
        %v4131 = vadd.f32 %v3934, %v4087
        %v4132 = vadd.f32 %v3935, %v4092
        %v4133 = vadd.f32 %v3936, %v4095
        %v4134 = vadd.f32 %v3937, %v4100
        %v4135 = vadd.f32 %v3938, %v4103
        %v4136 = vadd.f32 %v3939, %v4108
        %v4137 = vadd.f32 %v3940, %v4111
        %v4138 = vadd.f32 %v3941, %v4116
        %v4139 = vadd.f32 %v3942, %v4119
        %v4140 = vadd.f32 %v3943, %v4124
        %v4141 = vadd.f32 %v3944, %v4127
        %v4142 = vld [vmem:[%s4] sm:$0x1]
        %v4144 = vlaneseq
        %v4145 = vshrl.u32 %v4144, 7
        %v4146 = vsub.s32 0, %v4145
        %v4147 = vrot.slane %v4142, %v4146
        %v4149 = vadd.f32 %v4130, %v4147
        %v4150 = vadd.f32 %v4131, %v4147
        %v4151 = vadd.f32 %v4132, %v4147
        %v4152 = vadd.f32 %v4133, %v4147
        %v4153 = vadd.f32 %v4134, %v4147
        %v4154 = vadd.f32 %v4135, %v4147
        %v4155 = vadd.f32 %v4136, %v4147
        %v4156 = vadd.f32 %v4137, %v4147
        %v4157 = vadd.f32 %v4138, %v4147
        %v4158 = vadd.f32 %v4139, %v4147
        %v4159 = vadd.f32 %v4140, %v4147
        %v4160 = vadd.f32 %v4141, %v4147
        %v4161 = vmax.f32 %v4149, 0.0
        %v4162 = vmax.f32 %v4150, 0.0
        %v4163 = vmax.f32 %v4151, 0.0
        %v4164 = vmax.f32 %v4152, 0.0
        %v4165 = vmax.f32 %v4153, 0.0
        %v4166 = vmax.f32 %v4154, 0.0
        %v4167 = vmax.f32 %v4155, 0.0
        %v4168 = vmax.f32 %v4156, 0.0
        %v4169 = vmax.f32 %v4157, 0.0
        %v4170 = vmax.f32 %v4158, 0.0
        %v4171 = vmax.f32 %v4159, 0.0
        %v4172 = vmax.f32 %v4160, 0.0
        %v4173 = vpack.c.bf16 %v4162, %v4161
        %v4174 = vpack.c.bf16 %v4164, %v4163
        %v4175 = vpack.c.bf16 %v4166, %v4165
        %v4176 = vpack.c.bf16 %v4168, %v4167
        %v4177 = vpack.c.bf16 %v4170, %v4169
        %v4178 = vpack.c.bf16 %v4172, %v4171
        %v4179 = vld [vmem:[#allocation7] sm:$0xf]
        %v4180 = vld [vmem:[#allocation7 + $0x4] sm:$0xf]
        %v4181 = vld [vmem:[#allocation7 + $0x8] sm:$0xf]
        %v4182 = vld [vmem:[#allocation7 + $0xc] sm:$0xf]
        %v4183 = vld [vmem:[#allocation7 + $0x10] sm:$0xf]
        %v4184 = vld [vmem:[#allocation7 + $0x14] sm:$0xf]
        %v4185 = vld [vmem:[#allocation7 + $0x18] sm:$0xf]
        %v4186 = vld [vmem:[#allocation7 + $0x1c] sm:$0xf]
        %v4187 = vld [vmem:[#allocation7 + $0x20] sm:$0xf]
        %v4188 = vld [vmem:[#allocation7 + $0x24] sm:$0xf]
        %v4189 = vld [vmem:[#allocation7 + $0x28] sm:$0xf]
        %v4190 = vld [vmem:[#allocation7 + $0x2c] sm:$0xf]
        %v4191 = vld [vmem:[#allocation7 + $0x30] sm:$0xf]
        %v4192 = vld [vmem:[#allocation7 + $0x34] sm:$0xf]
        %v4193 = vld [vmem:[#allocation7 + $0x38] sm:$0xf]
        %v4194 = vld [vmem:[#allocation7 + $0x3c] sm:$0xf]
        %s4195 = scalar_lea.vmem [#allocation7], 64
        %v4196 = vld [vmem:[%s4195] sm:$0xf]
        %v4197 = vld [vmem:[%s4195 + $0x4] sm:$0xf]
        %v4198 = vld [vmem:[%s4195 + $0x8] sm:$0xf]
        %v4199 = vld [vmem:[%s4195 + $0xc] sm:$0xf]
        %v4200 = vld [vmem:[%s4195 + $0x10] sm:$0xf]
        %v4201 = vld [vmem:[%s4195 + $0x14] sm:$0xf]
        %v4202 = vld [vmem:[%s4195 + $0x18] sm:$0xf]
        %v4203 = vld [vmem:[%s4195 + $0x1c] sm:$0xf]
        %v4204 = vld [vmem:[%s4195 + $0x20] sm:$0xf]
        %v4205 = vld [vmem:[%s4195 + $0x24] sm:$0xf]
        %v4206 = vld [vmem:[%s4195 + $0x28] sm:$0xf]
        %v4207 = vld [vmem:[%s4195 + $0x2c] sm:$0xf]
        %v4208 = vld [vmem:[%s4195 + $0x30] sm:$0xf]
        %v4209 = vld [vmem:[%s4195 + $0x34] sm:$0xf]
        %v4210 = vld [vmem:[%s4195 + $0x38] sm:$0xf]
        %v4211 = vld [vmem:[%s4195 + $0x3c] sm:$0xf]
        %v4213 = vshrl.u32 %v4173, 16
        %v4215 = vshll.u32 %v4173, 16
        %v4217 = vrot.slane %v4215, 1
        %v4218 = vor.u32 %v4213, %v4217
        %v4220 = vshll.u32 %v4174, 16
        %v4222 = vrot.slane %v4220, 1
        %v4223 = vsel %vm1422, %v4218, %v4222
        %v4224 = vshrl.u32 %v4174, 16
        %v4226 = vor.u32 %v4224, %v4222
        %v4228 = vshll.u32 %v4175, 16
        %v4230 = vrot.slane %v4228, 1
        %v4231 = vsel %vm1422, %v4226, %v4230
        %v4232 = vshrl.u32 %v4175, 16
        %v4234 = vor.u32 %v4232, %v4230
        %v4236 = vshll.u32 %v4176, 16
        %v4238 = vrot.slane %v4236, 1
        %v4239 = vsel %vm1422, %v4234, %v4238
        %v4240 = vshrl.u32 %v4176, 16
        %v4242 = vor.u32 %v4240, %v4238
        %v4244 = vshll.u32 %v4177, 16
        %v4246 = vrot.slane %v4244, 1
        %v4247 = vsel %vm1422, %v4242, %v4246
        %v4248 = vshrl.u32 %v4177, 16
        %v4250 = vor.u32 %v4248, %v4246
        %v4272 = vunpack.c.l.b16 %v4196
        %v4273 = vunpack.c.l.b16 %v4197
        %v4274 = vunpack.c.l.b16 %v4198
        %v4275 = vunpack.c.l.b16 %v4199
        %v4276 = vunpack.c.l.b16 %v4200
        %v4277 = vunpack.c.l.b16 %v4201
        %v4278 = vunpack.c.l.b16 %v4202
        %v4279 = vunpack.c.l.b16 %v4203
        %v4280 = vunpack.c.l.b16 %v4204
        %v4281 = vunpack.c.l.b16 %v4205
        %v4282 = vunpack.c.l.b16 %v4206
        %v4283 = vunpack.c.l.b16 %v4207
        %v4284 = vunpack.c.l.b16 %v4208
        %v4285 = vunpack.c.l.b16 %v4209
        %v4286 = vunpack.c.l.b16 %v4210
        %v4287 = vunpack.c.l.b16 %v4211
        %v4288 = vpack.c.b16 %v4273, %v4272
        %v4289 = vpack.c.b16 %v4275, %v4274
        %v4290 = vpack.c.b16 %v4277, %v4276
        %v4291 = vpack.c.b16 %v4279, %v4278
        %v4292 = vpack.c.b16 %v4281, %v4280
        %v4293 = vpack.c.b16 %v4283, %v4282
        %v4294 = vpack.c.b16 %v4285, %v4284
        %v4295 = vpack.c.b16 %v4287, %v4286
        %4304 = vmatprep.subr.bf16.mxu0 0
        %4305 = vmatpush1.bf16.msra.mxu0 %v4288
        %4306 = vmatprep.subr.bf16.mxu0 0
        %4307 = vmatpush1.bf16.msra.mxu0 %v4289
        %4308 = vmatprep.subr.bf16.mxu0 0
        %4309 = vmatpush1.bf16.msra.mxu0 %v4290
        %4310 = vmatprep.subr.bf16.mxu0 0
        %4311 = vmatpush1.bf16.msra.mxu0 %v4291
        %4312 = vmatprep.subr.bf16.mxu0 0
        %4313 = vmatpush1.bf16.msra.mxu0 %v4292
        %4314 = vmatprep.subr.bf16.mxu0 0
        %4315 = vmatpush1.bf16.msra.mxu0 %v4293
        %4316 = vmatprep.subr.bf16.mxu0 0
        %4317 = vmatpush1.bf16.msra.mxu0 %v4294
        %4318 = vmatprep.subr.bf16.mxu0 0
        %4319 = vmatpush1.bf16.msra.mxu0 %v4295
        %4320 = vmatprep.subr.bf16.mxu0 0
        %4321 = vmatpush1.bf16.msra.mxu0 0
        %4322 = vmatprep.subr.bf16.mxu0 0
        %4323 = vmatpush1.bf16.msra.mxu0 0
        %4324 = vmatprep.subr.bf16.mxu0 0
        %4325 = vmatpush1.bf16.msra.mxu0 0
        %4326 = vmatprep.subr.bf16.mxu0 0
        %4327 = vmatpush1.bf16.msra.mxu0 0
        %4328 = vmatprep.subr.bf16.mxu0 0
        %4329 = vmatpush1.bf16.msra.mxu0 0
        %4330 = vmatprep.subr.bf16.mxu0 0
        %4331 = vmatpush1.bf16.msra.mxu0 0
        %4332 = vmatprep.subr.bf16.mxu0 0
        %4333 = vmatpush1.bf16.msra.mxu0 0
        %4334 = vmatprep.subr.bf16.mxu0 0
        %4335 = vmatpush1.bf16.msra.mxu0 0
        %4336 = vmatprep.mubr.bf16.mxu0 0
        %4337 = vmatmul.mubr.bf16.gmra.mrb[0].mxu0 %v4223
        %v4338 = vpop.f32.mrb[0].mxu0
        %v4339 = vadd.f32 0.0, %v4338
        %v4340 = vpop.f32.mrb[0].mxu0
        %v4341 = vpop.f32.mrb[0].mxu0
        %v4342 = vadd.f32 0.0, %v4341
        %v4343 = vpop.f32.mrb[0].mxu0
        %4344 = vmatprep.mubr.bf16.mxu0 0
        %4345 = vmatmul.mubr.bf16.gmra.mrb[0].mxu0 %v4231
        %v4346 = vpop.f32.mrb[0].mxu0
        %v4347 = vadd.f32 0.0, %v4346
        %v4348 = vpop.f32.mrb[0].mxu0
        %v4349 = vpop.f32.mrb[0].mxu0
        %v4350 = vadd.f32 0.0, %v4349
        %v4351 = vpop.f32.mrb[0].mxu0
        %4352 = vmatprep.mubr.bf16.mxu0 0
        %4353 = vmatmul.mubr.bf16.gmra.mrb[0].mxu0 %v4239
        %v4354 = vpop.f32.mrb[0].mxu0
        %v4355 = vadd.f32 0.0, %v4354
        %v4356 = vpop.f32.mrb[0].mxu0
        %v4357 = vpop.f32.mrb[0].mxu0
        %v4358 = vadd.f32 0.0, %v4357
        %v4359 = vpop.f32.mrb[0].mxu0
        %4360 = vmatprep.mubr.bf16.mxu0 0
        %4361 = vmatmul.mubr.bf16.gmra.mrb[0].mxu0 %v4247
        %v4362 = vpop.f32.mrb[0].mxu0
        %v4363 = vadd.f32 0.0, %v4362
        %v4364 = vpop.f32.mrb[0].mxu0
        %v4365 = vpop.f32.mrb[0].mxu0
        %v4366 = vadd.f32 0.0, %v4365
        %v4367 = vpop.f32.mrb[0].mxu0
        %4368 = vmatprep.mubr.bf16.mxu0 0
        %4369 = vmatmul.mubr.bf16.gmra.mrb[0].mxu0 %v4250
        %v4370 = vpop.f32.mrb[0].mxu0
        %v4371 = vadd.f32 0.0, %v4370
        %v4372 = vpop.f32.mrb[0].mxu0
        %v4373 = vpop.f32.mrb[0].mxu0
        %v4374 = vpop.f32.mrb[0].mxu0
        %4375 = vdwg.mxu0
        %v4392 = vunpack.c.l.b16 %v4179
        %v4393 = vunpack.c.l.b16 %v4180
        %v4394 = vunpack.c.l.b16 %v4181
        %v4395 = vunpack.c.l.b16 %v4182
        %v4396 = vunpack.c.l.b16 %v4183
        %v4397 = vunpack.c.l.b16 %v4184
        %v4398 = vunpack.c.l.b16 %v4185
        %v4399 = vunpack.c.l.b16 %v4186
        %v4400 = vunpack.c.l.b16 %v4187
        %v4401 = vunpack.c.l.b16 %v4188
        %v4402 = vunpack.c.l.b16 %v4189
        %v4403 = vunpack.c.l.b16 %v4190
        %v4404 = vunpack.c.l.b16 %v4191
        %v4405 = vunpack.c.l.b16 %v4192
        %v4406 = vunpack.c.l.b16 %v4193
        %v4407 = vunpack.c.l.b16 %v4194
        %v4408 = vpack.c.b16 %v4393, %v4392
        %v4409 = vpack.c.b16 %v4395, %v4394
        %v4410 = vpack.c.b16 %v4397, %v4396
        %v4411 = vpack.c.b16 %v4399, %v4398
        %v4412 = vpack.c.b16 %v4401, %v4400
        %v4413 = vpack.c.b16 %v4403, %v4402
        %v4414 = vpack.c.b16 %v4405, %v4404
        %v4415 = vpack.c.b16 %v4407, %v4406
        %4424 = vmatprep.subr.bf16.mxu0 0
        %4425 = vmatpush1.bf16.msra.mxu0 %v4408
        %4426 = vmatprep.subr.bf16.mxu0 0
        %4427 = vmatpush1.bf16.msra.mxu0 %v4409
        %4428 = vmatprep.subr.bf16.mxu0 0
        %4429 = vmatpush1.bf16.msra.mxu0 %v4410
        %4430 = vmatprep.subr.bf16.mxu0 0
        %4431 = vmatpush1.bf16.msra.mxu0 %v4411
        %4432 = vmatprep.subr.bf16.mxu0 0
        %4433 = vmatpush1.bf16.msra.mxu0 %v4412
        %4434 = vmatprep.subr.bf16.mxu0 0
        %4435 = vmatpush1.bf16.msra.mxu0 %v4413
        %4436 = vmatprep.subr.bf16.mxu0 0
        %4437 = vmatpush1.bf16.msra.mxu0 %v4414
        %4438 = vmatprep.subr.bf16.mxu0 0
        %4439 = vmatpush1.bf16.msra.mxu0 %v4415
        %4440 = vmatprep.subr.bf16.mxu0 0
        %4441 = vmatpush1.bf16.msra.mxu0 0
        %4442 = vmatprep.subr.bf16.mxu0 0
        %4443 = vmatpush1.bf16.msra.mxu0 0
        %4444 = vmatprep.subr.bf16.mxu0 0
        %4445 = vmatpush1.bf16.msra.mxu0 0
        %4446 = vmatprep.subr.bf16.mxu0 0
        %4447 = vmatpush1.bf16.msra.mxu0 0
        %4448 = vmatprep.subr.bf16.mxu0 0
        %4449 = vmatpush1.bf16.msra.mxu0 0
        %4450 = vmatprep.subr.bf16.mxu0 0
        %4451 = vmatpush1.bf16.msra.mxu0 0
        %4452 = vmatprep.subr.bf16.mxu0 0
        %4453 = vmatpush1.bf16.msra.mxu0 0
        %4454 = vmatprep.subr.bf16.mxu0 0
        %4455 = vmatpush1.bf16.msra.mxu0 0
        %4456 = vmatprep.mubr.bf16.mxu0 0
        %4457 = vmatmul.mubr.bf16.gmra.mrb[0].mxu0 %v4173
        %v4458 = vpop.f32.mrb[0].mxu0
        %v4459 = vadd.f32 %v4339, %v4458
        %v4460 = vpop.f32.mrb[0].mxu0
        %v4461 = vpop.f32.mrb[0].mxu0
        %v4462 = vadd.f32 %v4342, %v4461
        %v4463 = vpop.f32.mrb[0].mxu0
        %4464 = vmatprep.mubr.bf16.mxu0 0
        %4465 = vmatmul.mubr.bf16.gmra.mrb[0].mxu0 %v4174
        %v4466 = vpop.f32.mrb[0].mxu0
        %v4467 = vadd.f32 %v4347, %v4466
        %v4468 = vpop.f32.mrb[0].mxu0
        %v4469 = vpop.f32.mrb[0].mxu0
        %v4470 = vadd.f32 %v4350, %v4469
        %v4471 = vpop.f32.mrb[0].mxu0
        %4472 = vmatprep.mubr.bf16.mxu0 0
        %4473 = vmatmul.mubr.bf16.gmra.mrb[0].mxu0 %v4175
        %v4474 = vpop.f32.mrb[0].mxu0
        %v4475 = vadd.f32 %v4355, %v4474
        %v4476 = vpop.f32.mrb[0].mxu0
        %v4477 = vpop.f32.mrb[0].mxu0
        %v4478 = vadd.f32 %v4358, %v4477
        %v4479 = vpop.f32.mrb[0].mxu0
        %4480 = vmatprep.mubr.bf16.mxu0 0
        %4481 = vmatmul.mubr.bf16.gmra.mrb[0].mxu0 %v4176
        %v4482 = vpop.f32.mrb[0].mxu0
        %v4483 = vadd.f32 %v4363, %v4482
        %v4484 = vpop.f32.mrb[0].mxu0
        %v4485 = vpop.f32.mrb[0].mxu0
        %v4486 = vadd.f32 %v4366, %v4485
        %v4487 = vpop.f32.mrb[0].mxu0
        %4488 = vmatprep.mubr.bf16.mxu0 0
        %4489 = vmatmul.mubr.bf16.gmra.mrb[0].mxu0 %v4177
        %v4490 = vpop.f32.mrb[0].mxu0
        %v4491 = vadd.f32 %v4371, %v4490
        %v4492 = vpop.f32.mrb[0].mxu0
        %v4493 = vpop.f32.mrb[0].mxu0
        %v4494 = vpop.f32.mrb[0].mxu0
        %4495 = vdwg.mxu0
        %s4496 = scalar_lea.vmem [#allocation7], 128
        %v4497 = vld [vmem:[%s4496] sm:$0xf]
        %v4498 = vld [vmem:[%s4496 + $0x4] sm:$0xf]
        %v4499 = vld [vmem:[%s4496 + $0x8] sm:$0xf]
        %v4500 = vld [vmem:[%s4496 + $0xc] sm:$0xf]
        %v4501 = vld [vmem:[%s4496 + $0x10] sm:$0xf]
        %v4502 = vld [vmem:[%s4496 + $0x14] sm:$0xf]
        %v4503 = vld [vmem:[%s4496 + $0x18] sm:$0xf]
        %v4504 = vld [vmem:[%s4496 + $0x1c] sm:$0xf]
        %v4505 = vld [vmem:[%s4496 + $0x20] sm:$0xf]
        %v4506 = vld [vmem:[%s4496 + $0x24] sm:$0xf]
        %v4507 = vld [vmem:[%s4496 + $0x28] sm:$0xf]
        %v4508 = vld [vmem:[%s4496 + $0x2c] sm:$0xf]
        %v4509 = vld [vmem:[%s4496 + $0x30] sm:$0xf]
        %v4510 = vld [vmem:[%s4496 + $0x34] sm:$0xf]
        %v4511 = vld [vmem:[%s4496 + $0x38] sm:$0xf]
        %v4512 = vld [vmem:[%s4496 + $0x3c] sm:$0xf]
        %v4518 = vrot.slane %v4173, 1
        %v4519 = vrot.slane %v4174, 1
        %v4520 = vsel %vm3413, %v4518, %v4519
        %v4521 = vrot.slane %v4175, 1
        %v4522 = vsel %vm3413, %v4519, %v4521
        %v4523 = vrot.slane %v4176, 1
        %v4524 = vsel %vm3413, %v4521, %v4523
        %v4525 = vrot.slane %v4177, 1
        %v4526 = vsel %vm3413, %v4523, %v4525
        %v4548 = vunpack.c.l.b16 %v4497
        %v4549 = vunpack.c.l.b16 %v4498
        %v4550 = vunpack.c.l.b16 %v4499
        %v4551 = vunpack.c.l.b16 %v4500
        %v4552 = vunpack.c.l.b16 %v4501
        %v4553 = vunpack.c.l.b16 %v4502
        %v4554 = vunpack.c.l.b16 %v4503
        %v4555 = vunpack.c.l.b16 %v4504
        %v4556 = vunpack.c.l.b16 %v4505
        %v4557 = vunpack.c.l.b16 %v4506
        %v4558 = vunpack.c.l.b16 %v4507
        %v4559 = vunpack.c.l.b16 %v4508
        %v4560 = vunpack.c.l.b16 %v4509
        %v4561 = vunpack.c.l.b16 %v4510
        %v4562 = vunpack.c.l.b16 %v4511
        %v4563 = vunpack.c.l.b16 %v4512
        %v4564 = vpack.c.b16 %v4549, %v4548
        %v4565 = vpack.c.b16 %v4551, %v4550
        %v4566 = vpack.c.b16 %v4553, %v4552
        %v4567 = vpack.c.b16 %v4555, %v4554
        %v4568 = vpack.c.b16 %v4557, %v4556
        %v4569 = vpack.c.b16 %v4559, %v4558
        %v4570 = vpack.c.b16 %v4561, %v4560
        %v4571 = vpack.c.b16 %v4563, %v4562
        %4580 = vmatprep.subr.bf16.mxu0 0
        %4581 = vmatpush1.bf16.msra.mxu0 %v4564
        %4582 = vmatprep.subr.bf16.mxu0 0
        %4583 = vmatpush1.bf16.msra.mxu0 %v4565
        %4584 = vmatprep.subr.bf16.mxu0 0
        %4585 = vmatpush1.bf16.msra.mxu0 %v4566
        %4586 = vmatprep.subr.bf16.mxu0 0
        %4587 = vmatpush1.bf16.msra.mxu0 %v4567
        %4588 = vmatprep.subr.bf16.mxu0 0
        %4589 = vmatpush1.bf16.msra.mxu0 %v4568
        %4590 = vmatprep.subr.bf16.mxu0 0
        %4591 = vmatpush1.bf16.msra.mxu0 %v4569
        %4592 = vmatprep.subr.bf16.mxu0 0
        %4593 = vmatpush1.bf16.msra.mxu0 %v4570
        %4594 = vmatprep.subr.bf16.mxu0 0
        %4595 = vmatpush1.bf16.msra.mxu0 %v4571
        %4596 = vmatprep.subr.bf16.mxu0 0
        %4597 = vmatpush1.bf16.msra.mxu0 0
        %4598 = vmatprep.subr.bf16.mxu0 0
        %4599 = vmatpush1.bf16.msra.mxu0 0
        %4600 = vmatprep.subr.bf16.mxu0 0
        %4601 = vmatpush1.bf16.msra.mxu0 0
        %4602 = vmatprep.subr.bf16.mxu0 0
        %4603 = vmatpush1.bf16.msra.mxu0 0
        %4604 = vmatprep.subr.bf16.mxu0 0
        %4605 = vmatpush1.bf16.msra.mxu0 0
        %4606 = vmatprep.subr.bf16.mxu0 0
        %4607 = vmatpush1.bf16.msra.mxu0 0
        %4608 = vmatprep.subr.bf16.mxu0 0
        %4609 = vmatpush1.bf16.msra.mxu0 0
        %4610 = vmatprep.subr.bf16.mxu0 0
        %4611 = vmatpush1.bf16.msra.mxu0 0
        %4612 = vmatprep.mubr.bf16.mxu0 0
        %4613 = vmatmul.mubr.bf16.gmra.mrb[0].mxu0 %v4520
        %v4614 = vpop.f32.mrb[0].mxu0
        %v4615 = vadd.f32 0.0, %v4614
        %v4616 = vpop.f32.mrb[0].mxu0
        %v4617 = vpop.f32.mrb[0].mxu0
        %v4618 = vadd.f32 0.0, %v4617
        %v4619 = vpop.f32.mrb[0].mxu0
        %4620 = vmatprep.mubr.bf16.mxu0 0
        %4621 = vmatmul.mubr.bf16.gmra.mrb[0].mxu0 %v4522
        %v4622 = vpop.f32.mrb[0].mxu0
        %v4623 = vadd.f32 0.0, %v4622
        %v4624 = vpop.f32.mrb[0].mxu0
        %v4625 = vpop.f32.mrb[0].mxu0
        %v4626 = vadd.f32 0.0, %v4625
        %v4627 = vpop.f32.mrb[0].mxu0
        %4628 = vmatprep.mubr.bf16.mxu0 0
        %4629 = vmatmul.mubr.bf16.gmra.mrb[0].mxu0 %v4524
        %v4630 = vpop.f32.mrb[0].mxu0
        %v4631 = vadd.f32 0.0, %v4630
        %v4632 = vpop.f32.mrb[0].mxu0
        %v4633 = vpop.f32.mrb[0].mxu0
        %v4634 = vadd.f32 0.0, %v4633
        %v4635 = vpop.f32.mrb[0].mxu0
        %4636 = vmatprep.mubr.bf16.mxu0 0
        %4637 = vmatmul.mubr.bf16.gmra.mrb[0].mxu0 %v4526
        %v4638 = vpop.f32.mrb[0].mxu0
        %v4639 = vadd.f32 0.0, %v4638
        %v4640 = vpop.f32.mrb[0].mxu0
        %v4641 = vpop.f32.mrb[0].mxu0
        %v4642 = vadd.f32 0.0, %v4641
        %v4643 = vpop.f32.mrb[0].mxu0
        %4644 = vmatprep.mubr.bf16.mxu0 0
        %4645 = vmatmul.mubr.bf16.gmra.mrb[0].mxu0 %v4525
        %v4646 = vpop.f32.mrb[0].mxu0
        %v4647 = vadd.f32 0.0, %v4646
        %v4648 = vpop.f32.mrb[0].mxu0
        %v4649 = vpop.f32.mrb[0].mxu0
        %v4650 = vpop.f32.mrb[0].mxu0
        %4651 = vdwg.mxu0
        %v4652 = vadd.f32 %v4459, %v4615
        %v4653 = vadd.f32 %v4462, %v4618
        %v4654 = vadd.f32 %v4467, %v4623
        %v4655 = vadd.f32 %v4470, %v4626
        %v4656 = vadd.f32 %v4475, %v4631
        %v4657 = vadd.f32 %v4478, %v4634
        %v4658 = vadd.f32 %v4483, %v4639
        %v4659 = vadd.f32 %v4486, %v4642
        %v4660 = vadd.f32 %v4491, %v4647
        %s4661 = scalar_lea.vmem [#allocation7], 192
        %v4662 = vld [vmem:[%s4661] sm:$0xf]
        %v4663 = vld [vmem:[%s4661 + $0x4] sm:$0xf]
        %v4664 = vld [vmem:[%s4661 + $0x8] sm:$0xf]
        %v4665 = vld [vmem:[%s4661 + $0xc] sm:$0xf]
        %v4666 = vld [vmem:[%s4661 + $0x10] sm:$0xf]
        %v4667 = vld [vmem:[%s4661 + $0x14] sm:$0xf]
        %v4668 = vld [vmem:[%s4661 + $0x18] sm:$0xf]
        %v4669 = vld [vmem:[%s4661 + $0x1c] sm:$0xf]
        %v4670 = vld [vmem:[%s4661 + $0x20] sm:$0xf]
        %v4671 = vld [vmem:[%s4661 + $0x24] sm:$0xf]
        %v4672 = vld [vmem:[%s4661 + $0x28] sm:$0xf]
        %v4673 = vld [vmem:[%s4661 + $0x2c] sm:$0xf]
        %v4674 = vld [vmem:[%s4661 + $0x30] sm:$0xf]
        %v4675 = vld [vmem:[%s4661 + $0x34] sm:$0xf]
        %v4676 = vld [vmem:[%s4661 + $0x38] sm:$0xf]
        %v4677 = vld [vmem:[%s4661 + $0x3c] sm:$0xf]
        %v4678 = vrot.slane %v4173, 5
        %v4679 = vrot.slane %v4174, 5
        %v4680 = vsel %vm2681, %v4678, %v4679
        %v4681 = vrot.slane %v4175, 5
        %v4682 = vsel %vm2681, %v4679, %v4681
        %v4683 = vrot.slane %v4176, 5
        %v4684 = vsel %vm2681, %v4681, %v4683
        %v4685 = vrot.slane %v4177, 5
        %v4686 = vsel %vm2681, %v4683, %v4685
        %v4708 = vunpack.c.l.b16 %v4662
        %v4709 = vunpack.c.l.b16 %v4663
        %v4710 = vunpack.c.l.b16 %v4664
        %v4711 = vunpack.c.l.b16 %v4665
        %v4712 = vunpack.c.l.b16 %v4666
        %v4713 = vunpack.c.l.b16 %v4667
        %v4714 = vunpack.c.l.b16 %v4668
        %v4715 = vunpack.c.l.b16 %v4669
        %v4716 = vunpack.c.l.b16 %v4670
        %v4717 = vunpack.c.l.b16 %v4671
        %v4718 = vunpack.c.l.b16 %v4672
        %v4719 = vunpack.c.l.b16 %v4673
        %v4720 = vunpack.c.l.b16 %v4674
        %v4721 = vunpack.c.l.b16 %v4675
        %v4722 = vunpack.c.l.b16 %v4676
        %v4723 = vunpack.c.l.b16 %v4677
        %v4724 = vpack.c.b16 %v4709, %v4708
        %v4725 = vpack.c.b16 %v4711, %v4710
        %v4726 = vpack.c.b16 %v4713, %v4712
        %v4727 = vpack.c.b16 %v4715, %v4714
        %v4728 = vpack.c.b16 %v4717, %v4716
        %v4729 = vpack.c.b16 %v4719, %v4718
        %v4730 = vpack.c.b16 %v4721, %v4720
        %v4731 = vpack.c.b16 %v4723, %v4722
        %4740 = vmatprep.subr.bf16.mxu0 0
        %4741 = vmatpush1.bf16.msra.mxu0 %v4724
        %4742 = vmatprep.subr.bf16.mxu0 0
        %4743 = vmatpush1.bf16.msra.mxu0 %v4725
        %4744 = vmatprep.subr.bf16.mxu0 0
        %4745 = vmatpush1.bf16.msra.mxu0 %v4726
        %4746 = vmatprep.subr.bf16.mxu0 0
        %4747 = vmatpush1.bf16.msra.mxu0 %v4727
        %4748 = vmatprep.subr.bf16.mxu0 0
        %4749 = vmatpush1.bf16.msra.mxu0 %v4728
        %4750 = vmatprep.subr.bf16.mxu0 0
        %4751 = vmatpush1.bf16.msra.mxu0 %v4729
        %4752 = vmatprep.subr.bf16.mxu0 0
        %4753 = vmatpush1.bf16.msra.mxu0 %v4730
        %4754 = vmatprep.subr.bf16.mxu0 0
        %4755 = vmatpush1.bf16.msra.mxu0 %v4731
        %4756 = vmatprep.subr.bf16.mxu0 0
        %4757 = vmatpush1.bf16.msra.mxu0 0
        %4758 = vmatprep.subr.bf16.mxu0 0
        %4759 = vmatpush1.bf16.msra.mxu0 0
        %4760 = vmatprep.subr.bf16.mxu0 0
        %4761 = vmatpush1.bf16.msra.mxu0 0
        %4762 = vmatprep.subr.bf16.mxu0 0
        %4763 = vmatpush1.bf16.msra.mxu0 0
        %4764 = vmatprep.subr.bf16.mxu0 0
        %4765 = vmatpush1.bf16.msra.mxu0 0
        %4766 = vmatprep.subr.bf16.mxu0 0
        %4767 = vmatpush1.bf16.msra.mxu0 0
        %4768 = vmatprep.subr.bf16.mxu0 0
        %4769 = vmatpush1.bf16.msra.mxu0 0
        %4770 = vmatprep.subr.bf16.mxu0 0
        %4771 = vmatpush1.bf16.msra.mxu0 0
        %4772 = vmatprep.mubr.bf16.mxu0 0
        %4773 = vmatmul.mubr.bf16.gmra.mrb[0].mxu0 %v4680
        %v4774 = vpop.f32.mrb[0].mxu0
        %v4775 = vadd.f32 0.0, %v4774
        %v4776 = vpop.f32.mrb[0].mxu0
        %v4777 = vpop.f32.mrb[0].mxu0
        %v4778 = vadd.f32 0.0, %v4777
        %v4779 = vpop.f32.mrb[0].mxu0
        %4780 = vmatprep.mubr.bf16.mxu0 0
        %4781 = vmatmul.mubr.bf16.gmra.mrb[0].mxu0 %v4682
        %v4782 = vpop.f32.mrb[0].mxu0
        %v4783 = vadd.f32 0.0, %v4782
        %v4784 = vpop.f32.mrb[0].mxu0
        %v4785 = vpop.f32.mrb[0].mxu0
        %v4786 = vadd.f32 0.0, %v4785
        %v4787 = vpop.f32.mrb[0].mxu0
        %4788 = vmatprep.mubr.bf16.mxu0 0
        %4789 = vmatmul.mubr.bf16.gmra.mrb[0].mxu0 %v4684
        %v4790 = vpop.f32.mrb[0].mxu0
        %v4791 = vadd.f32 0.0, %v4790
        %v4792 = vpop.f32.mrb[0].mxu0
        %v4793 = vpop.f32.mrb[0].mxu0
        %v4794 = vadd.f32 0.0, %v4793
        %v4795 = vpop.f32.mrb[0].mxu0
        %4796 = vmatprep.mubr.bf16.mxu0 0
        %4797 = vmatmul.mubr.bf16.gmra.mrb[0].mxu0 %v4686
        %v4798 = vpop.f32.mrb[0].mxu0
        %v4799 = vadd.f32 0.0, %v4798
        %v4800 = vpop.f32.mrb[0].mxu0
        %v4801 = vpop.f32.mrb[0].mxu0
        %v4802 = vadd.f32 0.0, %v4801
        %v4803 = vpop.f32.mrb[0].mxu0
        %4804 = vmatprep.mubr.bf16.mxu0 0
        %4805 = vmatmul.mubr.bf16.gmra.mrb[0].mxu0 %v4685
        %v4806 = vpop.f32.mrb[0].mxu0
        %v4807 = vadd.f32 0.0, %v4806
        %v4808 = vpop.f32.mrb[0].mxu0
        %v4809 = vpop.f32.mrb[0].mxu0
        %v4810 = vpop.f32.mrb[0].mxu0
        %4811 = vdwg.mxu0
        %v4812 = vadd.f32 %v4652, %v4775
        %v4813 = vadd.f32 %v4653, %v4778
        %v4814 = vadd.f32 %v4654, %v4783
        %v4815 = vadd.f32 %v4655, %v4786
        %v4816 = vadd.f32 %v4656, %v4791
        %v4817 = vadd.f32 %v4657, %v4794
        %v4818 = vadd.f32 %v4658, %v4799
        %v4819 = vadd.f32 %v4659, %v4802
        %v4820 = vadd.f32 %v4660, %v4807
        %s4821 = scalar_lea.vmem [#allocation7], 256
        %v4822 = vld [vmem:[%s4821] sm:$0xf]
        %v4823 = vld [vmem:[%s4821 + $0x4] sm:$0xf]
        %v4824 = vld [vmem:[%s4821 + $0x8] sm:$0xf]
        %v4825 = vld [vmem:[%s4821 + $0xc] sm:$0xf]
        %v4826 = vld [vmem:[%s4821 + $0x10] sm:$0xf]
        %v4827 = vld [vmem:[%s4821 + $0x14] sm:$0xf]
        %v4828 = vld [vmem:[%s4821 + $0x18] sm:$0xf]
        %v4829 = vld [vmem:[%s4821 + $0x1c] sm:$0xf]
        %v4830 = vld [vmem:[%s4821 + $0x20] sm:$0xf]
        %v4831 = vld [vmem:[%s4821 + $0x24] sm:$0xf]
        %v4832 = vld [vmem:[%s4821 + $0x28] sm:$0xf]
        %v4833 = vld [vmem:[%s4821 + $0x2c] sm:$0xf]
        %v4834 = vld [vmem:[%s4821 + $0x30] sm:$0xf]
        %v4835 = vld [vmem:[%s4821 + $0x34] sm:$0xf]
        %v4836 = vld [vmem:[%s4821 + $0x38] sm:$0xf]
        %v4837 = vld [vmem:[%s4821 + $0x3c] sm:$0xf]
        %v4838 = vrot.slane %v4213, 5
        %v4839 = vrot.slane %v4215, 6
        %v4840 = vor.u32 %v4838, %v4839
        %v4841 = vrot.slane %v4224, 5
        %v4842 = vrot.slane %v4220, 6
        %v4843 = vor.u32 %v4841, %v4842
        %v4844 = vsel %vm3037, %v4840, %v4843
        %v4845 = vrot.slane %v4232, 5
        %v4846 = vrot.slane %v4228, 6
        %v4847 = vor.u32 %v4845, %v4846
        %v4848 = vsel %vm3037, %v4843, %v4847
        %v4849 = vrot.slane %v4240, 5
        %v4850 = vrot.slane %v4236, 6
        %v4851 = vor.u32 %v4849, %v4850
        %v4852 = vsel %vm3037, %v4847, %v4851
        %v4853 = vrot.slane %v4248, 5
        %v4854 = vrot.slane %v4244, 6
        %v4855 = vor.u32 %v4853, %v4854
        %v4856 = vsel %vm3037, %v4851, %v4855
        %v4858 = vshll.u32 %v4178, 16
        %v4860 = vrot.slane %v4858, 6
        %v4861 = vsel %vm3037, %v4855, %v4860
        %v4883 = vunpack.c.l.b16 %v4822
        %v4884 = vunpack.c.l.b16 %v4823
        %v4885 = vunpack.c.l.b16 %v4824
        %v4886 = vunpack.c.l.b16 %v4825
        %v4887 = vunpack.c.l.b16 %v4826
        %v4888 = vunpack.c.l.b16 %v4827
        %v4889 = vunpack.c.l.b16 %v4828
        %v4890 = vunpack.c.l.b16 %v4829
        %v4891 = vunpack.c.l.b16 %v4830
        %v4892 = vunpack.c.l.b16 %v4831
        %v4893 = vunpack.c.l.b16 %v4832
        %v4894 = vunpack.c.l.b16 %v4833
        %v4895 = vunpack.c.l.b16 %v4834
        %v4896 = vunpack.c.l.b16 %v4835
        %v4897 = vunpack.c.l.b16 %v4836
        %v4898 = vunpack.c.l.b16 %v4837
        %v4899 = vpack.c.b16 %v4884, %v4883
        %v4900 = vpack.c.b16 %v4886, %v4885
        %v4901 = vpack.c.b16 %v4888, %v4887
        %v4902 = vpack.c.b16 %v4890, %v4889
        %v4903 = vpack.c.b16 %v4892, %v4891
        %v4904 = vpack.c.b16 %v4894, %v4893
        %v4905 = vpack.c.b16 %v4896, %v4895
        %v4906 = vpack.c.b16 %v4898, %v4897
        %4915 = vmatprep.subr.bf16.mxu0 0
        %4916 = vmatpush1.bf16.msra.mxu0 %v4899
        %4917 = vmatprep.subr.bf16.mxu0 0
        %4918 = vmatpush1.bf16.msra.mxu0 %v4900
        %4919 = vmatprep.subr.bf16.mxu0 0
        %4920 = vmatpush1.bf16.msra.mxu0 %v4901
        %4921 = vmatprep.subr.bf16.mxu0 0
        %4922 = vmatpush1.bf16.msra.mxu0 %v4902
        %4923 = vmatprep.subr.bf16.mxu0 0
        %4924 = vmatpush1.bf16.msra.mxu0 %v4903
        %4925 = vmatprep.subr.bf16.mxu0 0
        %4926 = vmatpush1.bf16.msra.mxu0 %v4904
        %4927 = vmatprep.subr.bf16.mxu0 0
        %4928 = vmatpush1.bf16.msra.mxu0 %v4905
        %4929 = vmatprep.subr.bf16.mxu0 0
        %4930 = vmatpush1.bf16.msra.mxu0 %v4906
        %4931 = vmatprep.subr.bf16.mxu0 0
        %4932 = vmatpush1.bf16.msra.mxu0 0
        %4933 = vmatprep.subr.bf16.mxu0 0
        %4934 = vmatpush1.bf16.msra.mxu0 0
        %4935 = vmatprep.subr.bf16.mxu0 0
        %4936 = vmatpush1.bf16.msra.mxu0 0
        %4937 = vmatprep.subr.bf16.mxu0 0
        %4938 = vmatpush1.bf16.msra.mxu0 0
        %4939 = vmatprep.subr.bf16.mxu0 0
        %4940 = vmatpush1.bf16.msra.mxu0 0
        %4941 = vmatprep.subr.bf16.mxu0 0
        %4942 = vmatpush1.bf16.msra.mxu0 0
        %4943 = vmatprep.subr.bf16.mxu0 0
        %4944 = vmatpush1.bf16.msra.mxu0 0
        %4945 = vmatprep.subr.bf16.mxu0 0
        %4946 = vmatpush1.bf16.msra.mxu0 0
        %4947 = vmatprep.mubr.bf16.mxu0 0
        %4948 = vmatmul.mubr.bf16.gmra.mrb[0].mxu0 %v4844
        %v4949 = vpop.f32.mrb[0].mxu0
        %v4950 = vadd.f32 0.0, %v4949
        %v4951 = vpop.f32.mrb[0].mxu0
        %v4952 = vpop.f32.mrb[0].mxu0
        %v4953 = vadd.f32 0.0, %v4952
        %v4954 = vpop.f32.mrb[0].mxu0
        %4955 = vmatprep.mubr.bf16.mxu0 0
        %4956 = vmatmul.mubr.bf16.gmra.mrb[0].mxu0 %v4848
        %v4957 = vpop.f32.mrb[0].mxu0
        %v4958 = vadd.f32 0.0, %v4957
        %v4959 = vpop.f32.mrb[0].mxu0
        %v4960 = vpop.f32.mrb[0].mxu0
        %v4961 = vadd.f32 0.0, %v4960
        %v4962 = vpop.f32.mrb[0].mxu0
        %4963 = vmatprep.mubr.bf16.mxu0 0
        %4964 = vmatmul.mubr.bf16.gmra.mrb[0].mxu0 %v4852
        %v4965 = vpop.f32.mrb[0].mxu0
        %v4966 = vadd.f32 0.0, %v4965
        %v4967 = vpop.f32.mrb[0].mxu0
        %v4968 = vpop.f32.mrb[0].mxu0
        %v4969 = vadd.f32 0.0, %v4968
        %v4970 = vpop.f32.mrb[0].mxu0
        %4971 = vmatprep.mubr.bf16.mxu0 0
        %4972 = vmatmul.mubr.bf16.gmra.mrb[0].mxu0 %v4856
        %v4973 = vpop.f32.mrb[0].mxu0
        %v4974 = vadd.f32 0.0, %v4973
        %v4975 = vpop.f32.mrb[0].mxu0
        %v4976 = vpop.f32.mrb[0].mxu0
        %v4977 = vadd.f32 0.0, %v4976
        %v4978 = vpop.f32.mrb[0].mxu0
        %4979 = vmatprep.mubr.bf16.mxu0 0
        %4980 = vmatmul.mubr.bf16.gmra.mrb[0].mxu0 %v4861
        %v4981 = vpop.f32.mrb[0].mxu0
        %v4982 = vadd.f32 0.0, %v4981
        %v4983 = vpop.f32.mrb[0].mxu0
        %v4984 = vpop.f32.mrb[0].mxu0
        %v4985 = vpop.f32.mrb[0].mxu0
        %4986 = vdwg.mxu0
        %v4987 = vadd.f32 %v4812, %v4950
        %v4988 = vadd.f32 %v4813, %v4953
        %v4989 = vadd.f32 %v4814, %v4958
        %v4990 = vadd.f32 %v4815, %v4961
        %v4991 = vadd.f32 %v4816, %v4966
        %v4992 = vadd.f32 %v4817, %v4969
        %v4993 = vadd.f32 %v4818, %v4974
        %v4994 = vadd.f32 %v4819, %v4977
        %v4995 = vadd.f32 %v4820, %v4982
        %s4996 = scalar_lea.vmem [#allocation7], 320
        %v4997 = vld [vmem:[%s4996] sm:$0xf]
        %v4998 = vld [vmem:[%s4996 + $0x4] sm:$0xf]
        %v4999 = vld [vmem:[%s4996 + $0x8] sm:$0xf]
        %v5000 = vld [vmem:[%s4996 + $0xc] sm:$0xf]
        %v5001 = vld [vmem:[%s4996 + $0x10] sm:$0xf]
        %v5002 = vld [vmem:[%s4996 + $0x14] sm:$0xf]
        %v5003 = vld [vmem:[%s4996 + $0x18] sm:$0xf]
        %v5004 = vld [vmem:[%s4996 + $0x1c] sm:$0xf]
        %v5005 = vld [vmem:[%s4996 + $0x20] sm:$0xf]
        %v5006 = vld [vmem:[%s4996 + $0x24] sm:$0xf]
        %v5007 = vld [vmem:[%s4996 + $0x28] sm:$0xf]
        %v5008 = vld [vmem:[%s4996 + $0x2c] sm:$0xf]
        %v5009 = vld [vmem:[%s4996 + $0x30] sm:$0xf]
        %v5010 = vld [vmem:[%s4996 + $0x34] sm:$0xf]
        %v5011 = vld [vmem:[%s4996 + $0x38] sm:$0xf]
        %v5012 = vld [vmem:[%s4996 + $0x3c] sm:$0xf]
        %v5014 = vrot.slane %v4173, 6
        %v5015 = vrot.slane %v4174, 6
        %v5016 = vsel %vm2053, %v5014, %v5015
        %v5017 = vrot.slane %v4175, 6
        %v5018 = vsel %vm2053, %v5015, %v5017
        %v5019 = vrot.slane %v4176, 6
        %v5020 = vsel %vm2053, %v5017, %v5019
        %v5021 = vrot.slane %v4177, 6
        %v5022 = vsel %vm2053, %v5019, %v5021
        %v5023 = vrot.slane %v4178, 6
        %v5024 = vsel %vm2053, %v5021, %v5023
        %v5046 = vunpack.c.l.b16 %v4997
        %v5047 = vunpack.c.l.b16 %v4998
        %v5048 = vunpack.c.l.b16 %v4999
        %v5049 = vunpack.c.l.b16 %v5000
        %v5050 = vunpack.c.l.b16 %v5001
        %v5051 = vunpack.c.l.b16 %v5002
        %v5052 = vunpack.c.l.b16 %v5003
        %v5053 = vunpack.c.l.b16 %v5004
        %v5054 = vunpack.c.l.b16 %v5005
        %v5055 = vunpack.c.l.b16 %v5006
        %v5056 = vunpack.c.l.b16 %v5007
        %v5057 = vunpack.c.l.b16 %v5008
        %v5058 = vunpack.c.l.b16 %v5009
        %v5059 = vunpack.c.l.b16 %v5010
        %v5060 = vunpack.c.l.b16 %v5011
        %v5061 = vunpack.c.l.b16 %v5012
        %v5062 = vpack.c.b16 %v5047, %v5046
        %v5063 = vpack.c.b16 %v5049, %v5048
        %v5064 = vpack.c.b16 %v5051, %v5050
        %v5065 = vpack.c.b16 %v5053, %v5052
        %v5066 = vpack.c.b16 %v5055, %v5054
        %v5067 = vpack.c.b16 %v5057, %v5056
        %v5068 = vpack.c.b16 %v5059, %v5058
        %v5069 = vpack.c.b16 %v5061, %v5060
        %5078 = vmatprep.subr.bf16.mxu0 0
        %5079 = vmatpush1.bf16.msra.mxu0 %v5062
        %5080 = vmatprep.subr.bf16.mxu0 0
        %5081 = vmatpush1.bf16.msra.mxu0 %v5063
        %5082 = vmatprep.subr.bf16.mxu0 0
        %5083 = vmatpush1.bf16.msra.mxu0 %v5064
        %5084 = vmatprep.subr.bf16.mxu0 0
        %5085 = vmatpush1.bf16.msra.mxu0 %v5065
        %5086 = vmatprep.subr.bf16.mxu0 0
        %5087 = vmatpush1.bf16.msra.mxu0 %v5066
        %5088 = vmatprep.subr.bf16.mxu0 0
        %5089 = vmatpush1.bf16.msra.mxu0 %v5067
        %5090 = vmatprep.subr.bf16.mxu0 0
        %5091 = vmatpush1.bf16.msra.mxu0 %v5068
        %5092 = vmatprep.subr.bf16.mxu0 0
        %5093 = vmatpush1.bf16.msra.mxu0 %v5069
        %5094 = vmatprep.subr.bf16.mxu0 0
        %5095 = vmatpush1.bf16.msra.mxu0 0
        %5096 = vmatprep.subr.bf16.mxu0 0
        %5097 = vmatpush1.bf16.msra.mxu0 0
        %5098 = vmatprep.subr.bf16.mxu0 0
        %5099 = vmatpush1.bf16.msra.mxu0 0
        %5100 = vmatprep.subr.bf16.mxu0 0
        %5101 = vmatpush1.bf16.msra.mxu0 0
        %5102 = vmatprep.subr.bf16.mxu0 0
        %5103 = vmatpush1.bf16.msra.mxu0 0
        %5104 = vmatprep.subr.bf16.mxu0 0
        %5105 = vmatpush1.bf16.msra.mxu0 0
        %5106 = vmatprep.subr.bf16.mxu0 0
        %5107 = vmatpush1.bf16.msra.mxu0 0
        %5108 = vmatprep.subr.bf16.mxu0 0
        %5109 = vmatpush1.bf16.msra.mxu0 0
        %5110 = vmatprep.mubr.bf16.mxu0 0
        %5111 = vmatmul.mubr.bf16.gmra.mrb[0].mxu0 %v5016
        %v5112 = vpop.f32.mrb[0].mxu0
        %v5113 = vadd.f32 0.0, %v5112
        %v5114 = vpop.f32.mrb[0].mxu0
        %v5115 = vpop.f32.mrb[0].mxu0
        %v5116 = vadd.f32 0.0, %v5115
        %v5117 = vpop.f32.mrb[0].mxu0
        %5118 = vmatprep.mubr.bf16.mxu0 0
        %5119 = vmatmul.mubr.bf16.gmra.mrb[0].mxu0 %v5018
        %v5120 = vpop.f32.mrb[0].mxu0
        %v5121 = vadd.f32 0.0, %v5120
        %v5122 = vpop.f32.mrb[0].mxu0
        %v5123 = vpop.f32.mrb[0].mxu0
        %v5124 = vadd.f32 0.0, %v5123
        %v5125 = vpop.f32.mrb[0].mxu0
        %5126 = vmatprep.mubr.bf16.mxu0 0
        %5127 = vmatmul.mubr.bf16.gmra.mrb[0].mxu0 %v5020
        %v5128 = vpop.f32.mrb[0].mxu0
        %v5129 = vadd.f32 0.0, %v5128
        %v5130 = vpop.f32.mrb[0].mxu0
        %v5131 = vpop.f32.mrb[0].mxu0
        %v5132 = vadd.f32 0.0, %v5131
        %v5133 = vpop.f32.mrb[0].mxu0
        %5134 = vmatprep.mubr.bf16.mxu0 0
        %5135 = vmatmul.mubr.bf16.gmra.mrb[0].mxu0 %v5022
        %v5136 = vpop.f32.mrb[0].mxu0
        %v5137 = vadd.f32 0.0, %v5136
        %v5138 = vpop.f32.mrb[0].mxu0
        %v5139 = vpop.f32.mrb[0].mxu0
        %v5140 = vadd.f32 0.0, %v5139
        %v5141 = vpop.f32.mrb[0].mxu0
        %5142 = vmatprep.mubr.bf16.mxu0 0
        %5143 = vmatmul.mubr.bf16.gmra.mrb[0].mxu0 %v5024
        %v5144 = vpop.f32.mrb[0].mxu0
        %v5145 = vadd.f32 0.0, %v5144
        %v5146 = vpop.f32.mrb[0].mxu0
        %v5147 = vpop.f32.mrb[0].mxu0
        %v5148 = vpop.f32.mrb[0].mxu0
        %5149 = vdwg.mxu0
        %v5150 = vadd.f32 %v4987, %v5113
        %v5151 = vadd.f32 %v4988, %v5116
        %v5152 = vadd.f32 %v4989, %v5121
        %v5153 = vadd.f32 %v4990, %v5124
        %v5154 = vadd.f32 %v4991, %v5129
        %v5155 = vadd.f32 %v4992, %v5132
        %v5156 = vadd.f32 %v4993, %v5137
        %v5157 = vadd.f32 %v4994, %v5140
        %v5158 = vadd.f32 %v4995, %v5145
        %s5159 = scalar_lea.vmem [#allocation7], 384
        %v5160 = vld [vmem:[%s5159] sm:$0xf]
        %v5161 = vld [vmem:[%s5159 + $0x4] sm:$0xf]
        %v5162 = vld [vmem:[%s5159 + $0x8] sm:$0xf]
        %v5163 = vld [vmem:[%s5159 + $0xc] sm:$0xf]
        %v5164 = vld [vmem:[%s5159 + $0x10] sm:$0xf]
        %v5165 = vld [vmem:[%s5159 + $0x14] sm:$0xf]
        %v5166 = vld [vmem:[%s5159 + $0x18] sm:$0xf]
        %v5167 = vld [vmem:[%s5159 + $0x1c] sm:$0xf]
        %v5168 = vld [vmem:[%s5159 + $0x20] sm:$0xf]
        %v5169 = vld [vmem:[%s5159 + $0x24] sm:$0xf]
        %v5170 = vld [vmem:[%s5159 + $0x28] sm:$0xf]
        %v5171 = vld [vmem:[%s5159 + $0x2c] sm:$0xf]
        %v5172 = vld [vmem:[%s5159 + $0x30] sm:$0xf]
        %v5173 = vld [vmem:[%s5159 + $0x34] sm:$0xf]
        %v5174 = vld [vmem:[%s5159 + $0x38] sm:$0xf]
        %v5175 = vld [vmem:[%s5159 + $0x3c] sm:$0xf]
        %v5176 = vrot.slane %v4174, 2
        %v5177 = vrot.slane %v4175, 2
        %v5178 = vsel %vm1127, %v5176, %v5177
        %v5179 = vrot.slane %v4176, 2
        %v5180 = vsel %vm1127, %v5177, %v5179
        %v5181 = vrot.slane %v4177, 2
        %v5182 = vsel %vm1127, %v5179, %v5181
        %v5183 = vrot.slane %v4178, 2
        %v5184 = vsel %vm1127, %v5181, %v5183
        %v5206 = vunpack.c.l.b16 %v5160
        %v5207 = vunpack.c.l.b16 %v5161
        %v5208 = vunpack.c.l.b16 %v5162
        %v5209 = vunpack.c.l.b16 %v5163
        %v5210 = vunpack.c.l.b16 %v5164
        %v5211 = vunpack.c.l.b16 %v5165
        %v5212 = vunpack.c.l.b16 %v5166
        %v5213 = vunpack.c.l.b16 %v5167
        %v5214 = vunpack.c.l.b16 %v5168
        %v5215 = vunpack.c.l.b16 %v5169
        %v5216 = vunpack.c.l.b16 %v5170
        %v5217 = vunpack.c.l.b16 %v5171
        %v5218 = vunpack.c.l.b16 %v5172
        %v5219 = vunpack.c.l.b16 %v5173
        %v5220 = vunpack.c.l.b16 %v5174
        %v5221 = vunpack.c.l.b16 %v5175
        %v5222 = vpack.c.b16 %v5207, %v5206
        %v5223 = vpack.c.b16 %v5209, %v5208
        %v5224 = vpack.c.b16 %v5211, %v5210
        %v5225 = vpack.c.b16 %v5213, %v5212
        %v5226 = vpack.c.b16 %v5215, %v5214
        %v5227 = vpack.c.b16 %v5217, %v5216
        %v5228 = vpack.c.b16 %v5219, %v5218
        %v5229 = vpack.c.b16 %v5221, %v5220
        %5238 = vmatprep.subr.bf16.mxu0 0
        %5239 = vmatpush1.bf16.msra.mxu0 %v5222
        %5240 = vmatprep.subr.bf16.mxu0 0
        %5241 = vmatpush1.bf16.msra.mxu0 %v5223
        %5242 = vmatprep.subr.bf16.mxu0 0
        %5243 = vmatpush1.bf16.msra.mxu0 %v5224
        %5244 = vmatprep.subr.bf16.mxu0 0
        %5245 = vmatpush1.bf16.msra.mxu0 %v5225
        %5246 = vmatprep.subr.bf16.mxu0 0
        %5247 = vmatpush1.bf16.msra.mxu0 %v5226
        %5248 = vmatprep.subr.bf16.mxu0 0
        %5249 = vmatpush1.bf16.msra.mxu0 %v5227
        %5250 = vmatprep.subr.bf16.mxu0 0
        %5251 = vmatpush1.bf16.msra.mxu0 %v5228
        %5252 = vmatprep.subr.bf16.mxu0 0
        %5253 = vmatpush1.bf16.msra.mxu0 %v5229
        %5254 = vmatprep.subr.bf16.mxu0 0
        %5255 = vmatpush1.bf16.msra.mxu0 0
        %5256 = vmatprep.subr.bf16.mxu0 0
        %5257 = vmatpush1.bf16.msra.mxu0 0
        %5258 = vmatprep.subr.bf16.mxu0 0
        %5259 = vmatpush1.bf16.msra.mxu0 0
        %5260 = vmatprep.subr.bf16.mxu0 0
        %5261 = vmatpush1.bf16.msra.mxu0 0
        %5262 = vmatprep.subr.bf16.mxu0 0
        %5263 = vmatpush1.bf16.msra.mxu0 0
        %5264 = vmatprep.subr.bf16.mxu0 0
        %5265 = vmatpush1.bf16.msra.mxu0 0
        %5266 = vmatprep.subr.bf16.mxu0 0
        %5267 = vmatpush1.bf16.msra.mxu0 0
        %5268 = vmatprep.subr.bf16.mxu0 0
        %5269 = vmatpush1.bf16.msra.mxu0 0
        %5270 = vmatprep.mubr.bf16.mxu0 0
        %5271 = vmatmul.mubr.bf16.gmra.mrb[0].mxu0 %v5178
        %v5272 = vpop.f32.mrb[0].mxu0
        %v5273 = vadd.f32 0.0, %v5272
        %v5274 = vpop.f32.mrb[0].mxu0
        %v5275 = vpop.f32.mrb[0].mxu0
        %v5276 = vadd.f32 0.0, %v5275
        %v5277 = vpop.f32.mrb[0].mxu0
        %5278 = vmatprep.mubr.bf16.mxu0 0
        %5279 = vmatmul.mubr.bf16.gmra.mrb[0].mxu0 %v5180
        %v5280 = vpop.f32.mrb[0].mxu0
        %v5281 = vadd.f32 0.0, %v5280
        %v5282 = vpop.f32.mrb[0].mxu0
        %v5283 = vpop.f32.mrb[0].mxu0
        %v5284 = vadd.f32 0.0, %v5283
        %v5285 = vpop.f32.mrb[0].mxu0
        %5286 = vmatprep.mubr.bf16.mxu0 0
        %5287 = vmatmul.mubr.bf16.gmra.mrb[0].mxu0 %v5182
        %v5288 = vpop.f32.mrb[0].mxu0
        %v5289 = vadd.f32 0.0, %v5288
        %v5290 = vpop.f32.mrb[0].mxu0
        %v5291 = vpop.f32.mrb[0].mxu0
        %v5292 = vadd.f32 0.0, %v5291
        %v5293 = vpop.f32.mrb[0].mxu0
        %5294 = vmatprep.mubr.bf16.mxu0 0
        %5295 = vmatmul.mubr.bf16.gmra.mrb[0].mxu0 %v5184
        %v5296 = vpop.f32.mrb[0].mxu0
        %v5297 = vadd.f32 0.0, %v5296
        %v5298 = vpop.f32.mrb[0].mxu0
        %v5299 = vpop.f32.mrb[0].mxu0
        %v5300 = vadd.f32 0.0, %v5299
        %v5301 = vpop.f32.mrb[0].mxu0
        %5302 = vmatprep.mubr.bf16.mxu0 0
        %5303 = vmatmul.mubr.bf16.gmra.mrb[0].mxu0 %v5183
        %v5304 = vpop.f32.mrb[0].mxu0
        %v5305 = vadd.f32 0.0, %v5304
        %v5306 = vpop.f32.mrb[0].mxu0
        %v5307 = vpop.f32.mrb[0].mxu0
        %v5308 = vpop.f32.mrb[0].mxu0
        %5309 = vdwg.mxu0
        %v5310 = vadd.f32 %v5150, %v5273
        %v5311 = vadd.f32 %v5151, %v5276
        %v5312 = vadd.f32 %v5152, %v5281
        %v5313 = vadd.f32 %v5153, %v5284
        %v5314 = vadd.f32 %v5154, %v5289
        %v5315 = vadd.f32 %v5155, %v5292
        %v5316 = vadd.f32 %v5156, %v5297
        %v5317 = vadd.f32 %v5157, %v5300
        %v5318 = vadd.f32 %v5158, %v5305
        %s5319 = scalar_lea.vmem [#allocation7], 448
        %v5320 = vld [vmem:[%s5319] sm:$0xf]
        %v5321 = vld [vmem:[%s5319 + $0x4] sm:$0xf]
        %v5322 = vld [vmem:[%s5319 + $0x8] sm:$0xf]
        %v5323 = vld [vmem:[%s5319 + $0xc] sm:$0xf]
        %v5324 = vld [vmem:[%s5319 + $0x10] sm:$0xf]
        %v5325 = vld [vmem:[%s5319 + $0x14] sm:$0xf]
        %v5326 = vld [vmem:[%s5319 + $0x18] sm:$0xf]
        %v5327 = vld [vmem:[%s5319 + $0x1c] sm:$0xf]
        %v5328 = vld [vmem:[%s5319 + $0x20] sm:$0xf]
        %v5329 = vld [vmem:[%s5319 + $0x24] sm:$0xf]
        %v5330 = vld [vmem:[%s5319 + $0x28] sm:$0xf]
        %v5331 = vld [vmem:[%s5319 + $0x2c] sm:$0xf]
        %v5332 = vld [vmem:[%s5319 + $0x30] sm:$0xf]
        %v5333 = vld [vmem:[%s5319 + $0x34] sm:$0xf]
        %v5334 = vld [vmem:[%s5319 + $0x38] sm:$0xf]
        %v5335 = vld [vmem:[%s5319 + $0x3c] sm:$0xf]
        %v5336 = vrot.slane %v4224, 2
        %v5337 = vrot.slane %v4220, 3
        %v5338 = vor.u32 %v5336, %v5337
        %v5339 = vrot.slane %v4232, 2
        %v5340 = vrot.slane %v4228, 3
        %v5341 = vor.u32 %v5339, %v5340
        %v5342 = vsel %vm1639, %v5338, %v5341
        %v5343 = vrot.slane %v4240, 2
        %v5344 = vrot.slane %v4236, 3
        %v5345 = vor.u32 %v5343, %v5344
        %v5346 = vsel %vm1639, %v5341, %v5345
        %v5347 = vrot.slane %v4248, 2
        %v5348 = vrot.slane %v4244, 3
        %v5349 = vor.u32 %v5347, %v5348
        %v5350 = vsel %vm1639, %v5345, %v5349
        %v5351 = vshrl.u32 %v4178, 16
        %v5353 = vrot.slane %v5351, 2
        %v5354 = vrot.slane %v4858, 3
        %v5355 = vor.u32 %v5353, %v5354
        %v5356 = vsel %vm1639, %v5349, %v5355
        %v5378 = vunpack.c.l.b16 %v5320
        %v5379 = vunpack.c.l.b16 %v5321
        %v5380 = vunpack.c.l.b16 %v5322
        %v5381 = vunpack.c.l.b16 %v5323
        %v5382 = vunpack.c.l.b16 %v5324
        %v5383 = vunpack.c.l.b16 %v5325
        %v5384 = vunpack.c.l.b16 %v5326
        %v5385 = vunpack.c.l.b16 %v5327
        %v5386 = vunpack.c.l.b16 %v5328
        %v5387 = vunpack.c.l.b16 %v5329
        %v5388 = vunpack.c.l.b16 %v5330
        %v5389 = vunpack.c.l.b16 %v5331
        %v5390 = vunpack.c.l.b16 %v5332
        %v5391 = vunpack.c.l.b16 %v5333
        %v5392 = vunpack.c.l.b16 %v5334
        %v5393 = vunpack.c.l.b16 %v5335
        %v5394 = vpack.c.b16 %v5379, %v5378
        %v5395 = vpack.c.b16 %v5381, %v5380
        %v5396 = vpack.c.b16 %v5383, %v5382
        %v5397 = vpack.c.b16 %v5385, %v5384
        %v5398 = vpack.c.b16 %v5387, %v5386
        %v5399 = vpack.c.b16 %v5389, %v5388
        %v5400 = vpack.c.b16 %v5391, %v5390
        %v5401 = vpack.c.b16 %v5393, %v5392
        %5410 = vmatprep.subr.bf16.mxu0 0
        %5411 = vmatpush1.bf16.msra.mxu0 %v5394
        %5412 = vmatprep.subr.bf16.mxu0 0
        %5413 = vmatpush1.bf16.msra.mxu0 %v5395
        %5414 = vmatprep.subr.bf16.mxu0 0
        %5415 = vmatpush1.bf16.msra.mxu0 %v5396
        %5416 = vmatprep.subr.bf16.mxu0 0
        %5417 = vmatpush1.bf16.msra.mxu0 %v5397
        %5418 = vmatprep.subr.bf16.mxu0 0
        %5419 = vmatpush1.bf16.msra.mxu0 %v5398
        %5420 = vmatprep.subr.bf16.mxu0 0
        %5421 = vmatpush1.bf16.msra.mxu0 %v5399
        %5422 = vmatprep.subr.bf16.mxu0 0
        %5423 = vmatpush1.bf16.msra.mxu0 %v5400
        %5424 = vmatprep.subr.bf16.mxu0 0
        %5425 = vmatpush1.bf16.msra.mxu0 %v5401
        %5426 = vmatprep.subr.bf16.mxu0 0
        %5427 = vmatpush1.bf16.msra.mxu0 0
        %5428 = vmatprep.subr.bf16.mxu0 0
        %5429 = vmatpush1.bf16.msra.mxu0 0
        %5430 = vmatprep.subr.bf16.mxu0 0
        %5431 = vmatpush1.bf16.msra.mxu0 0
        %5432 = vmatprep.subr.bf16.mxu0 0
        %5433 = vmatpush1.bf16.msra.mxu0 0
        %5434 = vmatprep.subr.bf16.mxu0 0
        %5435 = vmatpush1.bf16.msra.mxu0 0
        %5436 = vmatprep.subr.bf16.mxu0 0
        %5437 = vmatpush1.bf16.msra.mxu0 0
        %5438 = vmatprep.subr.bf16.mxu0 0
        %5439 = vmatpush1.bf16.msra.mxu0 0
        %5440 = vmatprep.subr.bf16.mxu0 0
        %5441 = vmatpush1.bf16.msra.mxu0 0
        %5442 = vmatprep.mubr.bf16.mxu0 0
        %5443 = vmatmul.mubr.bf16.gmra.mrb[0].mxu0 %v5342
        %v5444 = vpop.f32.mrb[0].mxu0
        %v5445 = vadd.f32 0.0, %v5444
        %v5446 = vpop.f32.mrb[0].mxu0
        %v5447 = vpop.f32.mrb[0].mxu0
        %v5448 = vadd.f32 0.0, %v5447
        %v5449 = vpop.f32.mrb[0].mxu0
        %5450 = vmatprep.mubr.bf16.mxu0 0
        %5451 = vmatmul.mubr.bf16.gmra.mrb[0].mxu0 %v5346
        %v5452 = vpop.f32.mrb[0].mxu0
        %v5453 = vadd.f32 0.0, %v5452
        %v5454 = vpop.f32.mrb[0].mxu0
        %v5455 = vpop.f32.mrb[0].mxu0
        %v5456 = vadd.f32 0.0, %v5455
        %v5457 = vpop.f32.mrb[0].mxu0
        %5458 = vmatprep.mubr.bf16.mxu0 0
        %5459 = vmatmul.mubr.bf16.gmra.mrb[0].mxu0 %v5350
        %v5460 = vpop.f32.mrb[0].mxu0
        %v5461 = vadd.f32 0.0, %v5460
        %v5462 = vpop.f32.mrb[0].mxu0
        %v5463 = vpop.f32.mrb[0].mxu0
        %v5464 = vadd.f32 0.0, %v5463
        %v5465 = vpop.f32.mrb[0].mxu0
        %5466 = vmatprep.mubr.bf16.mxu0 0
        %5467 = vmatmul.mubr.bf16.gmra.mrb[0].mxu0 %v5356
        %v5468 = vpop.f32.mrb[0].mxu0
        %v5469 = vadd.f32 0.0, %v5468
        %v5470 = vpop.f32.mrb[0].mxu0
        %v5471 = vpop.f32.mrb[0].mxu0
        %v5472 = vadd.f32 0.0, %v5471
        %v5473 = vpop.f32.mrb[0].mxu0
        %5474 = vmatprep.mubr.bf16.mxu0 0
        %5475 = vmatmul.mubr.bf16.gmra.mrb[0].mxu0 %v5355
        %v5476 = vpop.f32.mrb[0].mxu0
        %v5477 = vadd.f32 0.0, %v5476
        %v5478 = vpop.f32.mrb[0].mxu0
        %v5479 = vpop.f32.mrb[0].mxu0
        %v5480 = vpop.f32.mrb[0].mxu0
        %5481 = vdwg.mxu0
        %v5482 = vadd.f32 %v5310, %v5445
        %v5483 = vadd.f32 %v5311, %v5448
        %v5484 = vadd.f32 %v5312, %v5453
        %v5485 = vadd.f32 %v5313, %v5456
        %v5486 = vadd.f32 %v5314, %v5461
        %v5487 = vadd.f32 %v5315, %v5464
        %v5488 = vadd.f32 %v5316, %v5469
        %v5489 = vadd.f32 %v5317, %v5472
        %v5490 = vadd.f32 %v5318, %v5477
        %s5491 = scalar_lea.vmem [#allocation7], 512
        %v5492 = vld [vmem:[%s5491] sm:$0xf]
        %v5493 = vld [vmem:[%s5491 + $0x4] sm:$0xf]
        %v5494 = vld [vmem:[%s5491 + $0x8] sm:$0xf]
        %v5495 = vld [vmem:[%s5491 + $0xc] sm:$0xf]
        %v5496 = vld [vmem:[%s5491 + $0x10] sm:$0xf]
        %v5497 = vld [vmem:[%s5491 + $0x14] sm:$0xf]
        %v5498 = vld [vmem:[%s5491 + $0x18] sm:$0xf]
        %v5499 = vld [vmem:[%s5491 + $0x1c] sm:$0xf]
        %v5500 = vld [vmem:[%s5491 + $0x20] sm:$0xf]
        %v5501 = vld [vmem:[%s5491 + $0x24] sm:$0xf]
        %v5502 = vld [vmem:[%s5491 + $0x28] sm:$0xf]
        %v5503 = vld [vmem:[%s5491 + $0x2c] sm:$0xf]
        %v5504 = vld [vmem:[%s5491 + $0x30] sm:$0xf]
        %v5505 = vld [vmem:[%s5491 + $0x34] sm:$0xf]
        %v5506 = vld [vmem:[%s5491 + $0x38] sm:$0xf]
        %v5507 = vld [vmem:[%s5491 + $0x3c] sm:$0xf]
        %v5508 = vrot.slane %v4174, 3
        %v5509 = vrot.slane %v4175, 3
        %v5510 = vsel %vm3592, %v5508, %v5509
        %v5511 = vrot.slane %v4176, 3
        %v5512 = vsel %vm3592, %v5509, %v5511
        %v5513 = vrot.slane %v4177, 3
        %v5514 = vsel %vm3592, %v5511, %v5513
        %v5515 = vrot.slane %v4178, 3
        %v5516 = vsel %vm3592, %v5513, %v5515
        %v5538 = vunpack.c.l.b16 %v5492
        %v5539 = vunpack.c.l.b16 %v5493
        %v5540 = vunpack.c.l.b16 %v5494
        %v5541 = vunpack.c.l.b16 %v5495
        %v5542 = vunpack.c.l.b16 %v5496
        %v5543 = vunpack.c.l.b16 %v5497
        %v5544 = vunpack.c.l.b16 %v5498
        %v5545 = vunpack.c.l.b16 %v5499
        %v5546 = vunpack.c.l.b16 %v5500
        %v5547 = vunpack.c.l.b16 %v5501
        %v5548 = vunpack.c.l.b16 %v5502
        %v5549 = vunpack.c.l.b16 %v5503
        %v5550 = vunpack.c.l.b16 %v5504
        %v5551 = vunpack.c.l.b16 %v5505
        %v5552 = vunpack.c.l.b16 %v5506
        %v5553 = vunpack.c.l.b16 %v5507
        %v5554 = vpack.c.b16 %v5539, %v5538
        %v5555 = vpack.c.b16 %v5541, %v5540
        %v5556 = vpack.c.b16 %v5543, %v5542
        %v5557 = vpack.c.b16 %v5545, %v5544
        %v5558 = vpack.c.b16 %v5547, %v5546
        %v5559 = vpack.c.b16 %v5549, %v5548
        %v5560 = vpack.c.b16 %v5551, %v5550
        %v5561 = vpack.c.b16 %v5553, %v5552
        %5570 = vmatprep.subr.bf16.mxu0 0
        %5571 = vmatpush1.bf16.msra.mxu0 %v5554
        %5572 = vmatprep.subr.bf16.mxu0 0
        %5573 = vmatpush1.bf16.msra.mxu0 %v5555
        %5574 = vmatprep.subr.bf16.mxu0 0
        %5575 = vmatpush1.bf16.msra.mxu0 %v5556
        %5576 = vmatprep.subr.bf16.mxu0 0
        %5577 = vmatpush1.bf16.msra.mxu0 %v5557
        %5578 = vmatprep.subr.bf16.mxu0 0
        %5579 = vmatpush1.bf16.msra.mxu0 %v5558
        %5580 = vmatprep.subr.bf16.mxu0 0
        %5581 = vmatpush1.bf16.msra.mxu0 %v5559
        %5582 = vmatprep.subr.bf16.mxu0 0
        %5583 = vmatpush1.bf16.msra.mxu0 %v5560
        %5584 = vmatprep.subr.bf16.mxu0 0
        %5585 = vmatpush1.bf16.msra.mxu0 %v5561
        %5586 = vmatprep.subr.bf16.mxu0 0
        %5587 = vmatpush1.bf16.msra.mxu0 0
        %5588 = vmatprep.subr.bf16.mxu0 0
        %5589 = vmatpush1.bf16.msra.mxu0 0
        %5590 = vmatprep.subr.bf16.mxu0 0
        %5591 = vmatpush1.bf16.msra.mxu0 0
        %5592 = vmatprep.subr.bf16.mxu0 0
        %5593 = vmatpush1.bf16.msra.mxu0 0
        %5594 = vmatprep.subr.bf16.mxu0 0
        %5595 = vmatpush1.bf16.msra.mxu0 0
        %5596 = vmatprep.subr.bf16.mxu0 0
        %5597 = vmatpush1.bf16.msra.mxu0 0
        %5598 = vmatprep.subr.bf16.mxu0 0
        %5599 = vmatpush1.bf16.msra.mxu0 0
        %5600 = vmatprep.subr.bf16.mxu0 0
        %5601 = vmatpush1.bf16.msra.mxu0 0
        %5602 = vmatprep.mubr.bf16.mxu0 0
        %5603 = vmatmul.mubr.bf16.gmra.mrb[0].mxu0 %v5510
        %v5604 = vpop.f32.mrb[0].mxu0
        %v5605 = vadd.f32 0.0, %v5604
        %v5606 = vpop.f32.mrb[0].mxu0
        %v5607 = vpop.f32.mrb[0].mxu0
        %v5608 = vadd.f32 0.0, %v5607
        %v5609 = vpop.f32.mrb[0].mxu0
        %5610 = vmatprep.mubr.bf16.mxu0 0
        %5611 = vmatmul.mubr.bf16.gmra.mrb[0].mxu0 %v5512
        %v5612 = vpop.f32.mrb[0].mxu0
        %v5613 = vadd.f32 0.0, %v5612
        %v5614 = vpop.f32.mrb[0].mxu0
        %v5615 = vpop.f32.mrb[0].mxu0
        %v5616 = vadd.f32 0.0, %v5615
        %v5617 = vpop.f32.mrb[0].mxu0
        %5618 = vmatprep.mubr.bf16.mxu0 0
        %5619 = vmatmul.mubr.bf16.gmra.mrb[0].mxu0 %v5514
        %v5620 = vpop.f32.mrb[0].mxu0
        %v5621 = vadd.f32 0.0, %v5620
        %v5622 = vpop.f32.mrb[0].mxu0
        %v5623 = vpop.f32.mrb[0].mxu0
        %v5624 = vadd.f32 0.0, %v5623
        %v5625 = vpop.f32.mrb[0].mxu0
        %5626 = vmatprep.mubr.bf16.mxu0 0
        %5627 = vmatmul.mubr.bf16.gmra.mrb[0].mxu0 %v5516
        %v5628 = vpop.f32.mrb[0].mxu0
        %v5629 = vadd.f32 0.0, %v5628
        %v5630 = vpop.f32.mrb[0].mxu0
        %v5631 = vpop.f32.mrb[0].mxu0
        %v5632 = vadd.f32 0.0, %v5631
        %v5633 = vpop.f32.mrb[0].mxu0
        %5634 = vmatprep.mubr.bf16.mxu0 0
        %5635 = vmatmul.mubr.bf16.gmra.mrb[0].mxu0 %v5515
        %v5636 = vpop.f32.mrb[0].mxu0
        %v5637 = vadd.f32 0.0, %v5636
        %v5638 = vpop.f32.mrb[0].mxu0
        %v5639 = vpop.f32.mrb[0].mxu0
        %v5640 = vpop.f32.mrb[0].mxu0
        %5641 = vdwg.mxu0
        %v5642 = vadd.f32 %v5482, %v5605
        %v5643 = vadd.f32 %v5483, %v5608
        %v5644 = vadd.f32 %v5484, %v5613
        %v5645 = vadd.f32 %v5485, %v5616
        %v5646 = vadd.f32 %v5486, %v5621
        %v5647 = vadd.f32 %v5487, %v5624
        %v5648 = vadd.f32 %v5488, %v5629
        %v5649 = vadd.f32 %v5489, %v5632
        %v5650 = vadd.f32 %v5490, %v5637
        %v5651 = vld [vmem:[%s6] sm:$0x1]
        %v5653 = vlaneseq
        %v5654 = vshrl.u32 %v5653, 7
        %v5655 = vsub.s32 0, %v5654
        %v5656 = vrot.slane %v5651, %v5655
        %v5658 = vadd.f32 %v5642, %v5656
        %v5659 = vadd.f32 %v5643, %v5656
        %v5660 = vadd.f32 %v5644, %v5656
        %v5661 = vadd.f32 %v5645, %v5656
        %v5662 = vadd.f32 %v5646, %v5656
        %v5663 = vadd.f32 %v5647, %v5656
        %v5664 = vadd.f32 %v5648, %v5656
        %v5665 = vadd.f32 %v5649, %v5656
        %v5666 = vadd.f32 %v5650, %v5656
        %v5667 = vmax.f32 %v5658, 0.0
        %v5668 = vmax.f32 %v5659, 0.0
        %v5669 = vmax.f32 %v5660, 0.0
        %v5670 = vmax.f32 %v5661, 0.0
        %v5671 = vmax.f32 %v5662, 0.0
        %v5672 = vmax.f32 %v5663, 0.0
        %v5673 = vmax.f32 %v5664, 0.0
        %v5674 = vmax.f32 %v5665, 0.0
        %v5675 = vmax.f32 %v5666, 0.0
        %v5676 = vpack.c.bf16 %v5668, %v5667
        %v5677 = vpack.c.bf16 %v5670, %v5669
        %v5678 = vpack.c.bf16 %v5672, %v5671
        %v5679 = vpack.c.bf16 %v5674, %v5673
        %v5680 = vpack.c.bf16 %v5675, %v5675
        %v5686 = vunpack.c.l.b16 %v5676
        %v5687 = vunpack.c.h.b16 %v5676
        %v5688 = vunpack.c.l.b16 %v5677
        %v5689 = vunpack.c.h.b16 %v5677
        %v5690 = vunpack.c.l.b16 %v5678
        %v5691 = vunpack.c.h.b16 %v5678
        %v5692 = vunpack.c.l.b16 %v5679
        %v5693 = vunpack.c.h.b16 %v5679
        %v5694 = vunpack.c.l.b16 %v5680
        %v5695 = vpack.c.b16 %v5686, %v5686
        %v5696 = vpack.c.b16 %v5687, %v5687
        %v5697 = vpack.c.b16 %v5688, %v5688
        %v5698 = vpack.c.b16 %v5689, %v5689
        %v5699 = vpack.c.b16 %v5690, %v5690
        %v5700 = vpack.c.b16 %v5691, %v5691
        %v5701 = vpack.c.b16 %v5692, %v5692
        %v5702 = vpack.c.b16 %v5693, %v5693
        %v5703 = vpack.c.b16 %v5694, %v5694
        %5713 = vst [vmem:[%s342] sm:$0xf] %v5695
        %5714 = vst [vmem:[%s342 + $0x4] sm:$0xf] %v5696
        %5715 = vst [vmem:[%s342 + $0x8] sm:$0xf] %v5697
        %5716 = vst [vmem:[%s342 + $0xc] sm:$0xf] %v5698
        %5717 = vst [vmem:[%s342 + $0x10] sm:$0xf] %v5699
        %5718 = vst [vmem:[%s342 + $0x14] sm:$0xf] %v5700
        %5719 = vst [vmem:[%s342 + $0x18] sm:$0xf] %v5701
        %5720 = vst [vmem:[%s342 + $0x1c] sm:$0xf] %v5702
        %5721 = vst [vmem:[%s342 + $0x20] sm:$0x7] %v5703
        %p5722 = scmp.lt.s32.totalorder %s23, 1
        %s5723 = scalar_select %p5722, %s23, 1
        %s5724 = smul.addr %s5723, 9
        %s5725 = smul.addr %s5724, 4
        %s5726 = scalar_lea.vmem %s7, %s5725
        // Predicated region
        $region65: #{tpu_custom_call.1} parent=47 // pred_check
          %p5727 = pneg %p193
        $region66: #{tpu_custom_call.1} parent=47 // pred_check_branch
          %5729 = sbr.rel (%p5727) target = $region68
        $region67: #{tpu_custom_call.1} parent=47 // pred_region
          _
        $region68: #{tpu_custom_call.1} parent=47 // pred_fallthru
          _
      $region48: #{tpu_custom_call.1} parent=5 // pred_fallthru
        _
      %p5730 = scmp.le.s32.totalorder 2, %s18
      // Predicated region
      $region69: #{tpu_custom_call.1} parent=5 // pred_check
        %p5731 = pneg %p5730
      $region70: #{tpu_custom_call.1} parent=5 // pred_check_branch
        %5733 = sbr.rel (%p5731) target = $region72
      $region71: #{tpu_custom_call.1} parent=5 // pred_region
        %s5734 = ssub.s32 %s18, 2
        // Predicated region
        $region73: #{tpu_custom_call.1} parent=71 // pred_check
          %p5735 = pneg %p199
        $region74: #{tpu_custom_call.1} parent=71 // pred_check_branch
          %5737 = sbr.rel (%p5735) target = $region76
        $region75: #{tpu_custom_call.1} parent=71 // pred_region
          %p5738 = scmp.lt.s32.totalorder %s24, 1
          %s5739 = scalar_select %p5738, %s24, 1
          %s5740 = smul.addr %s5739, 9
          %s5741 = smul.addr %s5740, 4
          %s5742 = scalar_lea.vmem %s7, %s5741
        $region76: #{tpu_custom_call.1} parent=71 // pred_fallthru
          _
      $region72: #{tpu_custom_call.1} parent=5 // pred_fallthru
        _
    $region6: #{tpu_custom_call.1} parent=1 // loop_footer
      %s22 = sadd.s32 1, %s18
    $region7: #{tpu_custom_call.1} parent=1 // loop_footer_branch
      %17 = sbr.rel target = $region3
    $region8: #{tpu_custom_call.1} parent=1 // loop_exit
      _
    %5743 = vsyncpa [#allocation3], 1
    %s5744 = scalar_lea.sflag [#allocation3], 1
    %5745 = vsyncpa %s5744, 1
    %5746 = vsyncpa [#allocation5], 1
    %5747 = vsyncpa [#allocation8], 1

</llo_original>
